<compile_context>
chip_gen: v5e
topology: v5e:2x2
jax: 0.10.0
libtpu: 0.0.40
codegen_flags: <defaults>
</compile_context>

<pallas_src>
import functools
import math

import jax
import jax.numpy as jnp
import numpy as np
from jax.experimental import pallas as pl
from jax.experimental.pallas import tpu as pltpu

LN_EPS = 1e-5


def _layernorm(z, gamma, beta):
    mu = jnp.mean(z, axis=-1, keepdims=True)
    var = jnp.mean((z - mu) ** 2, axis=-1, keepdims=True)
    return (z - mu) * jax.lax.rsqrt(var + LN_EPS) * gamma + beta


# --------------------------------------------------------------------------
# Kernel 1: per-(batch, head) anomaly attention
# --------------------------------------------------------------------------
def attention_head_kernel(x_ref, wqkv_ref, bqkv_ref, wsig_ref, bsig_ref,
                          series_ref, prior_ref, sigma_ref, hout_ref,
                          *, head_dim, seq_len):
    Lp, _ = x_ref.shape
    E = head_dim
    scale = 1.0 / math.sqrt(E)
    h = pl.program_id(1)                              # current head

    x = x_ref[...]                                    # (Lp, D) f32
    xb = x.astype(jnp.bfloat16)

    # fused q/k/v projection for this head: one (Lp,D)@(D,3E) bf16 MXU matmul.
    # Weight stacks are VMEM-resident for the whole grid; slice the head here.
    proj = jnp.dot(xb, wqkv_ref[h],
                   preferred_element_type=jnp.float32) + bqkv_ref[h]
    qh = proj[:, 0 * E:1 * E].astype(jnp.bfloat16)
    kh = proj[:, 1 * E:2 * E].astype(jnp.bfloat16)
    vh = proj[:, 2 * E:3 * E].astype(jnp.bfloat16)

    # scaled dot-product scores: contract over E, no explicit transpose
    scores = jax.lax.dot_general(qh, kh, (((1,), (1,)), ((), ())),
                                 preferred_element_type=jnp.float32)
    attn = scale * scores
    if Lp > seq_len:                                  # mask padded key columns
        col = jax.lax.broadcasted_iota(jnp.int32, (Lp, Lp), 1)
        attn = jnp.where(col < seq_len, attn, -1e30)

    m = jnp.max(attn, axis=-1, keepdims=True)
    e = jnp.exp(attn - m)
    series = e * pl.reciprocal(jnp.sum(e, axis=-1, keepdims=True), approx=True)

    # sigma path stays f32: prior amplifies sigma error, and it is tiny work
    s = jnp.sum(x * wsig_ref[h], axis=-1, keepdims=True) + bsig_ref[h]
    sg = 1.0 / (1.0 + jnp.exp(-5.0 * s)) + 1e-5
    sg = jnp.exp(sg * math.log(3.0)) - 1.0            # 3**sg - 1     (Lp, 1)

    # Gaussian prior: constants hoisted, reciprocals on the (Lp,1) column
    ii = jax.lax.broadcasted_iota(jnp.int32, (Lp, Lp), 0)
    jj = jax.lax.broadcasted_iota(jnp.int32, (Lp, Lp), 1)
    dist = jnp.abs(ii - jj).astype(jnp.float32)
    neg_half_d2 = -0.5 * dist * dist
    inv_s = pl.reciprocal(sg, approx=True)            # (Lp, 1)
    c = 1.0 / math.sqrt(2.0 * math.pi)
    prior = (c * inv_s) * jnp.exp(neg_half_d2 * (inv_s * inv_s))

    oh = jnp.dot(series.astype(jnp.bfloat16), vh,
                 preferred_element_type=jnp.float32)  # (Lp, E)

    series_ref[...] = series
    prior_ref[...] = prior
    sigma_ref[...] = sg
    hout_ref[...] = oh.astype(hout_ref.dtype)


# --------------------------------------------------------------------------
# Kernel 2: output projection + residual + norm1 + 1x1-conv FFN + norm2
# --------------------------------------------------------------------------
def mix_ffn_kernel(x_ref, hout_ref, wo_ref, bo_ref,
                   g1_ref, be1_ref, g2_ref, be2_ref,
                   w1_ref, b1_ref, w2_ref, b2_ref, out_ref, *, n_heads):
    x = x_ref[...]                                    # (Lp, D) f32

    # concat(head_0..head_{H-1}) @ Wo  ==  sum_h head_h @ Wo_h  (no lane concat)
    new_x = jnp.dot(hout_ref[0], wo_ref[0], preferred_element_type=jnp.float32)
    for h in range(1, n_heads):
        new_x = new_x + jnp.dot(hout_ref[h], wo_ref[h],
                                preferred_element_type=jnp.float32)
    new_x = new_x + bo_ref[...]

    x1 = x + new_x                                    # dropout == identity
    xn = _layernorm(x1, g1_ref[...], be1_ref[...])

    hid = jnp.dot(xn.astype(jnp.bfloat16), w1_ref[...],
                  preferred_element_type=jnp.float32) + b1_ref[...]
    hid = jnp.maximum(hid, 0.0)                       # relu
    y = jnp.dot(hid.astype(jnp.bfloat16), w2_ref[...],
                preferred_element_type=jnp.float32) + b2_ref[...]

    out_ref[...] = _layernorm(xn + y, g2_ref[...], be2_ref[...])


def _vmem_limit(n_bytes):
    """Raise the scoped VMEM limit only if the working set needs it."""
    default = 32 * 1024 * 1024
    if n_bytes <= default:
        return None
    return int(min(n_bytes, 64 * 1024 * 1024))        # stay within v7x physical


# --------------------------------------------------------------------------
# Wrapper
# --------------------------------------------------------------------------
def encoder_layer_forward(x, params, n_heads):
    B, L, D = x.shape
    H = n_heads
    E = D // H
    DFF = params["w1"].shape[1]
    Lp = ((L + 127) // 128) * 128                     # lane-dense L

    xp = x if Lp == L else jnp.pad(x, ((0, 0), (0, Lp - L), (0, 0)))

    # ---- per-head fused attention weights (prepared once, outside kernel) --
    def head_major(w):       # (D, D) -> (H, D, E)
        return jnp.transpose(w.reshape(D, H, E), (1, 0, 2))

    def head_major_bias(b):  # (1, D) -> (H, 1, E)
        return jnp.transpose(b.reshape(1, H, E), (1, 0, 2))

    w_qkv = jnp.concatenate(
        [head_major(params["wq"]), head_major(params["wk"]),
         head_major(params["wv"])], axis=-1).astype(jnp.bfloat16)  # (H, D, 3E)
    b_qkv = jnp.concatenate(
        [head_major_bias(params["bq"]), head_major_bias(params["bk"]),
         head_major_bias(params["bv"])], axis=-1)                  # (H, 1, 3E)
    w_sig = jnp.transpose(params["ws"], (1, 0)).reshape(H, 1, D)   # (H, 1, D)
    b_sig = params["bs"].reshape(H, 1, 1)                          # (H, 1, 1)

    wo_h = params["wo"].reshape(H, E, D).astype(jnp.bfloat16)      # (H, E, D)
    w1_b = params["w1"].astype(jnp.bfloat16)
    w2_b = params["w2"].astype(jnp.bfloat16)

    f32b, bf16b = 4, 2

    # ---------------- call 1: per-(batch, head) attention -------------------
    # resident weight stacks (DMA'd once for the whole grid)
    w_bytes = H * (D * 3 * E * bf16b + 3 * E * f32b + D * f32b + f32b)
    io_step = (Lp * D * f32b + 2 * Lp * Lp * f32b + Lp * f32b + Lp * E * bf16b)
    vmem1 = _vmem_limit(2 * (w_bytes + io_step) + 6 * Lp * Lp * f32b)
    cost1 = pl.CostEstimate(
        flops=B * H * (2 * Lp * D * 3 * E + 4 * Lp * Lp * E + 12 * Lp * Lp),
        transcendentals=B * H * (2 * Lp * Lp + 6 * Lp),
        bytes_accessed=(B * Lp * D * f32b + w_bytes
                        + B * H * (2 * Lp * Lp * f32b + Lp * f32b
                                   + Lp * E * bf16b)),
    )

    attn_kernel = functools.partial(attention_head_kernel,
                                    head_dim=E, seq_len=L)
    series_p, prior_p, sigma_p, hout = pl.pallas_call(
        attn_kernel,
        out_shape=(
            jax.ShapeDtypeStruct((B, H, Lp, Lp), jnp.float32),
            jax.ShapeDtypeStruct((B, H, Lp, Lp), jnp.float32),
            jax.ShapeDtypeStruct((B, H, Lp, 1), jnp.float32),
            jax.ShapeDtypeStruct((B, H, Lp, E), jnp.bfloat16),
        ),
        grid_spec=pltpu.PrefetchScalarGridSpec(
            num_scalar_prefetch=0,
            grid=(B, H),
            in_specs=[
                pl.BlockSpec((pl.Squeezed(), Lp, D), lambda b, h: (b, 0, 0)),
                # head-stacked weights: constant block index -> DMA'd once,
                # VMEM-resident, sliced in-kernel by pl.program_id(1)
                pl.BlockSpec((H, D, 3 * E), lambda b, h: (0, 0, 0)),
                pl.BlockSpec((H, 1, 3 * E), lambda b, h: (0, 0, 0)),
                pl.BlockSpec((H, 1, D), lambda b, h: (0, 0, 0)),
                pl.BlockSpec((H, 1, 1), lambda b, h: (0, 0, 0)),
            ],
            out_specs=[
                pl.BlockSpec((pl.Squeezed(), pl.Squeezed(), Lp, Lp),
                             lambda b, h: (b, h, 0, 0)),
                pl.BlockSpec((pl.Squeezed(), pl.Squeezed(), Lp, Lp),
                             lambda b, h: (b, h, 0, 0)),
                pl.BlockSpec((pl.Squeezed(), pl.Squeezed(), Lp, 1),
                             lambda b, h: (b, h, 0, 0)),
                pl.BlockSpec((pl.Squeezed(), pl.Squeezed(), Lp, E),
                             lambda b, h: (b, h, 0, 0)),
            ],
        ),
        compiler_params=pltpu.CompilerParams(
            dimension_semantics=("parallel", "parallel"),
            vmem_limit_bytes=vmem1),
        cost_estimate=cost1,
    )(xp, w_qkv, b_qkv, w_sig, b_sig)

    # ---------------- call 2: mix heads + FFN + norms ------------------------
    def _const_spec(a):
        nd = a.ndim
        return pl.BlockSpec(a.shape, lambda b, _nd=nd: (0,) * _nd)

    param_arrays = [wo_h, params["bo"], params["g1"], params["be1"],
                    params["g2"], params["be2"], w1_b, params["b1"],
                    w2_b, params["b2"]]

    step2 = (2 * Lp * D * f32b + H * Lp * E * bf16b + Lp * DFF * f32b
             + D * D * bf16b + D * DFF * bf16b + DFF * D * bf16b)
    vmem2 = _vmem_limit(2 * step2)
    cost2 = pl.CostEstimate(
        flops=B * (2 * Lp * D * D + 4 * Lp * D * DFF + 16 * Lp * D),
        transcendentals=B * 4 * Lp,
        bytes_accessed=B * (3 * Lp * D * f32b + H * Lp * E * bf16b)
                       + D * D * bf16b + 2 * D * DFF * bf16b,
    )

    ffn_kernel = functools.partial(mix_ffn_kernel, n_heads=H)
    out_p = pl.pallas_call(
        ffn_kernel,
        out_shape=jax.ShapeDtypeStruct((B, Lp, D), jnp.float32),
        grid_spec=pltpu.PrefetchScalarGridSpec(
            num_scalar_prefetch=0,
            grid=(B,),
            in_specs=[
                pl.BlockSpec((pl.Squeezed(), Lp, D), lambda b: (b, 0, 0)),
                pl.BlockSpec((pl.Squeezed(), H, Lp, E), lambda b: (b, 0, 0, 0)),
            ] + [_const_spec(a) for a in param_arrays],
            out_specs=pl.BlockSpec((pl.Squeezed(), Lp, D), lambda b: (b, 0, 0)),
        ),
        compiler_params=pltpu.CompilerParams(
            dimension_semantics=("parallel",),
            vmem_limit_bytes=vmem2),
        cost_estimate=cost2,
    )(xp, hout, *param_arrays)

    # crop padding; broadcast rank-1 sigma back to (B,H,L,L) (PyTorch repeat)
    out = out_p[:, :L, :]
    series = series_p[:, :, :L, :L]
    prior = prior_p[:, :, :L, :L]
    sigma = jnp.broadcast_to(sigma_p[:, :, :L, :], (B, H, L, L))
    return out, series, prior, sigma


# --------------------------------------------------------------------------
# Pure-JAX reference mirroring the PyTorch forward (eval mode)
# --------------------------------------------------------------------------
def reference_forward(x, p, n_heads):
    B, L, D = x.shape
    H = n_heads
    E = D // H
    q = (x @ p["wq"] + p["bq"]).reshape(B, L, H, E)
    k = (x @ p["wk"] + p["bk"]).reshape(B, L, H, E)
    v = (x @ p["wv"] + p["bv"]).reshape(B, L, H, E)
    sig = x @ p["ws"] + p["bs"]                                   # (B, L, H)

    scores = jnp.einsum("blhe,bshe->bhls", q, k)
    series = jax.nn.softmax(scores / math.sqrt(E), axis=-1)

    sig = jnp.transpose(sig, (0, 2, 1))                           # (B, H, L)
    sig = 1.0 / (1.0 + jnp.exp(-5.0 * sig)) + 1e-5
    sig = jnp.exp(sig * math.log(3.0)) - 1.0
    sig = jnp.broadcast_to(sig[..., None], (B, H, L, L))
    idx = jnp.arange(L)
    dist = jnp.abs(idx[:, None] - idx[None, :]).astype(jnp.float32)
    prior = (1.0 / (math.sqrt(2.0 * math.pi) * sig)
             * jnp.exp(-(dist ** 2) / 2.0 / (sig ** 2)))

    new_x = jnp.einsum("bhls,bshd->blhd", series, v).reshape(B, L, D)
    new_x = new_x @ p["wo"] + p["bo"]

    def ln(z, g, b):
        mu = z.mean(-1, keepdims=True)
        var = ((z - mu) ** 2).mean(-1, keepdims=True)
        return (z - mu) / jnp.sqrt(var + LN_EPS) * g + b

    x1 = x + new_x
    xn = ln(x1, p["g1"], p["be1"])
    hid = jnp.maximum(xn @ p["w1"] + p["b1"], 0.0)
    y = hid @ p["w2"] + p["b2"]
    return ln(xn + y, p["g2"], p["be2"]), series, prior, sig


if __name__ == "__main__":
    # Small but representative config (Orion's default win_size=100 exercises
    # the pad-to-128 + key-mask path).  Perf tuning should use production
    # shapes (L=100->128, d_model=512, H=8), not this toy size.
    B, L, D, H = 2, 100, 32, 4        # batch, window (seq), d_model, n_heads
    DFF = 4 * D                       # n_hidden = 4 * d_model

    key = jax.random.PRNGKey(0)
    ks = jax.random.split(key, 16)

    def nrm(k, shape, s=0.1):
        return (s * jax.random.normal(k, shape)).astype(jnp.float32)

    params = {
        # attention projections (stored as (in, out) = torch weight transposed)
        "wq": nrm(ks[0], (D, D)), "bq": nrm(ks[1], (1, D)),
        "wk": nrm(ks[2], (D, D)), "bk": nrm(ks[3], (1, D)),
        "wv": nrm(ks[4], (D, D)), "bv": nrm(ks[5], (1, D)),
        "ws": nrm(ks[6], (D, H)), "bs": nrm(ks[7], (1, H)),
        "wo": nrm(ks[8], (D, D)), "bo": nrm(ks[9], (1, D)),
        # layernorms (nn.LayerNorm default init: weight=1, bias=0)
        "g1": jnp.ones((1, D), jnp.float32), "be1": jnp.zeros((1, D), jnp.float32),
        "g2": jnp.ones((1, D), jnp.float32), "be2": jnp.zeros((1, D), jnp.float32),
        # conv1 / conv2 (kernel_size=1) as (in, out) matmuls
        "w1": nrm(ks[10], (D, DFF)), "b1": nrm(ks[11], (1, DFF)),
        "w2": nrm(ks[12], (DFF, D)), "b2": nrm(ks[13], (1, D)),
    }

    x = jax.random.normal(ks[14], (B, L, D), jnp.float32)

    fwd = jax.jit(encoder_layer_forward, static_argnums=2)
    out, series, prior, sigma = jax.block_until_ready(fwd(x, params, H))

    # correctness check against plain-JAX f32 reference
    # (tolerance 2e-2: kernel uses bf16 MXU inputs + EUP approx reciprocals)
    r_out, r_series, r_prior, r_sigma = reference_forward(x, params, H)
    np.testing.assert_allclose(np.asarray(out), np.asarray(r_out), rtol=2e-2, atol=2e-2)
    np.testing.assert_allclose(np.asarray(series), np.asarray(r_series), rtol=2e-2, atol=2e-2)
    np.testing.assert_allclose(np.asarray(prior), np.asarray(r_prior), rtol=2e-2, atol=2e-2)
    np.testing.assert_allclose(np.asarray(sigma), np.asarray(r_sigma), rtol=2e-2, atol=2e-2)

    print("KERNEL_OK")
</pallas_src>

<mosaic_0001>
module attributes {stable_mosaic.version = 11 : i64} {
  func.func @attention_head_kernel(%arg0: i32, %arg1: i32, %arg2: memref<1x128x32xf32, #tpu.memory_space<vmem>>, %arg3: memref<4x32x24xbf16, #tpu.memory_space<vmem>>, %arg4: memref<4x1x24xf32, #tpu.memory_space<vmem>>, %arg5: memref<4x1x32xf32, #tpu.memory_space<vmem>>, %arg6: memref<4x1x1xf32, #tpu.memory_space<vmem>>, %arg7: memref<1x1x128x128xf32, #tpu.memory_space<vmem>>, %arg8: memref<1x1x128x128xf32, #tpu.memory_space<vmem>>, %arg9: memref<1x1x128x1xf32, #tpu.memory_space<vmem>>, %arg10: memref<1x1x128x8xbf16, #tpu.memory_space<vmem>>) attributes {dimension_semantics = [#tpu.dimension_semantics<parallel>, #tpu.dimension_semantics<parallel>], iteration_bounds = array<i64: 2, 4>, scalar_prefetch = 0 : i64, scratch_operands = 0 : i64, tpu.core_type = #tpu.core_type<tc>, window_params = [{transform_indices = @transform_0, window_bounds = array<i64: 1, 128, 32>}, {pipeline_mode = #tpu.pipeline_mode<synchronous>, transform_indices = @transform_1, window_bounds = array<i64: 4, 32, 24>}, {pipeline_mode = #tpu.pipeline_mode<synchronous>, transform_indices = @transform_2, window_bounds = array<i64: 4, 1, 24>}, {pipeline_mode = #tpu.pipeline_mode<synchronous>, transform_indices = @transform_3, window_bounds = array<i64: 4, 1, 32>}, {pipeline_mode = #tpu.pipeline_mode<synchronous>, transform_indices = @transform_4, window_bounds = array<i64: 4, 1, 1>}, {transform_indices = @transform_5, window_bounds = array<i64: 1, 1, 128, 128>}, {transform_indices = @transform_6, window_bounds = array<i64: 1, 1, 128, 128>}, {transform_indices = @transform_7, window_bounds = array<i64: 1, 1, 128, 1>}, {transform_indices = @transform_8, window_bounds = array<i64: 1, 1, 128, 8>}]} {
    %c0 = arith.constant 0 : index
    %c0_0 = arith.constant 0 : index
    %c0_1 = arith.constant 0 : index
    %0 = vector.load %arg2[%c0, %c0_0, %c0_1] : memref<1x128x32xf32, #tpu.memory_space<vmem>>, vector<1x128x32xf32>
    %1 = vector.shape_cast %0 : vector<1x128x32xf32> to vector<128x32xf32>
    %2 = arith.truncf %1 : vector<128x32xf32> to vector<128x32xbf16>
    %3 = arith.index_cast %arg1 : i32 to index
    %c0_2 = arith.constant 0 : index
    %c0_3 = arith.constant 0 : index
    %4 = vector.load %arg3[%3, %c0_2, %c0_3] : memref<4x32x24xbf16, #tpu.memory_space<vmem>>, vector<1x32x24xbf16>
    %5 = vector.shape_cast %4 : vector<1x32x24xbf16> to vector<32x24xbf16>
    %cst = arith.constant dense<0.000000e+00> : vector<128x24xf32>
    %6 = tpu.matmul %2, %5, %cst {dimension_numbers = #tpu.dot_dimension_numbers<[1], [0], [0], [1], [0, 0, 1, 1], [], []>} : vector<128x32xbf16>, vector<32x24xbf16>, vector<128x24xf32> -> vector<128x24xf32>
    %7 = arith.index_cast %arg1 : i32 to index
    %c0_4 = arith.constant 0 : index
    %c0_5 = arith.constant 0 : index
    %8 = vector.load %arg4[%7, %c0_4, %c0_5] : memref<4x1x24xf32, #tpu.memory_space<vmem>>, vector<1x1x24xf32>
    %9 = vector.shape_cast %8 : vector<1x1x24xf32> to vector<1x24xf32>
    %10 = vector.broadcast %9 : vector<1x24xf32> to vector<128x24xf32>
    %11 = arith.addf %6, %10 : vector<128x24xf32>
    %12 = vector.extract_strided_slice %11 {offsets = [0, 0], sizes = [128, 8], strides = [1, 1]} : vector<128x24xf32> to vector<128x8xf32>
    %13 = arith.truncf %12 : vector<128x8xf32> to vector<128x8xbf16>
    %14 = vector.extract_strided_slice %11 {offsets = [0, 8], sizes = [128, 8], strides = [1, 1]} : vector<128x24xf32> to vector<128x8xf32>
    %15 = arith.truncf %14 : vector<128x8xf32> to vector<128x8xbf16>
    %16 = vector.extract_strided_slice %11 {offsets = [0, 16], sizes = [128, 8], strides = [1, 1]} : vector<128x24xf32> to vector<128x8xf32>
    %17 = arith.truncf %16 : vector<128x8xf32> to vector<128x8xbf16>
    %cst_6 = arith.constant dense<0.000000e+00> : vector<128x128xf32>
    %18 = tpu.matmul %13, %15, %cst_6 {dimension_numbers = #tpu.dot_dimension_numbers<[1], [1], [0], [0], [0, 0, 1, 0], [], []>} : vector<128x8xbf16>, vector<128x8xbf16>, vector<128x128xf32> -> vector<128x128xf32>
    %cst_7 = arith.constant 0.353553385 : f32
    %19 = vector.broadcast %cst_7 : f32 to vector<128x128xf32>
    %20 = arith.mulf %19, %18 : vector<128x128xf32>
    %21 = tpu.iota {dimensions = array<i32: 1>} : vector<128x128xi32>
    %c100_i32 = arith.constant 100 : i32
    %22 = vector.broadcast %c100_i32 : i32 to vector<128x128xi32>
    %23 = arith.cmpi slt, %21, %22 : vector<128x128xi32>
    %cst_8 = arith.constant -1.000000e+30 : f32
    %24 = vector.broadcast %cst_8 : f32 to vector<128x128xf32>
    %25 = arith.select %23, %20, %24 : vector<128x128xi1>, vector<128x128xf32>
    %cst_9 = arith.constant dense<0xFF800000> : vector<128xf32>
    %26 = vector.multi_reduction <maximumf>, %25, %cst_9 [1] : vector<128x128xf32> to vector<128xf32>
    %27 = vector.shape_cast %26 : vector<128xf32> to vector<128x1xf32>
    %28 = vector.broadcast %27 : vector<128x1xf32> to vector<128x128xf32>
    %29 = arith.subf %25, %28 : vector<128x128xf32>
    %30 = math.exp %29 : vector<128x128xf32>
    %cst_10 = arith.constant dense<0.000000e+00> : vector<128xf32>
    %31 = vector.multi_reduction <add>, %30, %cst_10 [1] : vector<128x128xf32> to vector<128xf32>
    %32 = vector.shape_cast %31 : vector<128xf32> to vector<128x1xf32>
    %33 = tpu.reciprocal %32 {approx = true} : vector<128x1xf32> -> vector<128x1xf32>
    %34 = vector.broadcast %33 : vector<128x1xf32> to vector<128x128xf32>
    %35 = arith.mulf %30, %34 : vector<128x128xf32>
    %36 = arith.index_cast %arg1 : i32 to index
    %c0_11 = arith.constant 0 : index
    %c0_12 = arith.constant 0 : index
    %37 = vector.load %arg5[%36, %c0_11, %c0_12] : memref<4x1x32xf32, #tpu.memory_space<vmem>>, vector<1x1x32xf32>
    %38 = vector.shape_cast %37 : vector<1x1x32xf32> to vector<1x32xf32>
    %39 = vector.broadcast %38 : vector<1x32xf32> to vector<128x32xf32>
    %40 = arith.mulf %1, %39 : vector<128x32xf32>
    %cst_13 = arith.constant dense<0.000000e+00> : vector<128xf32>
    %41 = vector.multi_reduction <add>, %40, %cst_13 [1] : vector<128x32xf32> to vector<128xf32>
    %42 = vector.shape_cast %41 : vector<128xf32> to vector<128x1xf32>
    %43 = arith.index_cast %arg1 : i32 to index
    %c0_14 = arith.constant 0 : index
    %c0_15 = arith.constant 0 : index
    %44 = vector.load %arg6[%43, %c0_14, %c0_15] : memref<4x1x1xf32, #tpu.memory_space<vmem>>, vector<1x1x1xf32>
    %45 = vector.shape_cast %44 : vector<1x1x1xf32> to vector<1x1xf32>
    %46 = vector.broadcast %45 : vector<1x1xf32> to vector<128x1xf32>
    %47 = arith.addf %42, %46 : vector<128x1xf32>
    %cst_16 = arith.constant -5.000000e+00 : f32
    %48 = vector.broadcast %cst_16 : f32 to vector<128x1xf32>
    %49 = arith.mulf %48, %47 : vector<128x1xf32>
    %50 = math.exp %49 : vector<128x1xf32>
    %cst_17 = arith.constant 1.000000e+00 : f32
    %51 = vector.broadcast %cst_17 : f32 to vector<128x1xf32>
    %52 = arith.addf %51, %50 : vector<128x1xf32>
    %cst_18 = arith.constant 1.000000e+00 : f32
    %53 = vector.broadcast %cst_18 : f32 to vector<128x1xf32>
    %54 = arith.divf %53, %52 : vector<128x1xf32>
    %cst_19 = arith.constant 9.99999974E-6 : f32
    %55 = vector.broadcast %cst_19 : f32 to vector<128x1xf32>
    %56 = arith.addf %54, %55 : vector<128x1xf32>
    %cst_20 = arith.constant 1.09861231 : f32
    %57 = vector.broadcast %cst_20 : f32 to vector<128x1xf32>
    %58 = arith.mulf %56, %57 : vector<128x1xf32>
    %59 = math.exp %58 : vector<128x1xf32>
    %cst_21 = arith.constant 1.000000e+00 : f32
    %60 = vector.broadcast %cst_21 : f32 to vector<128x1xf32>
    %61 = arith.subf %59, %60 : vector<128x1xf32>
    %62 = tpu.iota {dimensions = array<i32: 0>} : vector<128x128xi32>
    %63 = tpu.iota {dimensions = array<i32: 1>} : vector<128x128xi32>
    %64 = arith.subi %62, %63 : vector<128x128xi32>
    %65 = math.absi %64 : vector<128x128xi32>
    %66 = arith.sitofp %65 : vector<128x128xi32> to vector<128x128xf32>
    %cst_22 = arith.constant -5.000000e-01 : f32
    %67 = vector.broadcast %cst_22 : f32 to vector<128x128xf32>
    %68 = arith.mulf %67, %66 : vector<128x128xf32>
    %69 = arith.mulf %68, %66 : vector<128x128xf32>
    %70 = tpu.reciprocal %61 {approx = true} : vector<128x1xf32> -> vector<128x1xf32>
    %cst_23 = arith.constant 0.398942292 : f32
    %71 = vector.broadcast %cst_23 : f32 to vector<128x1xf32>
    %72 = arith.mulf %71, %70 : vector<128x1xf32>
    %73 = arith.mulf %70, %70 : vector<128x1xf32>
    %74 = vector.broadcast %73 : vector<128x1xf32> to vector<128x128xf32>
    %75 = arith.mulf %69, %74 : vector<128x128xf32>
    %76 = math.exp %75 : vector<128x128xf32>
    %77 = vector.broadcast %72 : vector<128x1xf32> to vector<128x128xf32>
    %78 = arith.mulf %77, %76 : vector<128x128xf32>
    %79 = arith.truncf %35 : vector<128x128xf32> to vector<128x128xbf16>
    %cst_24 = arith.constant dense<0.000000e+00> : vector<128x8xf32>
    %80 = tpu.matmul %79, %17, %cst_24 {dimension_numbers = #tpu.dot_dimension_numbers<[1], [0], [0], [1], [0, 0, 1, 1], [], []>} : vector<128x128xbf16>, vector<128x8xbf16>, vector<128x8xf32> -> vector<128x8xf32>
    %c0_25 = arith.constant 0 : index
    %c0_26 = arith.constant 0 : index
    %c0_27 = arith.constant 0 : index
    %c0_28 = arith.constant 0 : index
    %81 = vector.load %arg7[%c0_25, %c0_26, %c0_27, %c0_28] : memref<1x1x128x128xf32, #tpu.memory_space<vmem>>, vector<1x1x128x128xf32>
    %82 = vector.shape_cast %81 : vector<1x1x128x128xf32> to vector<128x128xf32>
    %83 = vector.shape_cast %35 : vector<128x128xf32> to vector<1x1x128x128xf32>
    tpu.vector_store %arg7[%c0_25, %c0_26, %c0_27, %c0_28], %83 {strides = array<i32>} : memref<1x1x128x128xf32, #tpu.memory_space<vmem>>, vector<1x1x128x128xf32>,
    %c0_29 = arith.constant 0 : index
    %c0_30 = arith.constant 0 : index
    %c0_31 = arith.constant 0 : index
    %c0_32 = arith.constant 0 : index
    %84 = vector.load %arg8[%c0_29, %c0_30, %c0_31, %c0_32] : memref<1x1x128x128xf32, #tpu.memory_space<vmem>>, vector<1x1x128x128xf32>
    %85 = vector.shape_cast %84 : vector<1x1x128x128xf32> to vector<128x128xf32>
    %86 = vector.shape_cast %78 : vector<128x128xf32> to vector<1x1x128x128xf32>
    tpu.vector_store %arg8[%c0_29, %c0_30, %c0_31, %c0_32], %86 {strides = array<i32>} : memref<1x1x128x128xf32, #tpu.memory_space<vmem>>, vector<1x1x128x128xf32>,
    %c0_33 = arith.constant 0 : index
    %c0_34 = arith.constant 0 : index
    %c0_35 = arith.constant 0 : index
    %c0_36 = arith.constant 0 : index
    %87 = vector.load %arg9[%c0_33, %c0_34, %c0_35, %c0_36] : memref<1x1x128x1xf32, #tpu.memory_space<vmem>>, vector<1x1x128x1xf32>
    %88 = vector.shape_cast %87 : vector<1x1x128x1xf32> to vector<128x1xf32>
    %89 = vector.shape_cast %61 : vector<128x1xf32> to vector<1x1x128x1xf32>
    tpu.vector_store %arg9[%c0_33, %c0_34, %c0_35, %c0_36], %89 {strides = array<i32>} : memref<1x1x128x1xf32, #tpu.memory_space<vmem>>, vector<1x1x128x1xf32>,
    %90 = arith.truncf %80 : vector<128x8xf32> to vector<128x8xbf16>
    %c0_37 = arith.constant 0 : index
    %c0_38 = arith.constant 0 : index
    %c0_39 = arith.constant 0 : index
    %c0_40 = arith.constant 0 : index
    %91 = vector.load %arg10[%c0_37, %c0_38, %c0_39, %c0_40] : memref<1x1x128x8xbf16, #tpu.memory_space<vmem>>, vector<1x1x128x8xbf16>
    %92 = vector.shape_cast %91 : vector<1x1x128x8xbf16> to vector<128x8xbf16>
    %93 = vector.shape_cast %90 : vector<128x8xbf16> to vector<1x1x128x8xbf16>
    tpu.vector_store %arg10[%c0_37, %c0_38, %c0_39, %c0_40], %93 {strides = array<i32>} : memref<1x1x128x8xbf16, #tpu.memory_space<vmem>>, vector<1x1x128x8xbf16>,
    return
  }
  func.func @transform_0(%arg0: i32, %arg1: i32) -> (i32, i32, i32) {
    %c0_i32 = arith.constant 0 : i32
    %c0_i32_0 = arith.constant 0 : i32
    %c0_i32_1 = arith.constant 0 : i32
    return %arg0, %c0_i32, %c0_i32_0 : i32, i32, i32
  }
  func.func @transform_1(%arg0: i32, %arg1: i32) -> (i32, i32, i32) {
    %c0_i32 = arith.constant 0 : i32
    %c0_i32_0 = arith.constant 0 : i32
    %c0_i32_1 = arith.constant 0 : i32
    %c0_i32_2 = arith.constant 0 : i32
    return %c0_i32, %c0_i32_0, %c0_i32_1 : i32, i32, i32
  }
  func.func @transform_2(%arg0: i32, %arg1: i32) -> (i32, i32, i32) {
    %c0_i32 = arith.constant 0 : i32
    %c0_i32_0 = arith.constant 0 : i32
    %c0_i32_1 = arith.constant 0 : i32
    %c0_i32_2 = arith.constant 0 : i32
    return %c0_i32, %c0_i32_0, %c0_i32_1 : i32, i32, i32
  }
  func.func @transform_3(%arg0: i32, %arg1: i32) -> (i32, i32, i32) {
    %c0_i32 = arith.constant 0 : i32
    %c0_i32_0 = arith.constant 0 : i32
    %c0_i32_1 = arith.constant 0 : i32
    %c0_i32_2 = arith.constant 0 : i32
    return %c0_i32, %c0_i32_0, %c0_i32_1 : i32, i32, i32
  }
  func.func @transform_4(%arg0: i32, %arg1: i32) -> (i32, i32, i32) {
    %c0_i32 = arith.constant 0 : i32
    %c0_i32_0 = arith.constant 0 : i32
    %c0_i32_1 = arith.constant 0 : i32
    %c0_i32_2 = arith.constant 0 : i32
    return %c0_i32, %c0_i32_0, %c0_i32_1 : i32, i32, i32
  }
  func.func @transform_5(%arg0: i32, %arg1: i32) -> (i32, i32, i32, i32) {
    %c0_i32 = arith.constant 0 : i32
    %c0_i32_0 = arith.constant 0 : i32
    %c0_i32_1 = arith.constant 0 : i32
    return %arg0, %arg1, %c0_i32, %c0_i32_0 : i32, i32, i32, i32
  }
  func.func @transform_6(%arg0: i32, %arg1: i32) -> (i32, i32, i32, i32) {
    %c0_i32 = arith.constant 0 : i32
    %c0_i32_0 = arith.constant 0 : i32
    %c0_i32_1 = arith.constant 0 : i32
    return %arg0, %arg1, %c0_i32, %c0_i32_0 : i32, i32, i32, i32
  }
  func.func @transform_7(%arg0: i32, %arg1: i32) -> (i32, i32, i32, i32) {
    %c0_i32 = arith.constant 0 : i32
    %c0_i32_0 = arith.constant 0 : i32
    %c0_i32_1 = arith.constant 0 : i32
    return %arg0, %arg1, %c0_i32, %c0_i32_0 : i32, i32, i32, i32
  }
  func.func @transform_8(%arg0: i32, %arg1: i32) -> (i32, i32, i32, i32) {
    %c0_i32 = arith.constant 0 : i32
    %c0_i32_0 = arith.constant 0 : i32
    %c0_i32_1 = arith.constant 0 : i32
    return %arg0, %arg1, %c0_i32, %c0_i32_0 : i32, i32, i32, i32
  }
}

module attributes {stable_mosaic.version = 11 : i64} {
  func.func @mix_ffn_kernel(%arg0: i32, %arg1: memref<1x128x32xf32, #tpu.memory_space<vmem>>, %arg2: memref<1x4x128x8xbf16, #tpu.memory_space<vmem>>, %arg3: memref<4x8x32xbf16, #tpu.memory_space<vmem>>, %arg4: memref<1x32xf32, #tpu.memory_space<vmem>>, %arg5: memref<1x32xf32, #tpu.memory_space<vmem>>, %arg6: memref<1x32xf32, #tpu.memory_space<vmem>>, %arg7: memref<1x32xf32, #tpu.memory_space<vmem>>, %arg8: memref<1x32xf32, #tpu.memory_space<vmem>>, %arg9: memref<32x128xbf16, #tpu.memory_space<vmem>>, %arg10: memref<1x128xf32, #tpu.memory_space<vmem>>, %arg11: memref<128x32xbf16, #tpu.memory_space<vmem>>, %arg12: memref<1x32xf32, #tpu.memory_space<vmem>>, %arg13: memref<1x128x32xf32, #tpu.memory_space<vmem>>) attributes {dimension_semantics = [#tpu.dimension_semantics<parallel>], iteration_bounds = array<i64: 2>, scalar_prefetch = 0 : i64, scratch_operands = 0 : i64, tpu.core_type = #tpu.core_type<tc>, window_params = [{transform_indices = @transform_0, window_bounds = array<i64: 1, 128, 32>}, {transform_indices = @transform_1, window_bounds = array<i64: 1, 4, 128, 8>}, {pipeline_mode = #tpu.pipeline_mode<synchronous>, transform_indices = @transform_2, window_bounds = array<i64: 4, 8, 32>}, {pipeline_mode = #tpu.pipeline_mode<synchronous>, transform_indices = @transform_3, window_bounds = array<i64: 1, 32>}, {pipeline_mode = #tpu.pipeline_mode<synchronous>, transform_indices = @transform_4, window_bounds = array<i64: 1, 32>}, {pipeline_mode = #tpu.pipeline_mode<synchronous>, transform_indices = @transform_5, window_bounds = array<i64: 1, 32>}, {pipeline_mode = #tpu.pipeline_mode<synchronous>, transform_indices = @transform_6, window_bounds = array<i64: 1, 32>}, {pipeline_mode = #tpu.pipeline_mode<synchronous>, transform_indices = @transform_7, window_bounds = array<i64: 1, 32>}, {pipeline_mode = #tpu.pipeline_mode<synchronous>, transform_indices = @transform_8, window_bounds = array<i64: 32, 128>}, {pipeline_mode = #tpu.pipeline_mode<synchronous>, transform_indices = @transform_9, window_bounds = array<i64: 1, 128>}, {pipeline_mode = #tpu.pipeline_mode<synchronous>, transform_indices = @transform_10, window_bounds = array<i64: 128, 32>}, {pipeline_mode = #tpu.pipeline_mode<synchronous>, transform_indices = @transform_11, window_bounds = array<i64: 1, 32>}, {transform_indices = @transform_12, window_bounds = array<i64: 1, 128, 32>}]} {
    %c0 = arith.constant 0 : index
    %c0_0 = arith.constant 0 : index
    %c0_1 = arith.constant 0 : index
    %0 = vector.load %arg1[%c0, %c0_0, %c0_1] : memref<1x128x32xf32, #tpu.memory_space<vmem>>, vector<1x128x32xf32>
    %1 = vector.shape_cast %0 : vector<1x128x32xf32> to vector<128x32xf32>
    %c0_2 = arith.constant 0 : index
    %c0_3 = arith.constant 0 : index
    %c0_4 = arith.constant 0 : index
    %c0_5 = arith.constant 0 : index
    %2 = vector.load %arg2[%c0_2, %c0_3, %c0_4, %c0_5] : memref<1x4x128x8xbf16, #tpu.memory_space<vmem>>, vector<1x1x128x8xbf16>
    %3 = vector.shape_cast %2 : vector<1x1x128x8xbf16> to vector<128x8xbf16>
    %c0_6 = arith.constant 0 : index
    %c0_7 = arith.constant 0 : index
    %c0_8 = arith.constant 0 : index
    %4 = vector.load %arg3[%c0_6, %c0_7, %c0_8] : memref<4x8x32xbf16, #tpu.memory_space<vmem>>, vector<1x8x32xbf16>
    %5 = vector.shape_cast %4 : vector<1x8x32xbf16> to vector<8x32xbf16>
    %cst = arith.constant dense<0.000000e+00> : vector<128x32xf32>
    %6 = tpu.matmul %3, %5, %cst {dimension_numbers = #tpu.dot_dimension_numbers<[1], [0], [0], [1], [0, 0, 1, 1], [], []>} : vector<128x8xbf16>, vector<8x32xbf16>, vector<128x32xf32> -> vector<128x32xf32>
    %c0_9 = arith.constant 0 : index
    %c1 = arith.constant 1 : index
    %c0_10 = arith.constant 0 : index
    %c0_11 = arith.constant 0 : index
    %7 = vector.load %arg2[%c0_9, %c1, %c0_10, %c0_11] : memref<1x4x128x8xbf16, #tpu.memory_space<vmem>>, vector<1x1x128x8xbf16>
    %8 = vector.shape_cast %7 : vector<1x1x128x8xbf16> to vector<128x8xbf16>
    %c1_12 = arith.constant 1 : index
    %c0_13 = arith.constant 0 : index
    %c0_14 = arith.constant 0 : index
    %9 = vector.load %arg3[%c1_12, %c0_13, %c0_14] : memref<4x8x32xbf16, #tpu.memory_space<vmem>>, vector<1x8x32xbf16>
    %10 = vector.shape_cast %9 : vector<1x8x32xbf16> to vector<8x32xbf16>
    %cst_15 = arith.constant dense<0.000000e+00> : vector<128x32xf32>
    %11 = tpu.matmul %8, %10, %cst_15 {dimension_numbers = #tpu.dot_dimension_numbers<[1], [0], [0], [1], [0, 0, 1, 1], [], []>} : vector<128x8xbf16>, vector<8x32xbf16>, vector<128x32xf32> -> vector<128x32xf32>
    %12 = arith.addf %6, %11 : vector<128x32xf32>
    %c0_16 = arith.constant 0 : index
    %c2 = arith.constant 2 : index
    %c0_17 = arith.constant 0 : index
    %c0_18 = arith.constant 0 : index
    %13 = vector.load %arg2[%c0_16, %c2, %c0_17, %c0_18] : memref<1x4x128x8xbf16, #tpu.memory_space<vmem>>, vector<1x1x128x8xbf16>
    %14 = vector.shape_cast %13 : vector<1x1x128x8xbf16> to vector<128x8xbf16>
    %c2_19 = arith.constant 2 : index
    %c0_20 = arith.constant 0 : index
    %c0_21 = arith.constant 0 : index
    %15 = vector.load %arg3[%c2_19, %c0_20, %c0_21] : memref<4x8x32xbf16, #tpu.memory_space<vmem>>, vector<1x8x32xbf16>
    %16 = vector.shape_cast %15 : vector<1x8x32xbf16> to vector<8x32xbf16>
    %cst_22 = arith.constant dense<0.000000e+00> : vector<128x32xf32>
    %17 = tpu.matmul %14, %16, %cst_22 {dimension_numbers = #tpu.dot_dimension_numbers<[1], [0], [0], [1], [0, 0, 1, 1], [], []>} : vector<128x8xbf16>, vector<8x32xbf16>, vector<128x32xf32> -> vector<128x32xf32>
    %18 = arith.addf %12, %17 : vector<128x32xf32>
    %c0_23 = arith.constant 0 : index
    %c3 = arith.constant 3 : index
    %c0_24 = arith.constant 0 : index
    %c0_25 = arith.constant 0 : index
    %19 = vector.load %arg2[%c0_23, %c3, %c0_24, %c0_25] : memref<1x4x128x8xbf16, #tpu.memory_space<vmem>>, vector<1x1x128x8xbf16>
    %20 = vector.shape_cast %19 : vector<1x1x128x8xbf16> to vector<128x8xbf16>
    %c3_26 = arith.constant 3 : index
    %c0_27 = arith.constant 0 : index
    %c0_28 = arith.constant 0 : index
    %21 = vector.load %arg3[%c3_26, %c0_27, %c0_28] : memref<4x8x32xbf16, #tpu.memory_space<vmem>>, vector<1x8x32xbf16>
    %22 = vector.shape_cast %21 : vector<1x8x32xbf16> to vector<8x32xbf16>
    %cst_29 = arith.constant dense<0.000000e+00> : vector<128x32xf32>
    %23 = tpu.matmul %20, %22, %cst_29 {dimension_numbers = #tpu.dot_dimension_numbers<[1], [0], [0], [1], [0, 0, 1, 1], [], []>} : vector<128x8xbf16>, vector<8x32xbf16>, vector<128x32xf32> -> vector<128x32xf32>
    %24 = arith.addf %18, %23 : vector<128x32xf32>
    %c0_30 = arith.constant 0 : index
    %c0_31 = arith.constant 0 : index
    %25 = vector.load %arg4[%c0_30, %c0_31] : memref<1x32xf32, #tpu.memory_space<vmem>>, vector<1x32xf32>
    %26 = vector.broadcast %25 : vector<1x32xf32> to vector<128x32xf32>
    %27 = arith.addf %24, %26 : vector<128x32xf32>
    %28 = arith.addf %1, %27 : vector<128x32xf32>
    %c0_32 = arith.constant 0 : index
    %c0_33 = arith.constant 0 : index
    %29 = vector.load %arg5[%c0_32, %c0_33] : memref<1x32xf32, #tpu.memory_space<vmem>>, vector<1x32xf32>
    %c0_34 = arith.constant 0 : index
    %c0_35 = arith.constant 0 : index
    %30 = vector.load %arg6[%c0_34, %c0_35] : memref<1x32xf32, #tpu.memory_space<vmem>>, vector<1x32xf32>
    %cst_36 = arith.constant dense<0.000000e+00> : vector<128xf32>
    %31 = vector.multi_reduction <add>, %28, %cst_36 [1] : vector<128x32xf32> to vector<128xf32>
    %32 = vector.shape_cast %31 : vector<128xf32> to vector<128x1xf32>
    %cst_37 = arith.constant 3.200000e+01 : f32
    %33 = vector.broadcast %cst_37 : f32 to vector<128x1xf32>
    %34 = arith.divf %32, %33 : vector<128x1xf32>
    %35 = vector.broadcast %34 : vector<128x1xf32> to vector<128x32xf32>
    %36 = arith.subf %28, %35 : vector<128x32xf32>
    %37 = arith.mulf %36, %36 : vector<128x32xf32>
    %cst_38 = arith.constant dense<0.000000e+00> : vector<128xf32>
    %38 = vector.multi_reduction <add>, %37, %cst_38 [1] : vector<128x32xf32> to vector<128xf32>
    %39 = vector.shape_cast %38 : vector<128xf32> to vector<128x1xf32>
    %cst_39 = arith.constant 3.200000e+01 : f32
    %40 = vector.broadcast %cst_39 : f32 to vector<128x1xf32>
    %41 = arith.divf %39, %40 : vector<128x1xf32>
    %42 = vector.broadcast %34 : vector<128x1xf32> to vector<128x32xf32>
    %43 = arith.subf %28, %42 : vector<128x32xf32>
    %cst_40 = arith.constant 9.99999974E-6 : f32
    %44 = vector.broadcast %cst_40 : f32 to vector<128x1xf32>
    %45 = arith.addf %41, %44 : vector<128x1xf32>
    %46 = math.rsqrt %45 : vector<128x1xf32>
    %47 = vector.broadcast %46 : vector<128x1xf32> to vector<128x32xf32>
    %48 = arith.mulf %43, %47 : vector<128x32xf32>
    %49 = vector.broadcast %29 : vector<1x32xf32> to vector<128x32xf32>
    %50 = arith.mulf %48, %49 : vector<128x32xf32>
    %51 = vector.broadcast %30 : vector<1x32xf32> to vector<128x32xf32>
    %52 = arith.addf %50, %51 : vector<128x32xf32>
    %53 = arith.truncf %52 : vector<128x32xf32> to vector<128x32xbf16>
    %c0_41 = arith.constant 0 : index
    %c0_42 = arith.constant 0 : index
    %54 = vector.load %arg9[%c0_41, %c0_42] : memref<32x128xbf16, #tpu.memory_space<vmem>>, vector<32x128xbf16>
    %cst_43 = arith.constant dense<0.000000e+00> : vector<128x128xf32>
    %55 = tpu.matmul %53, %54, %cst_43 {dimension_numbers = #tpu.dot_dimension_numbers<[1], [0], [0], [1], [0, 0, 1, 1], [], []>} : vector<128x32xbf16>, vector<32x128xbf16>, vector<128x128xf32> -> vector<128x128xf32>
    %c0_44 = arith.constant 0 : index
    %c0_45 = arith.constant 0 : index
    %56 = vector.load %arg10[%c0_44, %c0_45] : memref<1x128xf32, #tpu.memory_space<vmem>>, vector<1x128xf32>
    %57 = vector.broadcast %56 : vector<1x128xf32> to vector<128x128xf32>
    %58 = arith.addf %55, %57 : vector<128x128xf32>
    %cst_46 = arith.constant 0.000000e+00 : f32
    %59 = vector.broadcast %cst_46 : f32 to vector<128x128xf32>
    %60 = arith.maximumf %58, %59 : vector<128x128xf32>
    %61 = arith.truncf %60 : vector<128x128xf32> to vector<128x128xbf16>
    %c0_47 = arith.constant 0 : index
    %c0_48 = arith.constant 0 : index
    %62 = vector.load %arg11[%c0_47, %c0_48] : memref<128x32xbf16, #tpu.memory_space<vmem>>, vector<128x32xbf16>
    %cst_49 = arith.constant dense<0.000000e+00> : vector<128x32xf32>
    %63 = tpu.matmul %61, %62, %cst_49 {dimension_numbers = #tpu.dot_dimension_numbers<[1], [0], [0], [1], [0, 0, 1, 1], [], []>} : vector<128x128xbf16>, vector<128x32xbf16>, vector<128x32xf32> -> vector<128x32xf32>
    %c0_50 = arith.constant 0 : index
    %c0_51 = arith.constant 0 : index
    %64 = vector.load %arg12[%c0_50, %c0_51] : memref<1x32xf32, #tpu.memory_space<vmem>>, vector<1x32xf32>
    %65 = vector.broadcast %64 : vector<1x32xf32> to vector<128x32xf32>
    %66 = arith.addf %63, %65 : vector<128x32xf32>
    %67 = arith.addf %52, %66 : vector<128x32xf32>
    %c0_52 = arith.constant 0 : index
    %c0_53 = arith.constant 0 : index
    %68 = vector.load %arg7[%c0_52, %c0_53] : memref<1x32xf32, #tpu.memory_space<vmem>>, vector<1x32xf32>
    %c0_54 = arith.constant 0 : index
    %c0_55 = arith.constant 0 : index
    %69 = vector.load %arg8[%c0_54, %c0_55] : memref<1x32xf32, #tpu.memory_space<vmem>>, vector<1x32xf32>
    %cst_56 = arith.constant dense<0.000000e+00> : vector<128xf32>
    %70 = vector.multi_reduction <add>, %67, %cst_56 [1] : vector<128x32xf32> to vector<128xf32>
    %71 = vector.shape_cast %70 : vector<128xf32> to vector<128x1xf32>
    %cst_57 = arith.constant 3.200000e+01 : f32
    %72 = vector.broadcast %cst_57 : f32 to vector<128x1xf32>
    %73 = arith.divf %71, %72 : vector<128x1xf32>
    %74 = vector.broadcast %73 : vector<128x1xf32> to vector<128x32xf32>
    %75 = arith.subf %67, %74 : vector<128x32xf32>
    %76 = arith.mulf %75, %75 : vector<128x32xf32>
    %cst_58 = arith.constant dense<0.000000e+00> : vector<128xf32>
    %77 = vector.multi_reduction <add>, %76, %cst_58 [1] : vector<128x32xf32> to vector<128xf32>
    %78 = vector.shape_cast %77 : vector<128xf32> to vector<128x1xf32>
    %cst_59 = arith.constant 3.200000e+01 : f32
    %79 = vector.broadcast %cst_59 : f32 to vector<128x1xf32>
    %80 = arith.divf %78, %79 : vector<128x1xf32>
    %81 = vector.broadcast %73 : vector<128x1xf32> to vector<128x32xf32>
    %82 = arith.subf %67, %81 : vector<128x32xf32>
    %cst_60 = arith.constant 9.99999974E-6 : f32
    %83 = vector.broadcast %cst_60 : f32 to vector<128x1xf32>
    %84 = arith.addf %80, %83 : vector<128x1xf32>
    %85 = math.rsqrt %84 : vector<128x1xf32>
    %86 = vector.broadcast %85 : vector<128x1xf32> to vector<128x32xf32>
    %87 = arith.mulf %82, %86 : vector<128x32xf32>
    %88 = vector.broadcast %68 : vector<1x32xf32> to vector<128x32xf32>
    %89 = arith.mulf %87, %88 : vector<128x32xf32>
    %90 = vector.broadcast %69 : vector<1x32xf32> to vector<128x32xf32>
    %91 = arith.addf %89, %90 : vector<128x32xf32>
    %c0_61 = arith.constant 0 : index
    %c0_62 = arith.constant 0 : index
    %c0_63 = arith.constant 0 : index
    %92 = vector.load %arg13[%c0_61, %c0_62, %c0_63] : memref<1x128x32xf32, #tpu.memory_space<vmem>>, vector<1x128x32xf32>
    %93 = vector.shape_cast %92 : vector<1x128x32xf32> to vector<128x32xf32>
    %94 = vector.shape_cast %91 : vector<128x32xf32> to vector<1x128x32xf32>
    tpu.vector_store %arg13[%c0_61, %c0_62, %c0_63], %94 {strides = array<i32>} : memref<1x128x32xf32, #tpu.memory_space<vmem>>, vector<1x128x32xf32>,
    return
  }
  func.func @transform_0(%arg0: i32) -> (i32, i32, i32) {
    %c0_i32 = arith.constant 0 : i32
    %c0_i32_0 = arith.constant 0 : i32
    %c0_i32_1 = arith.constant 0 : i32
    return %arg0, %c0_i32, %c0_i32_0 : i32, i32, i32
  }
  func.func @transform_1(%arg0: i32) -> (i32, i32, i32, i32) {
    %c0_i32 = arith.constant 0 : i32
    %c0_i32_0 = arith.constant 0 : i32
    %c0_i32_1 = arith.constant 0 : i32
    %c0_i32_2 = arith.constant 0 : i32
    return %arg0, %c0_i32, %c0_i32_0, %c0_i32_1 : i32, i32, i32, i32
  }
  func.func @transform_2(%arg0: i32) -> (i32, i32, i32) {
    %c0_i32 = arith.constant 0 : i32
    %c0_i32_0 = arith.constant 0 : i32
    %c0_i32_1 = arith.constant 0 : i32
    %c0_i32_2 = arith.constant 0 : i32
    return %c0_i32, %c0_i32_0, %c0_i32_1 : i32, i32, i32
  }
  func.func @transform_3(%arg0: i32) -> (i32, i32) {
    %c0_i32 = arith.constant 0 : i32
    %c0_i32_0 = arith.constant 0 : i32
    %c0_i32_1 = arith.constant 0 : i32
    return %c0_i32, %c0_i32_0 : i32, i32
  }
  func.func @transform_4(%arg0: i32) -> (i32, i32) {
    %c0_i32 = arith.constant 0 : i32
    %c0_i32_0 = arith.constant 0 : i32
    %c0_i32_1 = arith.constant 0 : i32
    return %c0_i32, %c0_i32_0 : i32, i32
  }
  func.func @transform_5(%arg0: i32) -> (i32, i32) {
    %c0_i32 = arith.constant 0 : i32
    %c0_i32_0 = arith.constant 0 : i32
    %c0_i32_1 = arith.constant 0 : i32
    return %c0_i32, %c0_i32_0 : i32, i32
  }
  func.func @transform_6(%arg0: i32) -> (i32, i32) {
    %c0_i32 = arith.constant 0 : i32
    %c0_i32_0 = arith.constant 0 : i32
    %c0_i32_1 = arith.constant 0 : i32
    return %c0_i32, %c0_i32_0 : i32, i32
  }
  func.func @transform_7(%arg0: i32) -> (i32, i32) {
    %c0_i32 = arith.constant 0 : i32
    %c0_i32_0 = arith.constant 0 : i32
    %c0_i32_1 = arith.constant 0 : i32
    return %c0_i32, %c0_i32_0 : i32, i32
  }
  func.func @transform_8(%arg0: i32) -> (i32, i32) {
    %c0_i32 = arith.constant 0 : i32
    %c0_i32_0 = arith.constant 0 : i32
    %c0_i32_1 = arith.constant 0 : i32
    return %c0_i32, %c0_i32_0 : i32, i32
  }
  func.func @transform_9(%arg0: i32) -> (i32, i32) {
    %c0_i32 = arith.constant 0 : i32
    %c0_i32_0 = arith.constant 0 : i32
    %c0_i32_1 = arith.constant 0 : i32
    return %c0_i32, %c0_i32_0 : i32, i32
  }
  func.func @transform_10(%arg0: i32) -> (i32, i32) {
    %c0_i32 = arith.constant 0 : i32
    %c0_i32_0 = arith.constant 0 : i32
    %c0_i32_1 = arith.constant 0 : i32
    return %c0_i32, %c0_i32_0 : i32, i32
  }
  func.func @transform_11(%arg0: i32) -> (i32, i32) {
    %c0_i32 = arith.constant 0 : i32
    %c0_i32_0 = arith.constant 0 : i32
    %c0_i32_1 = arith.constant 0 : i32
    return %c0_i32, %c0_i32_0 : i32, i32
  }
  func.func @transform_12(%arg0: i32) -> (i32, i32, i32) {
    %c0_i32 = arith.constant 0 : i32
    %c0_i32_0 = arith.constant 0 : i32
    %c0_i32_1 = arith.constant 0 : i32
    return %arg0, %c0_i32, %c0_i32_0 : i32, i32, i32
  }
}

</mosaic_0001>

<llo_original>
// kernel: encoder_layer_forward.2
$region0: #{encoder_layer_forward.2}
  #allocation0 [shape = 'u32[]', space=smem, size = 0x4, offset = 0x4, fixed_abs, tag = 'smem constant byte address 0x4 - core index']
  #allocation1 [shape = 'u32[72,128]{1,0:T(1,128)}', space=vmem, size = 0x9000, scoped, tag = 'internal scratch']
  %s0 = inlined_call_operand.vmem [shape: f32[2,128,32], index: 0, kind: input, shape index: {}]
  %s1 = inlined_call_operand.vmem [shape: bf16[4,32,24], index: 1, kind: input, shape index: {}]
  %s2 = inlined_call_operand.vmem [shape: f32[4,1,24], index: 2, kind: input, shape index: {}]
  %s3 = inlined_call_operand.vmem [shape: f32[4,1,32], index: 3, kind: input, shape index: {}]
  %s4 = inlined_call_operand.vmem [shape: f32[4,1,1], index: 4, kind: input, shape index: {}]
  %s5 = inlined_call_operand.vmem [shape: f32[2,4,128,128], index: 5, kind: output, shape index: {0}]
  %s6 = inlined_call_operand.vmem [shape: f32[2,4,128,128], index: 6, kind: output, shape index: {1}]
  %s7 = inlined_call_operand.vmem [shape: f32[2,4,128,1], index: 7, kind: output, shape index: {2}]
  %s8 = inlined_call_operand.vmem [shape: bf16[2,4,128,8], index: 8, kind: output, shape index: {3}]
  %9 = xla_tuple %s5, %s6, %s7, %s8
  %s10 = sld [smem:[#allocation0]]
  $region77: #{encoder_layer_forward.2} parent=0
    _
  %s12 = ssub.s32 1, %s10
  %s13 = scalar_select 0, %s12, %s10
  loop: start=0, step=1, limit=10
  $region2: #{encoder_layer_forward.2} parent=0 // loop_pre_header
    _
  $region3: #{encoder_layer_forward.2} parent=0 // loop_header
    %s15 = sphi 0, %s19
    %p16 = scmp.ge.s32.totalorder %s15, 10
    %s22 = sphi 0, %s34
    %s23 = sphi 0, %s30
    %s24 = sphi 0, %s22
    %s25 = sphi 0, %s23
    %s26 = sphi 0, %s24
    %s27 = sphi 0, %s25
    %s37 = sphi 0, %s39
    %s40 = sphi 0, %s37
    %s41 = sphi 0, %s40
    %s57 = sphi 0, %s41
    %s61 = sphi 0, %s61
    %s63 = sphi 0, %s61
    %s64 = sphi 0, %s63
    %s78 = sphi 0, %s64
    %s82 = sphi 0, %s82
    %s84 = sphi 0, %s82
    %s85 = sphi 0, %s84
    %s99 = sphi 0, %s85
    %s103 = sphi 0, %s103
    %s105 = sphi 0, %s103
    %s106 = sphi 0, %s105
    %s120 = sphi 0, %s106
    %s124 = sphi 0, %s124
    %s126 = sphi 0, %s124
    %s127 = sphi 0, %s126
    %s141 = sphi 0, %s127
    %s149 = sphi 0, %s151
    %s152 = sphi 0, %s149
    %s153 = sphi 0, %s152
    %s169 = sphi 0, %s153
    %s177 = sphi 0, %s179
    %s180 = sphi 0, %s177
    %s181 = sphi 0, %s180
    %s197 = sphi 0, %s181
    %s205 = sphi 0, %s207
    %s208 = sphi 0, %s205
    %s209 = sphi 0, %s208
    %s225 = sphi 0, %s209
    %s233 = sphi 0, %s235
    %s236 = sphi 0, %s233
    %s237 = sphi 0, %s236
    %s253 = sphi 0, %s237
  $region4: #{encoder_layer_forward.2} parent=0 // loop_header_branch
    %18 = sbr.rel (%p16) target = $region8
  $region5: #{encoder_layer_forward.2} parent=0 // loop_body
    %s20 = ssub.s32 %s15, 1
    %s21 = ssub.s32 %s15, 2
    %s28 = sadd.s32 1, %s23
    %p29 = scmp.ge.s32.totalorder %s28, 4
    %s30 = scalar_select %p29, 0, %s28
    %s31 = sadd.s32 1, %s22
    %s32 = scalar_select %p29, %s31, %s22
    %p33 = scmp.ge.s32.totalorder %s32, 2
    %s34 = scalar_select %p33, 0, %s32
    %s35 = ssub.s32 %s22, %s34
    %p36 = scmp.eq.s32.totalorder %s35, 0
    %s38 = sadd.s32 %s37, 1
    %s39 = scalar_select %p36, %s37, %s38
    %p42 = pneg %p36
    %p43 = scmp.eq.s32.totalorder %s15, 7
    %p44 = por %p42, %p43
    %p45 = scmp.ne.s32.totalorder %s37, %s40
    %p46 = scmp.eq.s32.totalorder %s15, 0
    %p47 = por %p45, %p46
    %p48 = scmp.ne.s32.totalorder %s37, %s40
    %p49 = scmp.eq.s32.totalorder %s20, 7
    %p50 = por %p48, %p49
    %p51 = scmp.ne.s32.totalorder %s40, %s41
    %p52 = scmp.eq.s32.totalorder %s20, 0
    %p53 = por %p51, %p52
    %p54 = scmp.ne.s32.totalorder %s40, %s41
    %p55 = scmp.eq.s32.totalorder %s21, 7
    %p56 = por %p54, %p55
    %p58 = scmp.ne.s32.totalorder %s41, %s57
    %p59 = scmp.eq.s32.totalorder %s21, 0
    %p60 = por %p58, %p59
    %s62 = sadd.s32 %s61, 1
    %p65 = scmp.eq.s32.totalorder %s15, 7
    %p66 = scmp.ne.s32.totalorder %s61, %s63
    %p67 = scmp.eq.s32.totalorder %s15, 0
    %p68 = por %p66, %p67
    %p69 = scmp.ne.s32.totalorder %s61, %s63
    %p70 = scmp.eq.s32.totalorder %s20, 7
    %p71 = por %p69, %p70
    %p72 = scmp.ne.s32.totalorder %s63, %s64
    %p73 = scmp.eq.s32.totalorder %s20, 0
    %p74 = por %p72, %p73
    %p75 = scmp.ne.s32.totalorder %s63, %s64
    %p76 = scmp.eq.s32.totalorder %s21, 7
    %p77 = por %p75, %p76
    %p79 = scmp.ne.s32.totalorder %s64, %s78
    %p80 = scmp.eq.s32.totalorder %s21, 0
    %p81 = por %p79, %p80
    %s83 = sadd.s32 %s82, 1
    %p86 = scmp.eq.s32.totalorder %s15, 7
    %p87 = scmp.ne.s32.totalorder %s82, %s84
    %p88 = scmp.eq.s32.totalorder %s15, 0
    %p89 = por %p87, %p88
    %p90 = scmp.ne.s32.totalorder %s82, %s84
    %p91 = scmp.eq.s32.totalorder %s20, 7
    %p92 = por %p90, %p91
    %p93 = scmp.ne.s32.totalorder %s84, %s85
    %p94 = scmp.eq.s32.totalorder %s20, 0
    %p95 = por %p93, %p94
    %p96 = scmp.ne.s32.totalorder %s84, %s85
    %p97 = scmp.eq.s32.totalorder %s21, 7
    %p98 = por %p96, %p97
    %p100 = scmp.ne.s32.totalorder %s85, %s99
    %p101 = scmp.eq.s32.totalorder %s21, 0
    %p102 = por %p100, %p101
    %s104 = sadd.s32 %s103, 1
    %p107 = scmp.eq.s32.totalorder %s15, 7
    %p108 = scmp.ne.s32.totalorder %s103, %s105
    %p109 = scmp.eq.s32.totalorder %s15, 0
    %p110 = por %p108, %p109
    %p111 = scmp.ne.s32.totalorder %s103, %s105
    %p112 = scmp.eq.s32.totalorder %s20, 7
    %p113 = por %p111, %p112
    %p114 = scmp.ne.s32.totalorder %s105, %s106
    %p115 = scmp.eq.s32.totalorder %s20, 0
    %p116 = por %p114, %p115
    %p117 = scmp.ne.s32.totalorder %s105, %s106
    %p118 = scmp.eq.s32.totalorder %s21, 7
    %p119 = por %p117, %p118
    %p121 = scmp.ne.s32.totalorder %s106, %s120
    %p122 = scmp.eq.s32.totalorder %s21, 0
    %p123 = por %p121, %p122
    %s125 = sadd.s32 %s124, 1
    %p128 = scmp.eq.s32.totalorder %s15, 7
    %p129 = scmp.ne.s32.totalorder %s124, %s126
    %p130 = scmp.eq.s32.totalorder %s15, 0
    %p131 = por %p129, %p130
    %p132 = scmp.ne.s32.totalorder %s124, %s126
    %p133 = scmp.eq.s32.totalorder %s20, 7
    %p134 = por %p132, %p133
    %p135 = scmp.ne.s32.totalorder %s126, %s127
    %p136 = scmp.eq.s32.totalorder %s20, 0
    %p137 = por %p135, %p136
    %p138 = scmp.ne.s32.totalorder %s126, %s127
    %p139 = scmp.eq.s32.totalorder %s21, 7
    %p140 = por %p138, %p139
    %p142 = scmp.ne.s32.totalorder %s127, %s141
    %p143 = scmp.eq.s32.totalorder %s21, 0
    %p144 = por %p142, %p143
    %s145 = ssub.s32 %s22, %s34
    %s146 = ssub.s32 %s23, %s30
    %s147 = sor.u32 %s145, %s146
    %p148 = scmp.eq.s32.totalorder %s147, 0
    %s150 = sadd.s32 %s149, 1
    %s151 = scalar_select %p148, %s149, %s150
    %p154 = pneg %p148
    %p155 = scmp.eq.s32.totalorder %s15, 7
    %p156 = por %p154, %p155
    %p157 = scmp.ne.s32.totalorder %s149, %s152
    %p158 = scmp.eq.s32.totalorder %s15, 0
    %p159 = por %p157, %p158
    %p160 = scmp.ne.s32.totalorder %s149, %s152
    %p161 = scmp.eq.s32.totalorder %s20, 7
    %p162 = por %p160, %p161
    %p163 = scmp.ne.s32.totalorder %s152, %s153
    %p164 = scmp.eq.s32.totalorder %s20, 0
    %p165 = por %p163, %p164
    %p166 = scmp.ne.s32.totalorder %s152, %s153
    %p167 = scmp.eq.s32.totalorder %s21, 7
    %p168 = por %p166, %p167
    %p170 = scmp.ne.s32.totalorder %s153, %s169
    %p171 = scmp.eq.s32.totalorder %s21, 0
    %p172 = por %p170, %p171
    %s173 = ssub.s32 %s22, %s34
    %s174 = ssub.s32 %s23, %s30
    %s175 = sor.u32 %s173, %s174
    %p176 = scmp.eq.s32.totalorder %s175, 0
    %s178 = sadd.s32 %s177, 1
    %s179 = scalar_select %p176, %s177, %s178
    %p182 = pneg %p176
    %p183 = scmp.eq.s32.totalorder %s15, 7
    %p184 = por %p182, %p183
    %p185 = scmp.ne.s32.totalorder %s177, %s180
    %p186 = scmp.eq.s32.totalorder %s15, 0
    %p187 = por %p185, %p186
    %p188 = scmp.ne.s32.totalorder %s177, %s180
    %p189 = scmp.eq.s32.totalorder %s20, 7
    %p190 = por %p188, %p189
    %p191 = scmp.ne.s32.totalorder %s180, %s181
    %p192 = scmp.eq.s32.totalorder %s20, 0
    %p193 = por %p191, %p192
    %p194 = scmp.ne.s32.totalorder %s180, %s181
    %p195 = scmp.eq.s32.totalorder %s21, 7
    %p196 = por %p194, %p195
    %p198 = scmp.ne.s32.totalorder %s181, %s197
    %p199 = scmp.eq.s32.totalorder %s21, 0
    %p200 = por %p198, %p199
    %s201 = ssub.s32 %s22, %s34
    %s202 = ssub.s32 %s23, %s30
    %s203 = sor.u32 %s201, %s202
    %p204 = scmp.eq.s32.totalorder %s203, 0
    %s206 = sadd.s32 %s205, 1
    %s207 = scalar_select %p204, %s205, %s206
    %p210 = pneg %p204
    %p211 = scmp.eq.s32.totalorder %s15, 7
    %p212 = por %p210, %p211
    %p213 = scmp.ne.s32.totalorder %s205, %s208
    %p214 = scmp.eq.s32.totalorder %s15, 0
    %p215 = por %p213, %p214
    %p216 = scmp.ne.s32.totalorder %s205, %s208
    %p217 = scmp.eq.s32.totalorder %s20, 7
    %p218 = por %p216, %p217
    %p219 = scmp.ne.s32.totalorder %s208, %s209
    %p220 = scmp.eq.s32.totalorder %s20, 0
    %p221 = por %p219, %p220
    %p222 = scmp.ne.s32.totalorder %s208, %s209
    %p223 = scmp.eq.s32.totalorder %s21, 7
    %p224 = por %p222, %p223
    %p226 = scmp.ne.s32.totalorder %s209, %s225
    %p227 = scmp.eq.s32.totalorder %s21, 0
    %p228 = por %p226, %p227
    %s229 = ssub.s32 %s22, %s34
    %s230 = ssub.s32 %s23, %s30
    %s231 = sor.u32 %s229, %s230
    %p232 = scmp.eq.s32.totalorder %s231, 0
    %s234 = sadd.s32 %s233, 1
    %s235 = scalar_select %p232, %s233, %s234
    %p238 = pneg %p232
    %p239 = scmp.eq.s32.totalorder %s15, 7
    %p240 = por %p238, %p239
    %p241 = scmp.ne.s32.totalorder %s233, %s236
    %p242 = scmp.eq.s32.totalorder %s15, 0
    %p243 = por %p241, %p242
    %p244 = scmp.ne.s32.totalorder %s233, %s236
    %p245 = scmp.eq.s32.totalorder %s20, 7
    %p246 = por %p244, %p245
    %p247 = scmp.ne.s32.totalorder %s236, %s237
    %p248 = scmp.eq.s32.totalorder %s20, 0
    %p249 = por %p247, %p248
    %p250 = scmp.ne.s32.totalorder %s236, %s237
    %p251 = scmp.eq.s32.totalorder %s21, 7
    %p252 = por %p250, %p251
    %p254 = scmp.ne.s32.totalorder %s237, %s253
    %p255 = scmp.eq.s32.totalorder %s21, 0
    %p256 = por %p254, %p255
    %p257 = scmp.le.s32.totalorder 1, %s15
    %p258 = scmp.lt.s32.totalorder %s15, 9
    %p259 = pnand %p257, %p258
    %p260 = pneg %p259
    // Predicated region
    $region9: #{encoder_layer_forward.2} parent=5 // pred_check
      _
    $region10: #{encoder_layer_forward.2} parent=5 // pred_check_branch
      %262 = sbr.rel (%p259) target = $region12
    $region11: #{encoder_layer_forward.2} parent=5 // pred_region
      %s263 = ssub.s32 %s15, 1
      // Predicated region
      $region13: #{encoder_layer_forward.2} parent=11 // pred_check
        %p264 = pneg %p74
      $region14: #{encoder_layer_forward.2} parent=11 // pred_check_branch
        %266 = sbr.rel (%p264) target = $region16
      $region15: #{encoder_layer_forward.2} parent=11 // pred_region
        _
      $region16: #{encoder_layer_forward.2} parent=11 // pred_fallthru
        _
      // Predicated region
      $region17: #{encoder_layer_forward.2} parent=11 // pred_check
        %p267 = pneg %p95
      $region18: #{encoder_layer_forward.2} parent=11 // pred_check_branch
        %269 = sbr.rel (%p267) target = $region20
      $region19: #{encoder_layer_forward.2} parent=11 // pred_region
        _
      $region20: #{encoder_layer_forward.2} parent=11 // pred_fallthru
        _
      // Predicated region
      $region21: #{encoder_layer_forward.2} parent=11 // pred_check
        %p270 = pneg %p116
      $region22: #{encoder_layer_forward.2} parent=11 // pred_check_branch
        %272 = sbr.rel (%p270) target = $region24
      $region23: #{encoder_layer_forward.2} parent=11 // pred_region
        _
      $region24: #{encoder_layer_forward.2} parent=11 // pred_fallthru
        _
      // Predicated region
      $region25: #{encoder_layer_forward.2} parent=11 // pred_check
        %p273 = pneg %p137
      $region26: #{encoder_layer_forward.2} parent=11 // pred_check_branch
        %275 = sbr.rel (%p273) target = $region28
      $region27: #{encoder_layer_forward.2} parent=11 // pred_region
        _
      $region28: #{encoder_layer_forward.2} parent=11 // pred_fallthru
        _
    $region12: #{encoder_layer_forward.2} parent=5 // pred_fallthru
      _
    %p276 = scmp.lt.s32.totalorder %s15, 8
    // Predicated region
    $region29: #{encoder_layer_forward.2} parent=5 // pred_check
      %p277 = pneg %p276
    $region30: #{encoder_layer_forward.2} parent=5 // pred_check_branch
      %279 = sbr.rel (%p277) target = $region32
    $region31: #{encoder_layer_forward.2} parent=5 // pred_region
      // Predicated region
      $region33: #{encoder_layer_forward.2} parent=31 // pred_check
        %p280 = pneg %p47
      $region34: #{encoder_layer_forward.2} parent=31 // pred_check_branch
        %282 = sbr.rel (%p280) target = $region36
      $region35: #{encoder_layer_forward.2} parent=31 // pred_region
        %p283 = scmp.lt.s32.totalorder %s22, 1
        %s284 = scalar_select %p283, %s22, 1
        %s285 = smul.addr %s284, 16
        %s286 = smul.addr %s285, 8
        %s287 = scalar_lea.vmem %s0, %s286
      $region36: #{encoder_layer_forward.2} parent=31 // pred_fallthru
        _
    $region32: #{encoder_layer_forward.2} parent=5 // pred_fallthru
      _
    %p288 = scmp.le.s32.totalorder 1, %s15
    %p289 = scmp.lt.s32.totalorder %s15, 9
    %p290 = pnand %p288, %p289
    %p291 = pneg %p290
    // Predicated region
    $region37: #{encoder_layer_forward.2} parent=5 // pred_check
      _
    $region38: #{encoder_layer_forward.2} parent=5 // pred_check_branch
      %293 = sbr.rel (%p290) target = $region40
    $region39: #{encoder_layer_forward.2} parent=5 // pred_region
      %s294 = ssub.s32 %s15, 1
      %p295 = scmp.lt.s32.totalorder %s24, 1
      %s296 = scalar_select %p295, %s24, 1
      %s297 = smul.addr %s296, 16
      %s298 = smul.addr %s297, 8
      %s299 = scalar_lea.vmem %s0, %s298
      %p300 = pneg %p53
      %p301 = pneg %p50
      %p302 = pneg %p74
      %p303 = pneg %p71
      %p304 = pneg %p95
      %p305 = pneg %p92
      %p306 = pneg %p116
      %p307 = pneg %p113
      %p308 = pneg %p137
      %p309 = pneg %p134
      %p310 = pneg %p165
      %p311 = pneg %p162
      %p312 = scmp.lt.s32.totalorder %s24, 1
      %s313 = scalar_select %p312, %s24, 1
      %p314 = scmp.lt.s32.totalorder %s25, 3
      %s315 = scalar_select %p314, %s25, 3
      %s316 = smul.addr %s315, 16
      %s317 = smul.addr %s313, 64
      %s318 = sadd.s32 %s316, %s317
      %s319 = smul.addr %s318, 8
      %s320 = scalar_lea.vmem %s5, %s319
      %p321 = pneg %p193
      %p322 = pneg %p190
      %p323 = scmp.lt.s32.totalorder %s24, 1
      %s324 = scalar_select %p323, %s24, 1
      %p325 = scmp.lt.s32.totalorder %s25, 3
      %s326 = scalar_select %p325, %s25, 3
      %s327 = smul.addr %s326, 16
      %s328 = smul.addr %s324, 64
      %s329 = sadd.s32 %s327, %s328
      %s330 = smul.addr %s329, 8
      %s331 = scalar_lea.vmem %s6, %s330
      %p332 = pneg %p221
      %p333 = pneg %p218
      %p334 = scmp.lt.s32.totalorder %s24, 1
      %s335 = scalar_select %p334, %s24, 1
      %p336 = scmp.lt.s32.totalorder %s25, 3
      %s337 = scalar_select %p336, %s25, 3
      %s338 = smul.addr %s337, 16
      %s339 = smul.addr %s335, 64
      %s340 = sadd.s32 %s338, %s339
      %s341 = smul.addr %s340, 8
      %s342 = scalar_lea.vmem %s7, %s341
      %p343 = pneg %p249
      %p344 = pneg %p246
      %p345 = scmp.lt.s32.totalorder %s24, 1
      %s346 = scalar_select %p345, %s24, 1
      %p347 = scmp.lt.s32.totalorder %s25, 3
      %s348 = scalar_select %p347, %s25, 3
      %s349 = smul.addr %s348, 16
      %s350 = smul.addr %s346, 64
      %s351 = sadd.s32 %s349, %s350
      %s352 = smul.addr %s351, 4
      %s353 = scalar_lea.vmem %s8, %s352
      %p354 = scmp.lt.s32.totalorder %s24, 1
      %s355 = scalar_select %p354, %s24, 1
      %s356 = smul.addr %s355, 16
      %s357 = smul.addr %s356, 8
      %s358 = scalar_lea.vmem %s0, %s357
      %p359 = scmp.lt.s32.totalorder %s24, 1
      %s360 = scalar_select %p359, %s24, 1
      %p361 = scmp.lt.s32.totalorder %s25, 3
      %s362 = scalar_select %p361, %s25, 3
      %s363 = smul.addr %s362, 16
      %s364 = smul.addr %s360, 64
      %s365 = sadd.s32 %s363, %s364
      %s366 = smul.addr %s365, 8
      %s367 = scalar_lea.vmem %s5, %s366
      %p368 = scmp.lt.s32.totalorder %s24, 1
      %s369 = scalar_select %p368, %s24, 1
      %p370 = scmp.lt.s32.totalorder %s25, 3
      %s371 = scalar_select %p370, %s25, 3
      %s372 = smul.addr %s371, 16
      %s373 = smul.addr %s369, 64
      %s374 = sadd.s32 %s372, %s373
      %s375 = smul.addr %s374, 8
      %s376 = scalar_lea.vmem %s6, %s375
      %p377 = scmp.lt.s32.totalorder %s24, 1
      %s378 = scalar_select %p377, %s24, 1
      %p379 = scmp.lt.s32.totalorder %s25, 3
      %s380 = scalar_select %p379, %s25, 3
      %s381 = smul.addr %s380, 16
      %s382 = smul.addr %s378, 64
      %s383 = sadd.s32 %s381, %s382
      %s384 = smul.addr %s383, 8
      %s385 = scalar_lea.vmem %s7, %s384
      %p386 = scmp.lt.s32.totalorder %s24, 1
      %s387 = scalar_select %p386, %s24, 1
      %p388 = scmp.lt.s32.totalorder %s25, 3
      %s389 = scalar_select %p388, %s25, 3
      %s390 = smul.addr %s389, 16
      %s391 = smul.addr %s387, 64
      %s392 = sadd.s32 %s390, %s391
      %s393 = smul.addr %s392, 4
      %s394 = scalar_lea.vmem %s8, %s393
      %v396 = vld [vmem:[%s358] sm:$0xff]
      %v397 = vld [vmem:[%s358 + $0x8] sm:$0xff]
      %v398 = vld [vmem:[%s358 + $0x10] sm:$0xff]
      %v399 = vld [vmem:[%s358 + $0x18] sm:$0xff]
      %v400 = vld [vmem:[%s358 + $0x20] sm:$0xff]
      %v401 = vld [vmem:[%s358 + $0x28] sm:$0xff]
      %v402 = vld [vmem:[%s358 + $0x30] sm:$0xff]
      %v403 = vld [vmem:[%s358 + $0x38] sm:$0xff]
      %v404 = vld [vmem:[%s358 + $0x40] sm:$0xff]
      %v405 = vld [vmem:[%s358 + $0x48] sm:$0xff]
      %v406 = vld [vmem:[%s358 + $0x50] sm:$0xff]
      %v407 = vld [vmem:[%s358 + $0x58] sm:$0xff]
      %v408 = vld [vmem:[%s358 + $0x60] sm:$0xff]
      %v409 = vld [vmem:[%s358 + $0x68] sm:$0xff]
      %v410 = vld [vmem:[%s358 + $0x70] sm:$0xff]
      %v411 = vld [vmem:[%s358 + $0x78] sm:$0xff]
      %v412 = vpack.c.bf16 %v397, %v396
      %v413 = vpack.c.bf16 %v399, %v398
      %v414 = vpack.c.bf16 %v401, %v400
      %v415 = vpack.c.bf16 %v403, %v402
      %v416 = vpack.c.bf16 %v405, %v404
      %v417 = vpack.c.bf16 %v407, %v406
      %v418 = vpack.c.bf16 %v409, %v408
      %v419 = vpack.c.bf16 %v411, %v410
      %s420 = smul.u32 %s25, 4
      %s421 = smul.addr %s420, 4
      %s422 = scalar_lea.vmem %s1, %s421
      %v423 = vld [vmem:[%s422] sm:$0xf]
      %v424 = vld [vmem:[%s422 + $0x4] sm:$0xf]
      %v425 = vld [vmem:[%s422 + $0x8] sm:$0xf]
      %v426 = vld [vmem:[%s422 + $0xc] sm:$0xf]
      %s427 = scalar_lea.vmem %s2, %s25
      %v428 = vld [vmem:[%s427] sm:$0x1]
      %v430 = vperm.slane %v428, 0
      %v436 = vunpack.c.l.b16 %v423
      %v437 = vunpack.c.l.b16 %v424
      %v438 = vunpack.c.l.b16 %v425
      %v439 = vunpack.c.l.b16 %v426
      %v440 = vpack.c.b16 %v437, %v436
      %v441 = vpack.c.b16 %v439, %v438
      %vm444 = vcmask 261120
      %v446 = vsel %vm444, %v412, 0
      %v449 = vsel %vm444, %v413, 0
      %v452 = vsel %vm444, %v414, 0
      %v455 = vsel %vm444, %v415, 0
      %v458 = vsel %vm444, %v416, 0
      %v461 = vsel %vm444, %v417, 0
      %v464 = vsel %vm444, %v418, 0
      %v467 = vsel %vm444, %v419, 0
      %469 = vmatpush.bf16.msra.mxu0 0
      %470 = vmatpush.bf16.msra.mxu0 0
      %471 = vmatpush.bf16.msra.mxu0 0
      %472 = vmatpush.bf16.msra.mxu0 0
      %473 = vmatpush.bf16.msra.mxu0 0
      %474 = vmatpush.bf16.msra.mxu0 0
      %475 = vmatpush.bf16.msra.mxu0 %v441
      %476 = vmatpush.bf16.msra.mxu0 %v440
      %477 = vmatmul.bf16.gmra.mxu0 %v446
      %v478 = vpop.f32.mrf.mxu0
      %v479 = vadd.f32 %v430, %v478
      %v480 = vpop.f32.mrf.mxu0
      %v481 = vadd.f32 %v430, %v480
      %482 = vmatmul.bf16.gmra.mxu0 %v449
      %v483 = vpop.f32.mrf.mxu0
      %v484 = vadd.f32 %v430, %v483
      %v485 = vpop.f32.mrf.mxu0
      %v486 = vadd.f32 %v430, %v485
      %487 = vmatmul.bf16.gmra.mxu0 %v452
      %v488 = vpop.f32.mrf.mxu0
      %v489 = vadd.f32 %v430, %v488
      %v490 = vpop.f32.mrf.mxu0
      %v491 = vadd.f32 %v430, %v490
      %492 = vmatmul.bf16.gmra.mxu0 %v455
      %v493 = vpop.f32.mrf.mxu0
      %v494 = vadd.f32 %v430, %v493
      %v495 = vpop.f32.mrf.mxu0
      %v496 = vadd.f32 %v430, %v495
      %497 = vmatmul.bf16.gmra.mxu0 %v458
      %v498 = vpop.f32.mrf.mxu0
      %v499 = vadd.f32 %v430, %v498
      %v500 = vpop.f32.mrf.mxu0
      %v501 = vadd.f32 %v430, %v500
      %502 = vmatmul.bf16.gmra.mxu0 %v461
      %v503 = vpop.f32.mrf.mxu0
      %v504 = vadd.f32 %v430, %v503
      %v505 = vpop.f32.mrf.mxu0
      %v506 = vadd.f32 %v430, %v505
      %507 = vmatmul.bf16.gmra.mxu0 %v464
      %v508 = vpop.f32.mrf.mxu0
      %v509 = vadd.f32 %v430, %v508
      %v510 = vpop.f32.mrf.mxu0
      %v511 = vadd.f32 %v430, %v510
      %512 = vmatmul.bf16.gmra.mxu0 %v467
      %v513 = vpop.f32.mrf.mxu0
      %v514 = vadd.f32 %v430, %v513
      %v515 = vpop.f32.mrf.mxu0
      %v516 = vadd.f32 %v430, %v515
      %517 = vdwg.mxu0
      %v518 = vpack.c.bf16 %v481, %v479
      %v519 = vpack.c.bf16 %v486, %v484
      %v520 = vpack.c.bf16 %v491, %v489
      %v521 = vpack.c.bf16 %v496, %v494
      %v522 = vpack.c.bf16 %v501, %v499
      %v523 = vpack.c.bf16 %v506, %v504
      %v524 = vpack.c.bf16 %v511, %v509
      %v525 = vpack.c.bf16 %v516, %v514
      %534 = vrot.lane.b32.xlu0 %v518, 120
      %v535 = vpop.permute.xlu0 %534
      %536 = vrot.lane.b32.xlu0 %v519, 120
      %v537 = vpop.permute.xlu0 %536
      %538 = vrot.lane.b32.xlu0 %v520, 120
      %v539 = vpop.permute.xlu0 %538
      %540 = vrot.lane.b32.xlu0 %v521, 120
      %v541 = vpop.permute.xlu0 %540
      %542 = vrot.lane.b32.xlu0 %v522, 120
      %v543 = vpop.permute.xlu0 %542
      %544 = vrot.lane.b32.xlu0 %v523, 120
      %v545 = vpop.permute.xlu0 %544
      %546 = vrot.lane.b32.xlu0 %v524, 120
      %v547 = vpop.permute.xlu0 %546
      %548 = vrot.lane.b32.xlu0 %v525, 120
      %v549 = vpop.permute.xlu0 %548
      %vm550 = vcmask 64512
      %v552 = vsel %vm550, %v518, 0
      %v555 = vsel %vm550, %v519, 0
      %v558 = vsel %vm550, %v520, 0
      %v561 = vsel %vm550, %v521, 0
      %v564 = vsel %vm550, %v522, 0
      %v567 = vsel %vm550, %v523, 0
      %v570 = vsel %vm550, %v524, 0
      %v573 = vsel %vm550, %v525, 0
      %v576 = vsel %vm550, %v535, 0
      %v579 = vsel %vm550, %v537, 0
      %v582 = vsel %vm550, %v539, 0
      %v585 = vsel %vm550, %v541, 0
      %v588 = vsel %vm550, %v543, 0
      %v591 = vsel %vm550, %v545, 0
      %v594 = vsel %vm550, %v547, 0
      %v597 = vsel %vm550, %v549, 0
      %599 = vmatpush.bf16.xpose.msra.mxu0 %v597
      %600 = vmatpush.bf16.xpose.msra.mxu0 %v594
      %601 = vmatpush.bf16.xpose.msra.mxu0 %v591
      %602 = vmatpush.bf16.xpose.msra.mxu0 %v588
      %603 = vmatpush.bf16.xpose.msra.mxu0 %v585
      %604 = vmatpush.bf16.xpose.msra.mxu0 %v582
      %605 = vmatpush.bf16.xpose.msra.mxu0 %v579
      %606 = vmatpush.bf16.xpose.msra.mxu0 %v576
      %607 = vmatmul.bf16.gmra.mxu0 %v552
      %v608 = vpop.f32.mrf.mxu0
      %v609 = vadd.f32 0.0, %v608
      %v610 = vpop.f32.mrf.mxu0
      %v611 = vadd.f32 0.0, %v610
      %612 = vmatmul.bf16.gmra.mxu0 %v555
      %v613 = vpop.f32.mrf.mxu0
      %v614 = vadd.f32 0.0, %v613
      %v615 = vpop.f32.mrf.mxu0
      %v616 = vadd.f32 0.0, %v615
      %617 = vmatmul.bf16.gmra.mxu0 %v558
      %v618 = vpop.f32.mrf.mxu0
      %v619 = vadd.f32 0.0, %v618
      %v620 = vpop.f32.mrf.mxu0
      %v621 = vadd.f32 0.0, %v620
      %622 = vmatmul.bf16.gmra.mxu0 %v561
      %v623 = vpop.f32.mrf.mxu0
      %v624 = vadd.f32 0.0, %v623
      %v625 = vpop.f32.mrf.mxu0
      %v626 = vadd.f32 0.0, %v625
      %627 = vmatmul.bf16.gmra.mxu0 %v564
      %v628 = vpop.f32.mrf.mxu0
      %v629 = vadd.f32 0.0, %v628
      %v630 = vpop.f32.mrf.mxu0
      %v631 = vadd.f32 0.0, %v630
      %632 = vmatmul.bf16.gmra.mxu0 %v567
      %v633 = vpop.f32.mrf.mxu0
      %v634 = vadd.f32 0.0, %v633
      %v635 = vpop.f32.mrf.mxu0
      %v636 = vadd.f32 0.0, %v635
      %637 = vmatmul.bf16.gmra.mxu0 %v570
      %v638 = vpop.f32.mrf.mxu0
      %v639 = vadd.f32 0.0, %v638
      %v640 = vpop.f32.mrf.mxu0
      %v641 = vadd.f32 0.0, %v640
      %642 = vmatmul.bf16.gmra.mxu0 %v573
      %v643 = vpop.f32.mrf.mxu0
      %v644 = vadd.f32 0.0, %v643
      %v645 = vpop.f32.mrf.mxu0
      %v646 = vadd.f32 0.0, %v645
      %647 = vdwg.mxu0
      %v648 = vmul.f32 %v609, 0.35355338
      %v649 = vmul.f32 %v611, 0.35355338
      %v650 = vmul.f32 %v614, 0.35355338
      %v651 = vmul.f32 %v616, 0.35355338
      %v652 = vmul.f32 %v619, 0.35355338
      %v653 = vmul.f32 %v621, 0.35355338
      %v654 = vmul.f32 %v624, 0.35355338
      %v655 = vmul.f32 %v626, 0.35355338
      %v656 = vmul.f32 %v629, 0.35355338
      %v657 = vmul.f32 %v631, 0.35355338
      %v658 = vmul.f32 %v634, 0.35355338
      %v659 = vmul.f32 %v636, 0.35355338
      %v660 = vmul.f32 %v639, 0.35355338
      %v661 = vmul.f32 %v641, 0.35355338
      %v662 = vmul.f32 %v644, 0.35355338
      %v663 = vmul.f32 %v646, 0.35355338
      %v664 = vlaneseq
      %v665 = vand.u32 %v664, 127
      %vm666 = vcmp.lt.s32.totalorder %v665, 100
      %v667 = vsel %vm666, %v648, -1e+30
      %v668 = vsel %vm666, %v649, -1e+30
      %v669 = vsel %vm666, %v650, -1e+30
      %v670 = vsel %vm666, %v651, -1e+30
      %v671 = vsel %vm666, %v652, -1e+30
      %v672 = vsel %vm666, %v653, -1e+30
      %v673 = vsel %vm666, %v654, -1e+30
      %v674 = vsel %vm666, %v655, -1e+30
      %v675 = vsel %vm666, %v656, -1e+30
      %v676 = vsel %vm666, %v657, -1e+30
      %v677 = vsel %vm666, %v658, -1e+30
      %v678 = vsel %vm666, %v659, -1e+30
      %v679 = vsel %vm666, %v660, -1e+30
      %v680 = vsel %vm666, %v661, -1e+30
      %v681 = vsel %vm666, %v662, -1e+30
      %v682 = vsel %vm666, %v663, -1e+30
      %683 = vmax.xlane.f32.xlu0 %v667
      %v684 = vpop.xlane.xlu0 %683
      %685 = vmax.xlane.f32.xlu0 %v668
      %v686 = vpop.xlane.xlu0 %685
      %687 = vmax.xlane.f32.xlu0 %v669
      %v688 = vpop.xlane.xlu0 %687
      %689 = vmax.xlane.f32.xlu0 %v670
      %v690 = vpop.xlane.xlu0 %689
      %691 = vmax.xlane.f32.xlu0 %v671
      %v692 = vpop.xlane.xlu0 %691
      %693 = vmax.xlane.f32.xlu0 %v672
      %v694 = vpop.xlane.xlu0 %693
      %695 = vmax.xlane.f32.xlu0 %v673
      %v696 = vpop.xlane.xlu0 %695
      %697 = vmax.xlane.f32.xlu0 %v674
      %v698 = vpop.xlane.xlu0 %697
      %699 = vmax.xlane.f32.xlu0 %v675
      %v700 = vpop.xlane.xlu0 %699
      %701 = vmax.xlane.f32.xlu0 %v676
      %v702 = vpop.xlane.xlu0 %701
      %703 = vmax.xlane.f32.xlu0 %v677
      %v704 = vpop.xlane.xlu0 %703
      %705 = vmax.xlane.f32.xlu0 %v678
      %v706 = vpop.xlane.xlu0 %705
      %707 = vmax.xlane.f32.xlu0 %v679
      %v708 = vpop.xlane.xlu0 %707
      %709 = vmax.xlane.f32.xlu0 %v680
      %v710 = vpop.xlane.xlu0 %709
      %711 = vmax.xlane.f32.xlu0 %v681
      %v712 = vpop.xlane.xlu0 %711
      %713 = vmax.xlane.f32.xlu0 %v682
      %v714 = vpop.xlane.xlu0 %713
      %v715 = vsub.f32 %v667, %v684
      %v716 = vsub.f32 %v668, %v686
      %v717 = vsub.f32 %v669, %v688
      %v718 = vsub.f32 %v670, %v690
      %v719 = vsub.f32 %v671, %v692
      %v720 = vsub.f32 %v672, %v694
      %v721 = vsub.f32 %v673, %v696
      %v722 = vsub.f32 %v674, %v698
      %v723 = vsub.f32 %v675, %v700
      %v724 = vsub.f32 %v676, %v702
      %v725 = vsub.f32 %v677, %v704
      %v726 = vsub.f32 %v678, %v706
      %v727 = vsub.f32 %v679, %v708
      %v728 = vsub.f32 %v680, %v710
      %v729 = vsub.f32 %v681, %v712
      %v730 = vsub.f32 %v682, %v714
      %v731 = vmul.f32 %v715, 1.442695
      %v732 = vpow.pop %v731
      %v733 = vmul.f32 %v716, 1.442695
      %v734 = vpow.pop %v733
      %v735 = vmul.f32 %v717, 1.442695
      %v736 = vpow.pop %v735
      %v737 = vmul.f32 %v718, 1.442695
      %v738 = vpow.pop %v737
      %v739 = vmul.f32 %v719, 1.442695
      %v740 = vpow.pop %v739
      %v741 = vmul.f32 %v720, 1.442695
      %v742 = vpow.pop %v741
      %v743 = vmul.f32 %v721, 1.442695
      %v744 = vpow.pop %v743
      %v745 = vmul.f32 %v722, 1.442695
      %v746 = vpow.pop %v745
      %v747 = vmul.f32 %v723, 1.442695
      %v748 = vpow.pop %v747
      %v749 = vmul.f32 %v724, 1.442695
      %v750 = vpow.pop %v749
      %v751 = vmul.f32 %v725, 1.442695
      %v752 = vpow.pop %v751
      %v753 = vmul.f32 %v726, 1.442695
      %v754 = vpow.pop %v753
      %v755 = vmul.f32 %v727, 1.442695
      %v756 = vpow.pop %v755
      %v757 = vmul.f32 %v728, 1.442695
      %v758 = vpow.pop %v757
      %v759 = vmul.f32 %v729, 1.442695
      %v760 = vpow.pop %v759
      %v761 = vmul.f32 %v730, 1.442695
      %v762 = vpow.pop %v761
      %763 = vadd.xlane.f32.xlu0 %v732
      %v764 = vpop.xlane.xlu0 %763
      %765 = vadd.xlane.f32.xlu0 %v734
      %v766 = vpop.xlane.xlu0 %765
      %767 = vadd.xlane.f32.xlu0 %v736
      %v768 = vpop.xlane.xlu0 %767
      %769 = vadd.xlane.f32.xlu0 %v738
      %v770 = vpop.xlane.xlu0 %769
      %771 = vadd.xlane.f32.xlu0 %v740
      %v772 = vpop.xlane.xlu0 %771
      %773 = vadd.xlane.f32.xlu0 %v742
      %v774 = vpop.xlane.xlu0 %773
      %775 = vadd.xlane.f32.xlu0 %v744
      %v776 = vpop.xlane.xlu0 %775
      %777 = vadd.xlane.f32.xlu0 %v746
      %v778 = vpop.xlane.xlu0 %777
      %779 = vadd.xlane.f32.xlu0 %v748
      %v780 = vpop.xlane.xlu0 %779
      %781 = vadd.xlane.f32.xlu0 %v750
      %v782 = vpop.xlane.xlu0 %781
      %783 = vadd.xlane.f32.xlu0 %v752
      %v784 = vpop.xlane.xlu0 %783
      %785 = vadd.xlane.f32.xlu0 %v754
      %v786 = vpop.xlane.xlu0 %785
      %787 = vadd.xlane.f32.xlu0 %v756
      %v788 = vpop.xlane.xlu0 %787
      %789 = vadd.xlane.f32.xlu0 %v758
      %v790 = vpop.xlane.xlu0 %789
      %791 = vadd.xlane.f32.xlu0 %v760
      %v792 = vpop.xlane.xlu0 %791
      %793 = vadd.xlane.f32.xlu0 %v762
      %v794 = vpop.xlane.xlu0 %793
      %v795 = vrcp.pop %v764
      %v796 = vrcp.pop %v766
      %v797 = vrcp.pop %v768
      %v798 = vrcp.pop %v770
      %v799 = vrcp.pop %v772
      %v800 = vrcp.pop %v774
      %v801 = vrcp.pop %v776
      %v802 = vrcp.pop %v778
      %v803 = vrcp.pop %v780
      %v804 = vrcp.pop %v782
      %v805 = vrcp.pop %v784
      %v806 = vrcp.pop %v786
      %v807 = vrcp.pop %v788
      %v808 = vrcp.pop %v790
      %v809 = vrcp.pop %v792
      %v810 = vrcp.pop %v794
      %v811 = vmul.f32 %v732, %v795
      %v812 = vmul.f32 %v734, %v796
      %v813 = vmul.f32 %v736, %v797
      %v814 = vmul.f32 %v738, %v798
      %v815 = vmul.f32 %v740, %v799
      %v816 = vmul.f32 %v742, %v800
      %v817 = vmul.f32 %v744, %v801
      %v818 = vmul.f32 %v746, %v802
      %v819 = vmul.f32 %v748, %v803
      %v820 = vmul.f32 %v750, %v804
      %v821 = vmul.f32 %v752, %v805
      %v822 = vmul.f32 %v754, %v806
      %v823 = vmul.f32 %v756, %v807
      %v824 = vmul.f32 %v758, %v808
      %v825 = vmul.f32 %v760, %v809
      %v826 = vmul.f32 %v762, %v810
      %s827 = scalar_lea.vmem %s3, %s25
      %v828 = vld [vmem:[%s827] sm:$0x1]
      %v830 = vperm.slane %v828, 0
      %v832 = vmul.f32 %v396, %v830
      %v833 = vmul.f32 %v397, %v830
      %v834 = vmul.f32 %v398, %v830
      %v835 = vmul.f32 %v399, %v830
      %v836 = vmul.f32 %v400, %v830
      %v837 = vmul.f32 %v401, %v830
      %v838 = vmul.f32 %v402, %v830
      %v839 = vmul.f32 %v403, %v830
      %v840 = vmul.f32 %v404, %v830
      %v841 = vmul.f32 %v405, %v830
      %v842 = vmul.f32 %v406, %v830
      %v843 = vmul.f32 %v407, %v830
      %v844 = vmul.f32 %v408, %v830
      %v845 = vmul.f32 %v409, %v830
      %v846 = vmul.f32 %v410, %v830
      %v847 = vmul.f32 %v411, %v830
      %v848 = vsel %vm444, %v832, 0.0
      %849 = vadd.xlane.f32.xlu0 %v848
      %v850 = vpop.xlane.xlu0 %849
      %v851 = vsel %vm444, %v833, 0.0
      %852 = vadd.xlane.f32.xlu0 %v851
      %v853 = vpop.xlane.xlu0 %852
      %v854 = vsel %vm444, %v834, 0.0
      %855 = vadd.xlane.f32.xlu0 %v854
      %v856 = vpop.xlane.xlu0 %855
      %v857 = vsel %vm444, %v835, 0.0
      %858 = vadd.xlane.f32.xlu0 %v857
      %v859 = vpop.xlane.xlu0 %858
      %v860 = vsel %vm444, %v836, 0.0
      %861 = vadd.xlane.f32.xlu0 %v860
      %v862 = vpop.xlane.xlu0 %861
      %v863 = vsel %vm444, %v837, 0.0
      %864 = vadd.xlane.f32.xlu0 %v863
      %v865 = vpop.xlane.xlu0 %864
      %v866 = vsel %vm444, %v838, 0.0
      %867 = vadd.xlane.f32.xlu0 %v866
      %v868 = vpop.xlane.xlu0 %867
      %v869 = vsel %vm444, %v839, 0.0
      %870 = vadd.xlane.f32.xlu0 %v869
      %v871 = vpop.xlane.xlu0 %870
      %v872 = vsel %vm444, %v840, 0.0
      %873 = vadd.xlane.f32.xlu0 %v872
      %v874 = vpop.xlane.xlu0 %873
      %v875 = vsel %vm444, %v841, 0.0
      %876 = vadd.xlane.f32.xlu0 %v875
      %v877 = vpop.xlane.xlu0 %876
      %v878 = vsel %vm444, %v842, 0.0
      %879 = vadd.xlane.f32.xlu0 %v878
      %v880 = vpop.xlane.xlu0 %879
      %v881 = vsel %vm444, %v843, 0.0
      %882 = vadd.xlane.f32.xlu0 %v881
      %v883 = vpop.xlane.xlu0 %882
      %v884 = vsel %vm444, %v844, 0.0
      %885 = vadd.xlane.f32.xlu0 %v884
      %v886 = vpop.xlane.xlu0 %885
      %v887 = vsel %vm444, %v845, 0.0
      %888 = vadd.xlane.f32.xlu0 %v887
      %v889 = vpop.xlane.xlu0 %888
      %v890 = vsel %vm444, %v846, 0.0
      %891 = vadd.xlane.f32.xlu0 %v890
      %v892 = vpop.xlane.xlu0 %891
      %v893 = vsel %vm444, %v847, 0.0
      %894 = vadd.xlane.f32.xlu0 %v893
      %v895 = vpop.xlane.xlu0 %894
      %s896 = scalar_lea.vmem %s4, %s25
      %v897 = vld [vmem:[%s896] sm:$0x1]
      %v899 = vperm.slane %v897, 0
      %v901 = vadd.f32 %v850, %v899
      %v902 = vadd.f32 %v853, %v899
      %v903 = vadd.f32 %v856, %v899
      %v904 = vadd.f32 %v859, %v899
      %v905 = vadd.f32 %v862, %v899
      %v906 = vadd.f32 %v865, %v899
      %v907 = vadd.f32 %v868, %v899
      %v908 = vadd.f32 %v871, %v899
      %v909 = vadd.f32 %v874, %v899
      %v910 = vadd.f32 %v877, %v899
      %v911 = vadd.f32 %v880, %v899
      %v912 = vadd.f32 %v883, %v899
      %v913 = vadd.f32 %v886, %v899
      %v914 = vadd.f32 %v889, %v899
      %v915 = vadd.f32 %v892, %v899
      %v916 = vadd.f32 %v895, %v899
      %v917 = vmul.f32 %v901, -5.0
      %v918 = vmul.f32 %v902, -5.0
      %v919 = vmul.f32 %v903, -5.0
      %v920 = vmul.f32 %v904, -5.0
      %v921 = vmul.f32 %v905, -5.0
      %v922 = vmul.f32 %v906, -5.0
      %v923 = vmul.f32 %v907, -5.0
      %v924 = vmul.f32 %v908, -5.0
      %v925 = vmul.f32 %v909, -5.0
      %v926 = vmul.f32 %v910, -5.0
      %v927 = vmul.f32 %v911, -5.0
      %v928 = vmul.f32 %v912, -5.0
      %v929 = vmul.f32 %v913, -5.0
      %v930 = vmul.f32 %v914, -5.0
      %v931 = vmul.f32 %v915, -5.0
      %v932 = vmul.f32 %v916, -5.0
      %v933 = vmul.f32 %v917, 1.442695
      %v934 = vpow.pop %v933
      %v935 = vmul.f32 %v918, 1.442695
      %v936 = vpow.pop %v935
      %v937 = vmul.f32 %v919, 1.442695
      %v938 = vpow.pop %v937
      %v939 = vmul.f32 %v920, 1.442695
      %v940 = vpow.pop %v939
      %v941 = vmul.f32 %v921, 1.442695
      %v942 = vpow.pop %v941
      %v943 = vmul.f32 %v922, 1.442695
      %v944 = vpow.pop %v943
      %v945 = vmul.f32 %v923, 1.442695
      %v946 = vpow.pop %v945
      %v947 = vmul.f32 %v924, 1.442695
      %v948 = vpow.pop %v947
      %v949 = vmul.f32 %v925, 1.442695
      %v950 = vpow.pop %v949
      %v951 = vmul.f32 %v926, 1.442695
      %v952 = vpow.pop %v951
      %v953 = vmul.f32 %v927, 1.442695
      %v954 = vpow.pop %v953
      %v955 = vmul.f32 %v928, 1.442695
      %v956 = vpow.pop %v955
      %v957 = vmul.f32 %v929, 1.442695
      %v958 = vpow.pop %v957
      %v959 = vmul.f32 %v930, 1.442695
      %v960 = vpow.pop %v959
      %v961 = vmul.f32 %v931, 1.442695
      %v962 = vpow.pop %v961
      %v963 = vmul.f32 %v932, 1.442695
      %v964 = vpow.pop %v963
      %v965 = vadd.f32 %v934, 1.0
      %v966 = vadd.f32 %v936, 1.0
      %v967 = vadd.f32 %v938, 1.0
      %v968 = vadd.f32 %v940, 1.0
      %v969 = vadd.f32 %v942, 1.0
      %v970 = vadd.f32 %v944, 1.0
      %v971 = vadd.f32 %v946, 1.0
      %v972 = vadd.f32 %v948, 1.0
      %v973 = vadd.f32 %v950, 1.0
      %v974 = vadd.f32 %v952, 1.0
      %v975 = vadd.f32 %v954, 1.0
      %v976 = vadd.f32 %v956, 1.0
      %v977 = vadd.f32 %v958, 1.0
      %v978 = vadd.f32 %v960, 1.0
      %v979 = vadd.f32 %v962, 1.0
      %v980 = vadd.f32 %v964, 1.0
      %v981 = vrcp.pop %v965
      %v982 = vmul.f32 %v965, %v981
      %v983 = vsub.f32 1.0, %v982
      %v984 = vmul.f32 %v981, %v983
      %v985 = vadd.f32 %v981, %v984
      %vm986 = vweird.f32 %v965
      %vm987 = vweird.f32 %v981
      %vm988 = vmor %vm986, %vm987
      %v989 = vsel %vm988, %v981, %v985
      %v990 = vand.u32 2147483647, %v965
      %vm991 = vcmp.eq.f32.partialorder %v990, 8.507059e+37
      %v992 = vand.u32 %v965, 2147483648
      %v993 = vor.u32 1.1754944e-38, %v992
      %v994 = vsel %vm991, %v993, %v989
      %v995 = vmul.f32 1.0, %v994
      %v996 = vrcp.pop %v966
      %v997 = vmul.f32 %v966, %v996
      %v998 = vsub.f32 1.0, %v997
      %v999 = vmul.f32 %v996, %v998
      %v1000 = vadd.f32 %v996, %v999
      %vm1001 = vweird.f32 %v966
      %vm1002 = vweird.f32 %v996
      %vm1003 = vmor %vm1001, %vm1002
      %v1004 = vsel %vm1003, %v996, %v1000
      %v1005 = vand.u32 2147483647, %v966
      %vm1006 = vcmp.eq.f32.partialorder %v1005, 8.507059e+37
      %v1007 = vand.u32 %v966, 2147483648
      %v1008 = vor.u32 1.1754944e-38, %v1007
      %v1009 = vsel %vm1006, %v1008, %v1004
      %v1010 = vmul.f32 1.0, %v1009
      %v1011 = vrcp.pop %v967
      %v1012 = vmul.f32 %v967, %v1011
      %v1013 = vsub.f32 1.0, %v1012
      %v1014 = vmul.f32 %v1011, %v1013
      %v1015 = vadd.f32 %v1011, %v1014
      %vm1016 = vweird.f32 %v967
      %vm1017 = vweird.f32 %v1011
      %vm1018 = vmor %vm1016, %vm1017
      %v1019 = vsel %vm1018, %v1011, %v1015
      %v1020 = vand.u32 2147483647, %v967
      %vm1021 = vcmp.eq.f32.partialorder %v1020, 8.507059e+37
      %v1022 = vand.u32 %v967, 2147483648
      %v1023 = vor.u32 1.1754944e-38, %v1022
      %v1024 = vsel %vm1021, %v1023, %v1019
      %v1025 = vmul.f32 1.0, %v1024
      %v1026 = vrcp.pop %v968
      %v1027 = vmul.f32 %v968, %v1026
      %v1028 = vsub.f32 1.0, %v1027
      %v1029 = vmul.f32 %v1026, %v1028
      %v1030 = vadd.f32 %v1026, %v1029
      %vm1031 = vweird.f32 %v968
      %vm1032 = vweird.f32 %v1026
      %vm1033 = vmor %vm1031, %vm1032
      %v1034 = vsel %vm1033, %v1026, %v1030
      %v1035 = vand.u32 2147483647, %v968
      %vm1036 = vcmp.eq.f32.partialorder %v1035, 8.507059e+37
      %v1037 = vand.u32 %v968, 2147483648
      %v1038 = vor.u32 1.1754944e-38, %v1037
      %v1039 = vsel %vm1036, %v1038, %v1034
      %v1040 = vmul.f32 1.0, %v1039
      %v1041 = vrcp.pop %v969
      %v1042 = vmul.f32 %v969, %v1041
      %v1043 = vsub.f32 1.0, %v1042
      %v1044 = vmul.f32 %v1041, %v1043
      %v1045 = vadd.f32 %v1041, %v1044
      %vm1046 = vweird.f32 %v969
      %vm1047 = vweird.f32 %v1041
      %vm1048 = vmor %vm1046, %vm1047
      %v1049 = vsel %vm1048, %v1041, %v1045
      %v1050 = vand.u32 2147483647, %v969
      %vm1051 = vcmp.eq.f32.partialorder %v1050, 8.507059e+37
      %v1052 = vand.u32 %v969, 2147483648
      %v1053 = vor.u32 1.1754944e-38, %v1052
      %v1054 = vsel %vm1051, %v1053, %v1049
      %v1055 = vmul.f32 1.0, %v1054
      %v1056 = vrcp.pop %v970
      %v1057 = vmul.f32 %v970, %v1056
      %v1058 = vsub.f32 1.0, %v1057
      %v1059 = vmul.f32 %v1056, %v1058
      %v1060 = vadd.f32 %v1056, %v1059
      %vm1061 = vweird.f32 %v970
      %vm1062 = vweird.f32 %v1056
      %vm1063 = vmor %vm1061, %vm1062
      %v1064 = vsel %vm1063, %v1056, %v1060
      %v1065 = vand.u32 2147483647, %v970
      %vm1066 = vcmp.eq.f32.partialorder %v1065, 8.507059e+37
      %v1067 = vand.u32 %v970, 2147483648
      %v1068 = vor.u32 1.1754944e-38, %v1067
      %v1069 = vsel %vm1066, %v1068, %v1064
      %v1070 = vmul.f32 1.0, %v1069
      %v1071 = vrcp.pop %v971
      %v1072 = vmul.f32 %v971, %v1071
      %v1073 = vsub.f32 1.0, %v1072
      %v1074 = vmul.f32 %v1071, %v1073
      %v1075 = vadd.f32 %v1071, %v1074
      %vm1076 = vweird.f32 %v971
      %vm1077 = vweird.f32 %v1071
      %vm1078 = vmor %vm1076, %vm1077
      %v1079 = vsel %vm1078, %v1071, %v1075
      %v1080 = vand.u32 2147483647, %v971
      %vm1081 = vcmp.eq.f32.partialorder %v1080, 8.507059e+37
      %v1082 = vand.u32 %v971, 2147483648
      %v1083 = vor.u32 1.1754944e-38, %v1082
      %v1084 = vsel %vm1081, %v1083, %v1079
      %v1085 = vmul.f32 1.0, %v1084
      %v1086 = vrcp.pop %v972
      %v1087 = vmul.f32 %v972, %v1086
      %v1088 = vsub.f32 1.0, %v1087
      %v1089 = vmul.f32 %v1086, %v1088
      %v1090 = vadd.f32 %v1086, %v1089
      %vm1091 = vweird.f32 %v972
      %vm1092 = vweird.f32 %v1086
      %vm1093 = vmor %vm1091, %vm1092
      %v1094 = vsel %vm1093, %v1086, %v1090
      %v1095 = vand.u32 2147483647, %v972
      %vm1096 = vcmp.eq.f32.partialorder %v1095, 8.507059e+37
      %v1097 = vand.u32 %v972, 2147483648
      %v1098 = vor.u32 1.1754944e-38, %v1097
      %v1099 = vsel %vm1096, %v1098, %v1094
      %v1100 = vmul.f32 1.0, %v1099
      %v1101 = vrcp.pop %v973
      %v1102 = vmul.f32 %v973, %v1101
      %v1103 = vsub.f32 1.0, %v1102
      %v1104 = vmul.f32 %v1101, %v1103
      %v1105 = vadd.f32 %v1101, %v1104
      %vm1106 = vweird.f32 %v973
      %vm1107 = vweird.f32 %v1101
      %vm1108 = vmor %vm1106, %vm1107
      %v1109 = vsel %vm1108, %v1101, %v1105
      %v1110 = vand.u32 2147483647, %v973
      %vm1111 = vcmp.eq.f32.partialorder %v1110, 8.507059e+37
      %v1112 = vand.u32 %v973, 2147483648
      %v1113 = vor.u32 1.1754944e-38, %v1112
      %v1114 = vsel %vm1111, %v1113, %v1109
      %v1115 = vmul.f32 1.0, %v1114
      %v1116 = vrcp.pop %v974
      %v1117 = vmul.f32 %v974, %v1116
      %v1118 = vsub.f32 1.0, %v1117
      %v1119 = vmul.f32 %v1116, %v1118
      %v1120 = vadd.f32 %v1116, %v1119
      %vm1121 = vweird.f32 %v974
      %vm1122 = vweird.f32 %v1116
      %vm1123 = vmor %vm1121, %vm1122
      %v1124 = vsel %vm1123, %v1116, %v1120
      %v1125 = vand.u32 2147483647, %v974
      %vm1126 = vcmp.eq.f32.partialorder %v1125, 8.507059e+37
      %v1127 = vand.u32 %v974, 2147483648
      %v1128 = vor.u32 1.1754944e-38, %v1127
      %v1129 = vsel %vm1126, %v1128, %v1124
      %v1130 = vmul.f32 1.0, %v1129
      %v1131 = vrcp.pop %v975
      %v1132 = vmul.f32 %v975, %v1131
      %v1133 = vsub.f32 1.0, %v1132
      %v1134 = vmul.f32 %v1131, %v1133
      %v1135 = vadd.f32 %v1131, %v1134
      %vm1136 = vweird.f32 %v975
      %vm1137 = vweird.f32 %v1131
      %vm1138 = vmor %vm1136, %vm1137
      %v1139 = vsel %vm1138, %v1131, %v1135
      %v1140 = vand.u32 2147483647, %v975
      %vm1141 = vcmp.eq.f32.partialorder %v1140, 8.507059e+37
      %v1142 = vand.u32 %v975, 2147483648
      %v1143 = vor.u32 1.1754944e-38, %v1142
      %v1144 = vsel %vm1141, %v1143, %v1139
      %v1145 = vmul.f32 1.0, %v1144
      %v1146 = vrcp.pop %v976
      %v1147 = vmul.f32 %v976, %v1146
      %v1148 = vsub.f32 1.0, %v1147
      %v1149 = vmul.f32 %v1146, %v1148
      %v1150 = vadd.f32 %v1146, %v1149
      %vm1151 = vweird.f32 %v976
      %vm1152 = vweird.f32 %v1146
      %vm1153 = vmor %vm1151, %vm1152
      %v1154 = vsel %vm1153, %v1146, %v1150
      %v1155 = vand.u32 2147483647, %v976
      %vm1156 = vcmp.eq.f32.partialorder %v1155, 8.507059e+37
      %v1157 = vand.u32 %v976, 2147483648
      %v1158 = vor.u32 1.1754944e-38, %v1157
      %v1159 = vsel %vm1156, %v1158, %v1154
      %v1160 = vmul.f32 1.0, %v1159
      %v1161 = vrcp.pop %v977
      %v1162 = vmul.f32 %v977, %v1161
      %v1163 = vsub.f32 1.0, %v1162
      %v1164 = vmul.f32 %v1161, %v1163
      %v1165 = vadd.f32 %v1161, %v1164
      %vm1166 = vweird.f32 %v977
      %vm1167 = vweird.f32 %v1161
      %vm1168 = vmor %vm1166, %vm1167
      %v1169 = vsel %vm1168, %v1161, %v1165
      %v1170 = vand.u32 2147483647, %v977
      %vm1171 = vcmp.eq.f32.partialorder %v1170, 8.507059e+37
      %v1172 = vand.u32 %v977, 2147483648
      %v1173 = vor.u32 1.1754944e-38, %v1172
      %v1174 = vsel %vm1171, %v1173, %v1169
      %v1175 = vmul.f32 1.0, %v1174
      %v1176 = vrcp.pop %v978
      %v1177 = vmul.f32 %v978, %v1176
      %v1178 = vsub.f32 1.0, %v1177
      %v1179 = vmul.f32 %v1176, %v1178
      %v1180 = vadd.f32 %v1176, %v1179
      %vm1181 = vweird.f32 %v978
      %vm1182 = vweird.f32 %v1176
      %vm1183 = vmor %vm1181, %vm1182
      %v1184 = vsel %vm1183, %v1176, %v1180
      %v1185 = vand.u32 2147483647, %v978
      %vm1186 = vcmp.eq.f32.partialorder %v1185, 8.507059e+37
      %v1187 = vand.u32 %v978, 2147483648
      %v1188 = vor.u32 1.1754944e-38, %v1187
      %v1189 = vsel %vm1186, %v1188, %v1184
      %v1190 = vmul.f32 1.0, %v1189
      %v1191 = vrcp.pop %v979
      %v1192 = vmul.f32 %v979, %v1191
      %v1193 = vsub.f32 1.0, %v1192
      %v1194 = vmul.f32 %v1191, %v1193
      %v1195 = vadd.f32 %v1191, %v1194
      %vm1196 = vweird.f32 %v979
      %vm1197 = vweird.f32 %v1191
      %vm1198 = vmor %vm1196, %vm1197
      %v1199 = vsel %vm1198, %v1191, %v1195
      %v1200 = vand.u32 2147483647, %v979
      %vm1201 = vcmp.eq.f32.partialorder %v1200, 8.507059e+37
      %v1202 = vand.u32 %v979, 2147483648
      %v1203 = vor.u32 1.1754944e-38, %v1202
      %v1204 = vsel %vm1201, %v1203, %v1199
      %v1205 = vmul.f32 1.0, %v1204
      %v1206 = vrcp.pop %v980
      %v1207 = vmul.f32 %v980, %v1206
      %v1208 = vsub.f32 1.0, %v1207
      %v1209 = vmul.f32 %v1206, %v1208
      %v1210 = vadd.f32 %v1206, %v1209
      %vm1211 = vweird.f32 %v980
      %vm1212 = vweird.f32 %v1206
      %vm1213 = vmor %vm1211, %vm1212
      %v1214 = vsel %vm1213, %v1206, %v1210
      %v1215 = vand.u32 2147483647, %v980
      %vm1216 = vcmp.eq.f32.partialorder %v1215, 8.507059e+37
      %v1217 = vand.u32 %v980, 2147483648
      %v1218 = vor.u32 1.1754944e-38, %v1217
      %v1219 = vsel %vm1216, %v1218, %v1214
      %v1220 = vmul.f32 1.0, %v1219
      %v1221 = vadd.f32 %v995, 1e-05
      %v1222 = vadd.f32 %v1010, 1e-05
      %v1223 = vadd.f32 %v1025, 1e-05
      %v1224 = vadd.f32 %v1040, 1e-05
      %v1225 = vadd.f32 %v1055, 1e-05
      %v1226 = vadd.f32 %v1070, 1e-05
      %v1227 = vadd.f32 %v1085, 1e-05
      %v1228 = vadd.f32 %v1100, 1e-05
      %v1229 = vadd.f32 %v1115, 1e-05
      %v1230 = vadd.f32 %v1130, 1e-05
      %v1231 = vadd.f32 %v1145, 1e-05
      %v1232 = vadd.f32 %v1160, 1e-05
      %v1233 = vadd.f32 %v1175, 1e-05
      %v1234 = vadd.f32 %v1190, 1e-05
      %v1235 = vadd.f32 %v1205, 1e-05
      %v1236 = vadd.f32 %v1220, 1e-05
      %v1237 = vmul.f32 %v1221, 1.0986123
      %v1238 = vmul.f32 %v1222, 1.0986123
      %v1239 = vmul.f32 %v1223, 1.0986123
      %v1240 = vmul.f32 %v1224, 1.0986123
      %v1241 = vmul.f32 %v1225, 1.0986123
      %v1242 = vmul.f32 %v1226, 1.0986123
      %v1243 = vmul.f32 %v1227, 1.0986123
      %v1244 = vmul.f32 %v1228, 1.0986123
      %v1245 = vmul.f32 %v1229, 1.0986123
      %v1246 = vmul.f32 %v1230, 1.0986123
      %v1247 = vmul.f32 %v1231, 1.0986123
      %v1248 = vmul.f32 %v1232, 1.0986123
      %v1249 = vmul.f32 %v1233, 1.0986123
      %v1250 = vmul.f32 %v1234, 1.0986123
      %v1251 = vmul.f32 %v1235, 1.0986123
      %v1252 = vmul.f32 %v1236, 1.0986123
      %v1253 = vmul.f32 %v1237, 1.442695
      %v1254 = vpow.pop %v1253
      %v1255 = vmul.f32 %v1238, 1.442695
      %v1256 = vpow.pop %v1255
      %v1257 = vmul.f32 %v1239, 1.442695
      %v1258 = vpow.pop %v1257
      %v1259 = vmul.f32 %v1240, 1.442695
      %v1260 = vpow.pop %v1259
      %v1261 = vmul.f32 %v1241, 1.442695
      %v1262 = vpow.pop %v1261
      %v1263 = vmul.f32 %v1242, 1.442695
      %v1264 = vpow.pop %v1263
      %v1265 = vmul.f32 %v1243, 1.442695
      %v1266 = vpow.pop %v1265
      %v1267 = vmul.f32 %v1244, 1.442695
      %v1268 = vpow.pop %v1267
      %v1269 = vmul.f32 %v1245, 1.442695
      %v1270 = vpow.pop %v1269
      %v1271 = vmul.f32 %v1246, 1.442695
      %v1272 = vpow.pop %v1271
      %v1273 = vmul.f32 %v1247, 1.442695
      %v1274 = vpow.pop %v1273
      %v1275 = vmul.f32 %v1248, 1.442695
      %v1276 = vpow.pop %v1275
      %v1277 = vmul.f32 %v1249, 1.442695
      %v1278 = vpow.pop %v1277
      %v1279 = vmul.f32 %v1250, 1.442695
      %v1280 = vpow.pop %v1279
      %v1281 = vmul.f32 %v1251, 1.442695
      %v1282 = vpow.pop %v1281
      %v1283 = vmul.f32 %v1252, 1.442695
      %v1284 = vpow.pop %v1283
      %v1285 = vsub.f32 %v1254, 1.0
      %v1286 = vsub.f32 %v1256, 1.0
      %v1287 = vsub.f32 %v1258, 1.0
      %v1288 = vsub.f32 %v1260, 1.0
      %v1289 = vsub.f32 %v1262, 1.0
      %v1290 = vsub.f32 %v1264, 1.0
      %v1291 = vsub.f32 %v1266, 1.0
      %v1292 = vsub.f32 %v1268, 1.0
      %v1293 = vsub.f32 %v1270, 1.0
      %v1294 = vsub.f32 %v1272, 1.0
      %v1295 = vsub.f32 %v1274, 1.0
      %v1296 = vsub.f32 %v1276, 1.0
      %v1297 = vsub.f32 %v1278, 1.0
      %v1298 = vsub.f32 %v1280, 1.0
      %v1299 = vsub.f32 %v1282, 1.0
      %v1300 = vsub.f32 %v1284, 1.0
      %v1301 = vlaneseq
      %v1302 = vshrl.u32 %v1301, 7
      %v1303 = vadd.s32 %v1302, 8
      %v1304 = vadd.s32 %v1302, 16
      %v1305 = vadd.s32 %v1302, 24
      %v1306 = vadd.s32 %v1302, 32
      %v1307 = vadd.s32 %v1302, 40
      %v1308 = vadd.s32 %v1302, 48
      %v1309 = vadd.s32 %v1302, 56
      %v1310 = vadd.s32 %v1302, 64
      %v1311 = vadd.s32 %v1302, 72
      %v1312 = vadd.s32 %v1302, 80
      %v1313 = vadd.s32 %v1302, 88
      %v1314 = vadd.s32 %v1302, 96
      %v1315 = vadd.s32 %v1302, 104
      %v1316 = vadd.s32 %v1302, 112
      %v1317 = vadd.s32 %v1302, 120
      %v1318 = vsub.s32 %v1302, %v665
      %v1319 = vsub.s32 %v1303, %v665
      %v1320 = vsub.s32 %v1304, %v665
      %v1321 = vsub.s32 %v1305, %v665
      %v1322 = vsub.s32 %v1306, %v665
      %v1323 = vsub.s32 %v1307, %v665
      %v1324 = vsub.s32 %v1308, %v665
      %v1325 = vsub.s32 %v1309, %v665
      %v1326 = vsub.s32 %v1310, %v665
      %v1327 = vsub.s32 %v1311, %v665
      %v1328 = vsub.s32 %v1312, %v665
      %v1329 = vsub.s32 %v1313, %v665
      %v1330 = vsub.s32 %v1314, %v665
      %v1331 = vsub.s32 %v1315, %v665
      %v1332 = vsub.s32 %v1316, %v665
      %v1333 = vsub.s32 %v1317, %v665
      %vm1334 = vcmp.lt.s32.totalorder %v1318, 0
      %v1335 = vsub.s32 0, %v1318
      %v1336 = vsel %vm1334, %v1335, %v1318
      %vm1337 = vcmp.lt.s32.totalorder %v1319, 0
      %v1338 = vsub.s32 0, %v1319
      %v1339 = vsel %vm1337, %v1338, %v1319
      %vm1340 = vcmp.lt.s32.totalorder %v1320, 0
      %v1341 = vsub.s32 0, %v1320
      %v1342 = vsel %vm1340, %v1341, %v1320
      %vm1343 = vcmp.lt.s32.totalorder %v1321, 0
      %v1344 = vsub.s32 0, %v1321
      %v1345 = vsel %vm1343, %v1344, %v1321
      %vm1346 = vcmp.lt.s32.totalorder %v1322, 0
      %v1347 = vsub.s32 0, %v1322
      %v1348 = vsel %vm1346, %v1347, %v1322
      %vm1349 = vcmp.lt.s32.totalorder %v1323, 0
      %v1350 = vsub.s32 0, %v1323
      %v1351 = vsel %vm1349, %v1350, %v1323
      %vm1352 = vcmp.lt.s32.totalorder %v1324, 0
      %v1353 = vsub.s32 0, %v1324
      %v1354 = vsel %vm1352, %v1353, %v1324
      %vm1355 = vcmp.lt.s32.totalorder %v1325, 0
      %v1356 = vsub.s32 0, %v1325
      %v1357 = vsel %vm1355, %v1356, %v1325
      %vm1358 = vcmp.lt.s32.totalorder %v1326, 0
      %v1359 = vsub.s32 0, %v1326
      %v1360 = vsel %vm1358, %v1359, %v1326
      %vm1361 = vcmp.lt.s32.totalorder %v1327, 0
      %v1362 = vsub.s32 0, %v1327
      %v1363 = vsel %vm1361, %v1362, %v1327
      %vm1364 = vcmp.lt.s32.totalorder %v1328, 0
      %v1365 = vsub.s32 0, %v1328
      %v1366 = vsel %vm1364, %v1365, %v1328
      %vm1367 = vcmp.lt.s32.totalorder %v1329, 0
      %v1368 = vsub.s32 0, %v1329
      %v1369 = vsel %vm1367, %v1368, %v1329
      %vm1370 = vcmp.lt.s32.totalorder %v1330, 0
      %v1371 = vsub.s32 0, %v1330
      %v1372 = vsel %vm1370, %v1371, %v1330
      %vm1373 = vcmp.lt.s32.totalorder %v1331, 0
      %v1374 = vsub.s32 0, %v1331
      %v1375 = vsel %vm1373, %v1374, %v1331
      %vm1376 = vcmp.lt.s32.totalorder %v1332, 0
      %v1377 = vsub.s32 0, %v1332
      %v1378 = vsel %vm1376, %v1377, %v1332
      %vm1379 = vcmp.lt.s32.totalorder %v1333, 0
      %v1380 = vsub.s32 0, %v1333
      %v1381 = vsel %vm1379, %v1380, %v1333
      %v1382 = vcvt.s32.f32 %v1336
      %v1383 = vcvt.s32.f32 %v1339
      %v1384 = vcvt.s32.f32 %v1342
      %v1385 = vcvt.s32.f32 %v1345
      %v1386 = vcvt.s32.f32 %v1348
      %v1387 = vcvt.s32.f32 %v1351
      %v1388 = vcvt.s32.f32 %v1354
      %v1389 = vcvt.s32.f32 %v1357
      %v1390 = vcvt.s32.f32 %v1360
      %v1391 = vcvt.s32.f32 %v1363
      %v1392 = vcvt.s32.f32 %v1366
      %v1393 = vcvt.s32.f32 %v1369
      %v1394 = vcvt.s32.f32 %v1372
      %v1395 = vcvt.s32.f32 %v1375
      %v1396 = vcvt.s32.f32 %v1378
      %v1397 = vcvt.s32.f32 %v1381
      %v1398 = vmul.f32 %v1382, -0.5
      %v1399 = vmul.f32 %v1383, -0.5
      %v1400 = vmul.f32 %v1384, -0.5
      %v1401 = vmul.f32 %v1385, -0.5
      %v1402 = vmul.f32 %v1386, -0.5
      %v1403 = vmul.f32 %v1387, -0.5
      %v1404 = vmul.f32 %v1388, -0.5
      %v1405 = vmul.f32 %v1389, -0.5
      %v1406 = vmul.f32 %v1390, -0.5
      %v1407 = vmul.f32 %v1391, -0.5
      %v1408 = vmul.f32 %v1392, -0.5
      %v1409 = vmul.f32 %v1393, -0.5
      %v1410 = vmul.f32 %v1394, -0.5
      %v1411 = vmul.f32 %v1395, -0.5
      %v1412 = vmul.f32 %v1396, -0.5
      %v1413 = vmul.f32 %v1397, -0.5
      %v1414 = vmul.f32 %v1398, %v1382
      %v1415 = vmul.f32 %v1399, %v1383
      %v1416 = vmul.f32 %v1400, %v1384
      %v1417 = vmul.f32 %v1401, %v1385
      %v1418 = vmul.f32 %v1402, %v1386
      %v1419 = vmul.f32 %v1403, %v1387
      %v1420 = vmul.f32 %v1404, %v1388
      %v1421 = vmul.f32 %v1405, %v1389
      %v1422 = vmul.f32 %v1406, %v1390
      %v1423 = vmul.f32 %v1407, %v1391
      %v1424 = vmul.f32 %v1408, %v1392
      %v1425 = vmul.f32 %v1409, %v1393
      %v1426 = vmul.f32 %v1410, %v1394
      %v1427 = vmul.f32 %v1411, %v1395
      %v1428 = vmul.f32 %v1412, %v1396
      %v1429 = vmul.f32 %v1413, %v1397
      %v1430 = vrcp.pop %v1285
      %v1431 = vrcp.pop %v1286
      %v1432 = vrcp.pop %v1287
      %v1433 = vrcp.pop %v1288
      %v1434 = vrcp.pop %v1289
      %v1435 = vrcp.pop %v1290
      %v1436 = vrcp.pop %v1291
      %v1437 = vrcp.pop %v1292
      %v1438 = vrcp.pop %v1293
      %v1439 = vrcp.pop %v1294
      %v1440 = vrcp.pop %v1295
      %v1441 = vrcp.pop %v1296
      %v1442 = vrcp.pop %v1297
      %v1443 = vrcp.pop %v1298
      %v1444 = vrcp.pop %v1299
      %v1445 = vrcp.pop %v1300
      %v1446 = vmul.f32 %v1430, 0.3989423
      %v1447 = vmul.f32 %v1431, 0.3989423
      %v1448 = vmul.f32 %v1432, 0.3989423
      %v1449 = vmul.f32 %v1433, 0.3989423
      %v1450 = vmul.f32 %v1434, 0.3989423
      %v1451 = vmul.f32 %v1435, 0.3989423
      %v1452 = vmul.f32 %v1436, 0.3989423
      %v1453 = vmul.f32 %v1437, 0.3989423
      %v1454 = vmul.f32 %v1438, 0.3989423
      %v1455 = vmul.f32 %v1439, 0.3989423
      %v1456 = vmul.f32 %v1440, 0.3989423
      %v1457 = vmul.f32 %v1441, 0.3989423
      %v1458 = vmul.f32 %v1442, 0.3989423
      %v1459 = vmul.f32 %v1443, 0.3989423
      %v1460 = vmul.f32 %v1444, 0.3989423
      %v1461 = vmul.f32 %v1445, 0.3989423
      %v1462 = vmul.f32 %v1430, %v1430
      %v1463 = vmul.f32 %v1431, %v1431
      %v1464 = vmul.f32 %v1432, %v1432
      %v1465 = vmul.f32 %v1433, %v1433
      %v1466 = vmul.f32 %v1434, %v1434
      %v1467 = vmul.f32 %v1435, %v1435
      %v1468 = vmul.f32 %v1436, %v1436
      %v1469 = vmul.f32 %v1437, %v1437
      %v1470 = vmul.f32 %v1438, %v1438
      %v1471 = vmul.f32 %v1439, %v1439
      %v1472 = vmul.f32 %v1440, %v1440
      %v1473 = vmul.f32 %v1441, %v1441
      %v1474 = vmul.f32 %v1442, %v1442
      %v1475 = vmul.f32 %v1443, %v1443
      %v1476 = vmul.f32 %v1444, %v1444
      %v1477 = vmul.f32 %v1445, %v1445
      %1479 = vset.pattern.permute.xlu0 0
      %1480 = vperm.xlu0 %1479, %v1462
      %v1481 = vpop.permute.xlu0 %1480
      %1484 = vset.pattern.permute.xlu0 0
      %1485 = vperm.xlu0 %1484, %v1463
      %v1486 = vpop.permute.xlu0 %1485
      %1489 = vset.pattern.permute.xlu0 0
      %1490 = vperm.xlu0 %1489, %v1464
      %v1491 = vpop.permute.xlu0 %1490
      %1494 = vset.pattern.permute.xlu0 0
      %1495 = vperm.xlu0 %1494, %v1465
      %v1496 = vpop.permute.xlu0 %1495
      %1499 = vset.pattern.permute.xlu0 0
      %1500 = vperm.xlu0 %1499, %v1466
      %v1501 = vpop.permute.xlu0 %1500
      %1504 = vset.pattern.permute.xlu0 0
      %1505 = vperm.xlu0 %1504, %v1467
      %v1506 = vpop.permute.xlu0 %1505
      %1509 = vset.pattern.permute.xlu0 0
      %1510 = vperm.xlu0 %1509, %v1468
      %v1511 = vpop.permute.xlu0 %1510
      %1514 = vset.pattern.permute.xlu0 0
      %1515 = vperm.xlu0 %1514, %v1469
      %v1516 = vpop.permute.xlu0 %1515
      %1519 = vset.pattern.permute.xlu0 0
      %1520 = vperm.xlu0 %1519, %v1470
      %v1521 = vpop.permute.xlu0 %1520
      %1524 = vset.pattern.permute.xlu0 0
      %1525 = vperm.xlu0 %1524, %v1471
      %v1526 = vpop.permute.xlu0 %1525
      %1529 = vset.pattern.permute.xlu0 0
      %1530 = vperm.xlu0 %1529, %v1472
      %v1531 = vpop.permute.xlu0 %1530
      %1534 = vset.pattern.permute.xlu0 0
      %1535 = vperm.xlu0 %1534, %v1473
      %v1536 = vpop.permute.xlu0 %1535
      %1539 = vset.pattern.permute.xlu0 0
      %1540 = vperm.xlu0 %1539, %v1474
      %v1541 = vpop.permute.xlu0 %1540
      %1544 = vset.pattern.permute.xlu0 0
      %1545 = vperm.xlu0 %1544, %v1475
      %v1546 = vpop.permute.xlu0 %1545
      %1549 = vset.pattern.permute.xlu0 0
      %1550 = vperm.xlu0 %1549, %v1476
      %v1551 = vpop.permute.xlu0 %1550
      %1554 = vset.pattern.permute.xlu0 0
      %1555 = vperm.xlu0 %1554, %v1477
      %v1556 = vpop.permute.xlu0 %1555
      %v1558 = vmul.f32 %v1414, %v1481
      %v1559 = vmul.f32 %v1415, %v1486
      %v1560 = vmul.f32 %v1416, %v1491
      %v1561 = vmul.f32 %v1417, %v1496
      %v1562 = vmul.f32 %v1418, %v1501
      %v1563 = vmul.f32 %v1419, %v1506
      %v1564 = vmul.f32 %v1420, %v1511
      %v1565 = vmul.f32 %v1421, %v1516
      %v1566 = vmul.f32 %v1422, %v1521
      %v1567 = vmul.f32 %v1423, %v1526
      %v1568 = vmul.f32 %v1424, %v1531
      %v1569 = vmul.f32 %v1425, %v1536
      %v1570 = vmul.f32 %v1426, %v1541
      %v1571 = vmul.f32 %v1427, %v1546
      %v1572 = vmul.f32 %v1428, %v1551
      %v1573 = vmul.f32 %v1429, %v1556
      %v1574 = vmul.f32 %v1558, 1.442695
      %v1575 = vpow.pop %v1574
      %v1576 = vmul.f32 %v1559, 1.442695
      %v1577 = vpow.pop %v1576
      %v1578 = vmul.f32 %v1560, 1.442695
      %v1579 = vpow.pop %v1578
      %v1580 = vmul.f32 %v1561, 1.442695
      %v1581 = vpow.pop %v1580
      %v1582 = vmul.f32 %v1562, 1.442695
      %v1583 = vpow.pop %v1582
      %v1584 = vmul.f32 %v1563, 1.442695
      %v1585 = vpow.pop %v1584
      %v1586 = vmul.f32 %v1564, 1.442695
      %v1587 = vpow.pop %v1586
      %v1588 = vmul.f32 %v1565, 1.442695
      %v1589 = vpow.pop %v1588
      %v1590 = vmul.f32 %v1566, 1.442695
      %v1591 = vpow.pop %v1590
      %v1592 = vmul.f32 %v1567, 1.442695
      %v1593 = vpow.pop %v1592
      %v1594 = vmul.f32 %v1568, 1.442695
      %v1595 = vpow.pop %v1594
      %v1596 = vmul.f32 %v1569, 1.442695
      %v1597 = vpow.pop %v1596
      %v1598 = vmul.f32 %v1570, 1.442695
      %v1599 = vpow.pop %v1598
      %v1600 = vmul.f32 %v1571, 1.442695
      %v1601 = vpow.pop %v1600
      %v1602 = vmul.f32 %v1572, 1.442695
      %v1603 = vpow.pop %v1602
      %v1604 = vmul.f32 %v1573, 1.442695
      %v1605 = vpow.pop %v1604
      %1607 = vset.pattern.permute.xlu0 0
      %1608 = vperm.xlu0 %1607, %v1446
      %v1609 = vpop.permute.xlu0 %1608
      %1612 = vset.pattern.permute.xlu0 0
      %1613 = vperm.xlu0 %1612, %v1447
      %v1614 = vpop.permute.xlu0 %1613
      %1617 = vset.pattern.permute.xlu0 0
      %1618 = vperm.xlu0 %1617, %v1448
      %v1619 = vpop.permute.xlu0 %1618
      %1622 = vset.pattern.permute.xlu0 0
      %1623 = vperm.xlu0 %1622, %v1449
      %v1624 = vpop.permute.xlu0 %1623
      %1627 = vset.pattern.permute.xlu0 0
      %1628 = vperm.xlu0 %1627, %v1450
      %v1629 = vpop.permute.xlu0 %1628
      %1632 = vset.pattern.permute.xlu0 0
      %1633 = vperm.xlu0 %1632, %v1451
      %v1634 = vpop.permute.xlu0 %1633
      %1637 = vset.pattern.permute.xlu0 0
      %1638 = vperm.xlu0 %1637, %v1452
      %v1639 = vpop.permute.xlu0 %1638
      %1642 = vset.pattern.permute.xlu0 0
      %1643 = vperm.xlu0 %1642, %v1453
      %v1644 = vpop.permute.xlu0 %1643
      %1647 = vset.pattern.permute.xlu0 0
      %1648 = vperm.xlu0 %1647, %v1454
      %v1649 = vpop.permute.xlu0 %1648
      %1652 = vset.pattern.permute.xlu0 0
      %1653 = vperm.xlu0 %1652, %v1455
      %v1654 = vpop.permute.xlu0 %1653
      %1657 = vset.pattern.permute.xlu0 0
      %1658 = vperm.xlu0 %1657, %v1456
      %v1659 = vpop.permute.xlu0 %1658
      %1662 = vset.pattern.permute.xlu0 0
      %1663 = vperm.xlu0 %1662, %v1457
      %v1664 = vpop.permute.xlu0 %1663
      %1667 = vset.pattern.permute.xlu0 0
      %1668 = vperm.xlu0 %1667, %v1458
      %v1669 = vpop.permute.xlu0 %1668
      %1672 = vset.pattern.permute.xlu0 0
      %1673 = vperm.xlu0 %1672, %v1459
      %v1674 = vpop.permute.xlu0 %1673
      %1677 = vset.pattern.permute.xlu0 0
      %1678 = vperm.xlu0 %1677, %v1460
      %v1679 = vpop.permute.xlu0 %1678
      %1682 = vset.pattern.permute.xlu0 0
      %1683 = vperm.xlu0 %1682, %v1461
      %v1684 = vpop.permute.xlu0 %1683
      %v1686 = vmul.f32 %v1609, %v1575
      %v1687 = vmul.f32 %v1614, %v1577
      %v1688 = vmul.f32 %v1619, %v1579
      %v1689 = vmul.f32 %v1624, %v1581
      %v1690 = vmul.f32 %v1629, %v1583
      %v1691 = vmul.f32 %v1634, %v1585
      %v1692 = vmul.f32 %v1639, %v1587
      %v1693 = vmul.f32 %v1644, %v1589
      %v1694 = vmul.f32 %v1649, %v1591
      %v1695 = vmul.f32 %v1654, %v1593
      %v1696 = vmul.f32 %v1659, %v1595
      %v1697 = vmul.f32 %v1664, %v1597
      %v1698 = vmul.f32 %v1669, %v1599
      %v1699 = vmul.f32 %v1674, %v1601
      %v1700 = vmul.f32 %v1679, %v1603
      %v1701 = vmul.f32 %v1684, %v1605
      %v1702 = vpack.c.bf16 %v812, %v811
      %v1703 = vpack.c.bf16 %v814, %v813
      %v1704 = vpack.c.bf16 %v816, %v815
      %v1705 = vpack.c.bf16 %v818, %v817
      %v1706 = vpack.c.bf16 %v820, %v819
      %v1707 = vpack.c.bf16 %v822, %v821
      %v1708 = vpack.c.bf16 %v824, %v823
      %v1709 = vpack.c.bf16 %v826, %v825
      %1710 = vrot.lane.b32.xlu0 %v518, 112
      %v1711 = vpop.permute.xlu0 %1710
      %1712 = vrot.lane.b32.xlu0 %v519, 112
      %v1713 = vpop.permute.xlu0 %1712
      %1714 = vrot.lane.b32.xlu0 %v520, 112
      %v1715 = vpop.permute.xlu0 %1714
      %1716 = vrot.lane.b32.xlu0 %v521, 112
      %v1717 = vpop.permute.xlu0 %1716
      %1718 = vrot.lane.b32.xlu0 %v522, 112
      %v1719 = vpop.permute.xlu0 %1718
      %1720 = vrot.lane.b32.xlu0 %v523, 112
      %v1721 = vpop.permute.xlu0 %1720
      %1722 = vrot.lane.b32.xlu0 %v524, 112
      %v1723 = vpop.permute.xlu0 %1722
      %1724 = vrot.lane.b32.xlu0 %v525, 112
      %v1725 = vpop.permute.xlu0 %1724
      %1734 = vmatpush.bf16.msra.mxu0 %v1725
      %1735 = vmatpush.bf16.msra.mxu0 %v1723
      %1736 = vmatpush.bf16.msra.mxu0 %v1721
      %1737 = vmatpush.bf16.msra.mxu0 %v1719
      %1738 = vmatpush.bf16.msra.mxu0 %v1717
      %1739 = vmatpush.bf16.msra.mxu0 %v1715
      %1740 = vmatpush.bf16.msra.mxu0 %v1713
      %1741 = vmatpush.bf16.msra.mxu0 %v1711
      %1742 = vmatmul.bf16.gmra.mxu0 %v1702
      %v1743 = vpop.f32.mrf.mxu0
      %v1744 = vadd.f32 0.0, %v1743
      %v1745 = vpop.f32.mrf.mxu0
      %v1746 = vadd.f32 0.0, %v1745
      %1747 = vmatmul.bf16.gmra.mxu0 %v1703
      %v1748 = vpop.f32.mrf.mxu0
      %v1749 = vadd.f32 0.0, %v1748
      %v1750 = vpop.f32.mrf.mxu0
      %v1751 = vadd.f32 0.0, %v1750
      %1752 = vmatmul.bf16.gmra.mxu0 %v1704
      %v1753 = vpop.f32.mrf.mxu0
      %v1754 = vadd.f32 0.0, %v1753
      %v1755 = vpop.f32.mrf.mxu0
      %v1756 = vadd.f32 0.0, %v1755
      %1757 = vmatmul.bf16.gmra.mxu0 %v1705
      %v1758 = vpop.f32.mrf.mxu0
      %v1759 = vadd.f32 0.0, %v1758
      %v1760 = vpop.f32.mrf.mxu0
      %v1761 = vadd.f32 0.0, %v1760
      %1762 = vmatmul.bf16.gmra.mxu0 %v1706
      %v1763 = vpop.f32.mrf.mxu0
      %v1764 = vadd.f32 0.0, %v1763
      %v1765 = vpop.f32.mrf.mxu0
      %v1766 = vadd.f32 0.0, %v1765
      %1767 = vmatmul.bf16.gmra.mxu0 %v1707
      %v1768 = vpop.f32.mrf.mxu0
      %v1769 = vadd.f32 0.0, %v1768
      %v1770 = vpop.f32.mrf.mxu0
      %v1771 = vadd.f32 0.0, %v1770
      %1772 = vmatmul.bf16.gmra.mxu0 %v1708
      %v1773 = vpop.f32.mrf.mxu0
      %v1774 = vadd.f32 0.0, %v1773
      %v1775 = vpop.f32.mrf.mxu0
      %v1776 = vadd.f32 0.0, %v1775
      %1777 = vmatmul.bf16.gmra.mxu0 %v1709
      %v1778 = vpop.f32.mrf.mxu0
      %v1779 = vadd.f32 0.0, %v1778
      %v1780 = vpop.f32.mrf.mxu0
      %v1781 = vadd.f32 0.0, %v1780
      %1782 = vdwg.mxu0
      %1783 = vst [vmem:[%s367] sm:$0xff] %v811
      %1784 = vst [vmem:[%s367 + $0x8] sm:$0xff] %v812
      %1785 = vst [vmem:[%s367 + $0x10] sm:$0xff] %v813
      %1786 = vst [vmem:[%s367 + $0x18] sm:$0xff] %v814
      %1787 = vst [vmem:[%s367 + $0x20] sm:$0xff] %v815
      %1788 = vst [vmem:[%s367 + $0x28] sm:$0xff] %v816
      %1789 = vst [vmem:[%s367 + $0x30] sm:$0xff] %v817
      %1790 = vst [vmem:[%s367 + $0x38] sm:$0xff] %v818
      %1791 = vst [vmem:[%s367 + $0x40] sm:$0xff] %v819
      %1792 = vst [vmem:[%s367 + $0x48] sm:$0xff] %v820
      %1793 = vst [vmem:[%s367 + $0x50] sm:$0xff] %v821
      %1794 = vst [vmem:[%s367 + $0x58] sm:$0xff] %v822
      %1795 = vst [vmem:[%s367 + $0x60] sm:$0xff] %v823
      %1796 = vst [vmem:[%s367 + $0x68] sm:$0xff] %v824
      %1797 = vst [vmem:[%s367 + $0x70] sm:$0xff] %v825
      %1798 = vst [vmem:[%s367 + $0x78] sm:$0xff] %v826
      %1799 = vst [vmem:[%s376] sm:$0xff] %v1686
      %1800 = vst [vmem:[%s376 + $0x8] sm:$0xff] %v1687
      %1801 = vst [vmem:[%s376 + $0x10] sm:$0xff] %v1688
      %1802 = vst [vmem:[%s376 + $0x18] sm:$0xff] %v1689
      %1803 = vst [vmem:[%s376 + $0x20] sm:$0xff] %v1690
      %1804 = vst [vmem:[%s376 + $0x28] sm:$0xff] %v1691
      %1805 = vst [vmem:[%s376 + $0x30] sm:$0xff] %v1692
      %1806 = vst [vmem:[%s376 + $0x38] sm:$0xff] %v1693
      %1807 = vst [vmem:[%s376 + $0x40] sm:$0xff] %v1694
      %1808 = vst [vmem:[%s376 + $0x48] sm:$0xff] %v1695
      %1809 = vst [vmem:[%s376 + $0x50] sm:$0xff] %v1696
      %1810 = vst [vmem:[%s376 + $0x58] sm:$0xff] %v1697
      %1811 = vst [vmem:[%s376 + $0x60] sm:$0xff] %v1698
      %1812 = vst [vmem:[%s376 + $0x68] sm:$0xff] %v1699
      %1813 = vst [vmem:[%s376 + $0x70] sm:$0xff] %v1700
      %1814 = vst [vmem:[%s376 + $0x78] sm:$0xff] %v1701
      %vm1815 = vcmask 7168
      %1816 = vst.msk [vmem:[%s385] sm:$0xff] %vm1815, %v1285
      %1817 = vst.msk [vmem:[%s385 + $0x8] sm:$0xff] %vm1815, %v1286
      %1818 = vst.msk [vmem:[%s385 + $0x10] sm:$0xff] %vm1815, %v1287
      %1819 = vst.msk [vmem:[%s385 + $0x18] sm:$0xff] %vm1815, %v1288
      %1820 = vst.msk [vmem:[%s385 + $0x20] sm:$0xff] %vm1815, %v1289
      %1821 = vst.msk [vmem:[%s385 + $0x28] sm:$0xff] %vm1815, %v1290
      %1822 = vst.msk [vmem:[%s385 + $0x30] sm:$0xff] %vm1815, %v1291
      %1823 = vst.msk [vmem:[%s385 + $0x38] sm:$0xff] %vm1815, %v1292
      %1824 = vst.msk [vmem:[%s385 + $0x40] sm:$0xff] %vm1815, %v1293
      %1825 = vst.msk [vmem:[%s385 + $0x48] sm:$0xff] %vm1815, %v1294
      %1826 = vst.msk [vmem:[%s385 + $0x50] sm:$0xff] %vm1815, %v1295
      %1827 = vst.msk [vmem:[%s385 + $0x58] sm:$0xff] %vm1815, %v1296
      %1828 = vst.msk [vmem:[%s385 + $0x60] sm:$0xff] %vm1815, %v1297
      %1829 = vst.msk [vmem:[%s385 + $0x68] sm:$0xff] %vm1815, %v1298
      %1830 = vst.msk [vmem:[%s385 + $0x70] sm:$0xff] %vm1815, %v1299
      %1831 = vst.msk [vmem:[%s385 + $0x78] sm:$0xff] %vm1815, %v1300
      %v1832 = vpack.c.bf16 %v1744, %v1744
      %v1833 = vpack.c.bf16 %v1746, %v1746
      %v1834 = vpack.c.bf16 %v1749, %v1749
      %v1835 = vpack.c.bf16 %v1751, %v1751
      %v1836 = vpack.c.bf16 %v1754, %v1754
      %v1837 = vpack.c.bf16 %v1756, %v1756
      %v1838 = vpack.c.bf16 %v1759, %v1759
      %v1839 = vpack.c.bf16 %v1761, %v1761
      %v1840 = vpack.c.bf16 %v1764, %v1764
      %v1841 = vpack.c.bf16 %v1766, %v1766
      %v1842 = vpack.c.bf16 %v1769, %v1769
      %v1843 = vpack.c.bf16 %v1771, %v1771
      %v1844 = vpack.c.bf16 %v1774, %v1774
      %v1845 = vpack.c.bf16 %v1776, %v1776
      %v1846 = vpack.c.bf16 %v1779, %v1779
      %v1847 = vpack.c.bf16 %v1781, %v1781
      %vm1848 = vcmask 60416
      %1849 = vst.msk [vmem:[%s394] sm:$0xf] %vm1848, %v1832
      %1850 = vst.msk [vmem:[%s394 + $0x4] sm:$0xf] %vm1848, %v1833
      %1851 = vst.msk [vmem:[%s394 + $0x8] sm:$0xf] %vm1848, %v1834
      %1852 = vst.msk [vmem:[%s394 + $0xc] sm:$0xf] %vm1848, %v1835
      %1853 = vst.msk [vmem:[%s394 + $0x10] sm:$0xf] %vm1848, %v1836
      %1854 = vst.msk [vmem:[%s394 + $0x14] sm:$0xf] %vm1848, %v1837
      %1855 = vst.msk [vmem:[%s394 + $0x18] sm:$0xf] %vm1848, %v1838
      %1856 = vst.msk [vmem:[%s394 + $0x1c] sm:$0xf] %vm1848, %v1839
      %1857 = vst.msk [vmem:[%s394 + $0x20] sm:$0xf] %vm1848, %v1840
      %1858 = vst.msk [vmem:[%s394 + $0x24] sm:$0xf] %vm1848, %v1841
      %1859 = vst.msk [vmem:[%s394 + $0x28] sm:$0xf] %vm1848, %v1842
      %1860 = vst.msk [vmem:[%s394 + $0x2c] sm:$0xf] %vm1848, %v1843
      %1861 = vst.msk [vmem:[%s394 + $0x30] sm:$0xf] %vm1848, %v1844
      %1862 = vst.msk [vmem:[%s394 + $0x34] sm:$0xf] %vm1848, %v1845
      %1863 = vst.msk [vmem:[%s394 + $0x38] sm:$0xf] %vm1848, %v1846
      %1864 = vst.msk [vmem:[%s394 + $0x3c] sm:$0xf] %vm1848, %v1847
      %p1865 = scmp.lt.s32.totalorder %s24, 1
      %s1866 = scalar_select %p1865, %s24, 1
      %p1867 = scmp.lt.s32.totalorder %s25, 3
      %s1868 = scalar_select %p1867, %s25, 3
      %s1869 = smul.addr %s1868, 16
      %s1870 = smul.addr %s1866, 64
      %s1871 = sadd.s32 %s1869, %s1870
      %s1872 = smul.addr %s1871, 8
      %s1873 = scalar_lea.vmem %s5, %s1872
      %p1874 = scmp.lt.s32.totalorder %s24, 1
      %s1875 = scalar_select %p1874, %s24, 1
      %p1876 = scmp.lt.s32.totalorder %s25, 3
      %s1877 = scalar_select %p1876, %s25, 3
      %s1878 = smul.addr %s1877, 16
      %s1879 = smul.addr %s1875, 64
      %s1880 = sadd.s32 %s1878, %s1879
      %s1881 = smul.addr %s1880, 8
      %s1882 = scalar_lea.vmem %s6, %s1881
      %p1883 = scmp.lt.s32.totalorder %s24, 1
      %s1884 = scalar_select %p1883, %s24, 1
      %p1885 = scmp.lt.s32.totalorder %s25, 3
      %s1886 = scalar_select %p1885, %s25, 3
      %s1887 = smul.addr %s1886, 16
      %s1888 = smul.addr %s1884, 64
      %s1889 = sadd.s32 %s1887, %s1888
      %s1890 = smul.addr %s1889, 8
      %s1891 = scalar_lea.vmem %s7, %s1890
      %p1892 = scmp.lt.s32.totalorder %s24, 1
      %s1893 = scalar_select %p1892, %s24, 1
      %p1894 = scmp.lt.s32.totalorder %s25, 3
      %s1895 = scalar_select %p1894, %s25, 3
      %s1896 = smul.addr %s1895, 16
      %s1897 = smul.addr %s1893, 64
      %s1898 = sadd.s32 %s1896, %s1897
      %s1899 = smul.addr %s1898, 4
      %s1900 = scalar_lea.vmem %s8, %s1899
      // Predicated region
      $region41: #{encoder_layer_forward.2} parent=39 // pred_check
        %p1901 = pneg %p162
      $region42: #{encoder_layer_forward.2} parent=39 // pred_check_branch
        %1903 = sbr.rel (%p1901) target = $region44
      $region43: #{encoder_layer_forward.2} parent=39 // pred_region
        _
      $region44: #{encoder_layer_forward.2} parent=39 // pred_fallthru
        _
      // Predicated region
      $region45: #{encoder_layer_forward.2} parent=39 // pred_check
        %p1904 = pneg %p190
      $region46: #{encoder_layer_forward.2} parent=39 // pred_check_branch
        %1906 = sbr.rel (%p1904) target = $region48
      $region47: #{encoder_layer_forward.2} parent=39 // pred_region
        _
      $region48: #{encoder_layer_forward.2} parent=39 // pred_fallthru
        _
      // Predicated region
      $region49: #{encoder_layer_forward.2} parent=39 // pred_check
        %p1907 = pneg %p218
      $region50: #{encoder_layer_forward.2} parent=39 // pred_check_branch
        %1909 = sbr.rel (%p1907) target = $region52
      $region51: #{encoder_layer_forward.2} parent=39 // pred_region
        _
      $region52: #{encoder_layer_forward.2} parent=39 // pred_fallthru
        _
      // Predicated region
      $region53: #{encoder_layer_forward.2} parent=39 // pred_check
        %p1910 = pneg %p246
      $region54: #{encoder_layer_forward.2} parent=39 // pred_check_branch
        %1912 = sbr.rel (%p1910) target = $region56
      $region55: #{encoder_layer_forward.2} parent=39 // pred_region
        _
      $region56: #{encoder_layer_forward.2} parent=39 // pred_fallthru
        _
    $region40: #{encoder_layer_forward.2} parent=5 // pred_fallthru
      _
    %p1913 = scmp.le.s32.totalorder 2, %s15
    // Predicated region
    $region57: #{encoder_layer_forward.2} parent=5 // pred_check
      %p1914 = pneg %p1913
    $region58: #{encoder_layer_forward.2} parent=5 // pred_check_branch
      %1916 = sbr.rel (%p1914) target = $region60
    $region59: #{encoder_layer_forward.2} parent=5 // pred_region
      %s1917 = ssub.s32 %s15, 2
      // Predicated region
      $region61: #{encoder_layer_forward.2} parent=59 // pred_check
        %p1918 = pneg %p168
      $region62: #{encoder_layer_forward.2} parent=59 // pred_check_branch
        %1920 = sbr.rel (%p1918) target = $region64
      $region63: #{encoder_layer_forward.2} parent=59 // pred_region
        %p1921 = scmp.lt.s32.totalorder %s26, 1
        %s1922 = scalar_select %p1921, %s26, 1
        %p1923 = scmp.lt.s32.totalorder %s27, 3
        %s1924 = scalar_select %p1923, %s27, 3
        %s1925 = smul.addr %s1924, 16
        %s1926 = smul.addr %s1922, 64
        %s1927 = sadd.s32 %s1925, %s1926
        %s1928 = smul.addr %s1927, 8
        %s1929 = scalar_lea.vmem %s5, %s1928
      $region64: #{encoder_layer_forward.2} parent=59 // pred_fallthru
        _
      // Predicated region
      $region65: #{encoder_layer_forward.2} parent=59 // pred_check
        %p1930 = pneg %p196
      $region66: #{encoder_layer_forward.2} parent=59 // pred_check_branch
        %1932 = sbr.rel (%p1930) target = $region68
      $region67: #{encoder_layer_forward.2} parent=59 // pred_region
        %p1933 = scmp.lt.s32.totalorder %s26, 1
        %s1934 = scalar_select %p1933, %s26, 1
        %p1935 = scmp.lt.s32.totalorder %s27, 3
        %s1936 = scalar_select %p1935, %s27, 3
        %s1937 = smul.addr %s1936, 16
        %s1938 = smul.addr %s1934, 64
        %s1939 = sadd.s32 %s1937, %s1938
        %s1940 = smul.addr %s1939, 8
        %s1941 = scalar_lea.vmem %s6, %s1940
      $region68: #{encoder_layer_forward.2} parent=59 // pred_fallthru
        _
      // Predicated region
      $region69: #{encoder_layer_forward.2} parent=59 // pred_check
        %p1942 = pneg %p224
      $region70: #{encoder_layer_forward.2} parent=59 // pred_check_branch
        %1944 = sbr.rel (%p1942) target = $region72
      $region71: #{encoder_layer_forward.2} parent=59 // pred_region
        %p1945 = scmp.lt.s32.totalorder %s26, 1
        %s1946 = scalar_select %p1945, %s26, 1
        %p1947 = scmp.lt.s32.totalorder %s27, 3
        %s1948 = scalar_select %p1947, %s27, 3
        %s1949 = smul.addr %s1948, 16
        %s1950 = smul.addr %s1946, 64
        %s1951 = sadd.s32 %s1949, %s1950
        %s1952 = smul.addr %s1951, 8
        %s1953 = scalar_lea.vmem %s7, %s1952
      $region72: #{encoder_layer_forward.2} parent=59 // pred_fallthru
        _
      // Predicated region
      $region73: #{encoder_layer_forward.2} parent=59 // pred_check
        %p1954 = pneg %p252
      $region74: #{encoder_layer_forward.2} parent=59 // pred_check_branch
        %1956 = sbr.rel (%p1954) target = $region76
      $region75: #{encoder_layer_forward.2} parent=59 // pred_region
        %p1957 = scmp.lt.s32.totalorder %s26, 1
        %s1958 = scalar_select %p1957, %s26, 1
        %p1959 = scmp.lt.s32.totalorder %s27, 3
        %s1960 = scalar_select %p1959, %s27, 3
        %s1961 = smul.addr %s1960, 16
        %s1962 = smul.addr %s1958, 64
        %s1963 = sadd.s32 %s1961, %s1962
        %s1964 = smul.addr %s1963, 4
        %s1965 = scalar_lea.vmem %s8, %s1964
      $region76: #{encoder_layer_forward.2} parent=59 // pred_fallthru
        _
    $region60: #{encoder_layer_forward.2} parent=5 // pred_fallthru
      _
  $region6: #{encoder_layer_forward.2} parent=0 // loop_footer
    %s19 = sadd.s32 1, %s15
  $region7: #{encoder_layer_forward.2} parent=0 // loop_footer_branch
    %14 = sbr.rel target = $region3
  $region8: #{encoder_layer_forward.2} parent=0 // loop_exit
    _

// kernel: encoder_layer_forward.3
$region0: #{encoder_layer_forward.3}
  #allocation0 [shape = 'u32[]', space=smem, size = 0x4, offset = 0x4, fixed_abs, tag = 'smem constant byte address 0x4 - core index']
  #allocation1 [shape = 'u32[72,128]{1,0:T(1,128)}', space=vmem, size = 0x9000, scoped, tag = 'internal scratch']
  %s0 = inlined_call_operand.vmem [shape: f32[2,128,32], index: 0, kind: input, shape index: {}]
  %s1 = inlined_call_operand.vmem [shape: bf16[2,4,128,8], index: 1, kind: input, shape index: {}]
  %s2 = inlined_call_operand.vmem [shape: bf16[4,8,32], index: 2, kind: input, shape index: {}]
  %s3 = inlined_call_operand.vmem [shape: f32[1,32], index: 3, kind: input, shape index: {}]
  %s4 = inlined_call_operand.vmem [shape: f32[1,32], index: 4, kind: input, shape index: {}]
  %s5 = inlined_call_operand.vmem [shape: f32[1,32], index: 5, kind: input, shape index: {}]
  %s6 = inlined_call_operand.vmem [shape: f32[1,32], index: 6, kind: input, shape index: {}]
  %s7 = inlined_call_operand.vmem [shape: f32[1,32], index: 7, kind: input, shape index: {}]
  %s8 = inlined_call_operand.vmem [shape: bf16[32,128], index: 8, kind: input, shape index: {}]
  %s9 = inlined_call_operand.vmem [shape: f32[1,128], index: 9, kind: input, shape index: {}]
  %s10 = inlined_call_operand.vmem [shape: bf16[128,32], index: 10, kind: input, shape index: {}]
  %s11 = inlined_call_operand.vmem [shape: f32[1,32], index: 11, kind: input, shape index: {}]
  %s12 = inlined_call_operand.vmem [shape: f32[2,128,32], index: 12, kind: output, shape index: {}]
  %s13 = sld [smem:[#allocation0]]
  $region81: #{encoder_layer_forward.3} parent=0
    _
  %s15 = ssub.s32 1, %s13
  %s16 = scalar_select 0, %s15, %s13
  loop: start=0, step=1, limit=4
  $region2: #{encoder_layer_forward.3} parent=0 // loop_pre_header
    _
  $region3: #{encoder_layer_forward.3} parent=0 // loop_header
    %s18 = sphi 0, %s22
    %p19 = scmp.ge.s32.totalorder %s18, 4
    %s28 = sphi 0, %s30
    %s31 = sphi 0, %s28
    %s32 = sphi 0, %s31
    %s48 = sphi 0, %s32
    %s54 = sphi 0, %s56
    %s57 = sphi 0, %s54
    %s58 = sphi 0, %s57
    %s74 = sphi 0, %s58
    %s78 = sphi 0, %s78
    %s80 = sphi 0, %s78
    %s81 = sphi 0, %s80
    %s95 = sphi 0, %s81
    %s99 = sphi 0, %s99
    %s101 = sphi 0, %s99
    %s102 = sphi 0, %s101
    %s116 = sphi 0, %s102
    %s120 = sphi 0, %s120
    %s122 = sphi 0, %s120
    %s123 = sphi 0, %s122
    %s137 = sphi 0, %s123
    %s141 = sphi 0, %s141
    %s143 = sphi 0, %s141
    %s144 = sphi 0, %s143
    %s158 = sphi 0, %s144
    %s162 = sphi 0, %s162
    %s164 = sphi 0, %s162
    %s165 = sphi 0, %s164
    %s179 = sphi 0, %s165
    %s183 = sphi 0, %s183
    %s185 = sphi 0, %s183
    %s186 = sphi 0, %s185
    %s200 = sphi 0, %s186
    %s204 = sphi 0, %s204
    %s206 = sphi 0, %s204
    %s207 = sphi 0, %s206
    %s221 = sphi 0, %s207
    %s225 = sphi 0, %s225
    %s227 = sphi 0, %s225
    %s228 = sphi 0, %s227
    %s242 = sphi 0, %s228
    %s246 = sphi 0, %s246
    %s248 = sphi 0, %s246
    %s249 = sphi 0, %s248
    %s263 = sphi 0, %s249
    %s267 = sphi 0, %s267
    %s269 = sphi 0, %s267
    %s270 = sphi 0, %s269
    %s284 = sphi 0, %s270
    %s290 = sphi 0, %s292
    %s293 = sphi 0, %s290
    %s294 = sphi 0, %s293
    %s310 = sphi 0, %s294
  $region4: #{encoder_layer_forward.3} parent=0 // loop_header_branch
    %21 = sbr.rel (%p19) target = $region8
  $region5: #{encoder_layer_forward.3} parent=0 // loop_body
    %s23 = ssub.s32 %s18, 1
    %s24 = ssub.s32 %s18, 2
    %s25 = sadd.s32 %s18, 1
    %s26 = ssub.s32 %s18, %s25
    %p27 = scmp.eq.s32.totalorder %s26, 0
    %s29 = sadd.s32 %s28, 1
    %s30 = scalar_select %p27, %s28, %s29
    %p33 = pneg %p27
    %p34 = scmp.eq.s32.totalorder %s18, 1
    %p35 = por %p33, %p34
    %p36 = scmp.ne.s32.totalorder %s28, %s31
    %p37 = scmp.eq.s32.totalorder %s18, 0
    %p38 = por %p36, %p37
    %p39 = scmp.ne.s32.totalorder %s28, %s31
    %p40 = scmp.eq.s32.totalorder %s23, 1
    %p41 = por %p39, %p40
    %p42 = scmp.ne.s32.totalorder %s31, %s32
    %p43 = scmp.eq.s32.totalorder %s23, 0
    %p44 = por %p42, %p43
    %p45 = scmp.ne.s32.totalorder %s31, %s32
    %p46 = scmp.eq.s32.totalorder %s24, 1
    %p47 = por %p45, %p46
    %p49 = scmp.ne.s32.totalorder %s32, %s48
    %p50 = scmp.eq.s32.totalorder %s24, 0
    %p51 = por %p49, %p50
    %s52 = ssub.s32 %s18, %s25
    %p53 = scmp.eq.s32.totalorder %s52, 0
    %s55 = sadd.s32 %s54, 1
    %s56 = scalar_select %p53, %s54, %s55
    %p59 = pneg %p53
    %p60 = scmp.eq.s32.totalorder %s18, 1
    %p61 = por %p59, %p60
    %p62 = scmp.ne.s32.totalorder %s54, %s57
    %p63 = scmp.eq.s32.totalorder %s18, 0
    %p64 = por %p62, %p63
    %p65 = scmp.ne.s32.totalorder %s54, %s57
    %p66 = scmp.eq.s32.totalorder %s23, 1
    %p67 = por %p65, %p66
    %p68 = scmp.ne.s32.totalorder %s57, %s58
    %p69 = scmp.eq.s32.totalorder %s23, 0
    %p70 = por %p68, %p69
    %p71 = scmp.ne.s32.totalorder %s57, %s58
    %p72 = scmp.eq.s32.totalorder %s24, 1
    %p73 = por %p71, %p72
    %p75 = scmp.ne.s32.totalorder %s58, %s74
    %p76 = scmp.eq.s32.totalorder %s24, 0
    %p77 = por %p75, %p76
    %s79 = sadd.s32 %s78, 1
    %p82 = scmp.eq.s32.totalorder %s18, 1
    %p83 = scmp.ne.s32.totalorder %s78, %s80
    %p84 = scmp.eq.s32.totalorder %s18, 0
    %p85 = por %p83, %p84
    %p86 = scmp.ne.s32.totalorder %s78, %s80
    %p87 = scmp.eq.s32.totalorder %s23, 1
    %p88 = por %p86, %p87
    %p89 = scmp.ne.s32.totalorder %s80, %s81
    %p90 = scmp.eq.s32.totalorder %s23, 0
    %p91 = por %p89, %p90
    %p92 = scmp.ne.s32.totalorder %s80, %s81
    %p93 = scmp.eq.s32.totalorder %s24, 1
    %p94 = por %p92, %p93
    %p96 = scmp.ne.s32.totalorder %s81, %s95
    %p97 = scmp.eq.s32.totalorder %s24, 0
    %p98 = por %p96, %p97
    %s100 = sadd.s32 %s99, 1
    %p103 = scmp.eq.s32.totalorder %s18, 1
    %p104 = scmp.ne.s32.totalorder %s99, %s101
    %p105 = scmp.eq.s32.totalorder %s18, 0
    %p106 = por %p104, %p105
    %p107 = scmp.ne.s32.totalorder %s99, %s101
    %p108 = scmp.eq.s32.totalorder %s23, 1
    %p109 = por %p107, %p108
    %p110 = scmp.ne.s32.totalorder %s101, %s102
    %p111 = scmp.eq.s32.totalorder %s23, 0
    %p112 = por %p110, %p111
    %p113 = scmp.ne.s32.totalorder %s101, %s102
    %p114 = scmp.eq.s32.totalorder %s24, 1
    %p115 = por %p113, %p114
    %p117 = scmp.ne.s32.totalorder %s102, %s116
    %p118 = scmp.eq.s32.totalorder %s24, 0
    %p119 = por %p117, %p118
    %s121 = sadd.s32 %s120, 1
    %p124 = scmp.eq.s32.totalorder %s18, 1
    %p125 = scmp.ne.s32.totalorder %s120, %s122
    %p126 = scmp.eq.s32.totalorder %s18, 0
    %p127 = por %p125, %p126
    %p128 = scmp.ne.s32.totalorder %s120, %s122
    %p129 = scmp.eq.s32.totalorder %s23, 1
    %p130 = por %p128, %p129
    %p131 = scmp.ne.s32.totalorder %s122, %s123
    %p132 = scmp.eq.s32.totalorder %s23, 0
    %p133 = por %p131, %p132
    %p134 = scmp.ne.s32.totalorder %s122, %s123
    %p135 = scmp.eq.s32.totalorder %s24, 1
    %p136 = por %p134, %p135
    %p138 = scmp.ne.s32.totalorder %s123, %s137
    %p139 = scmp.eq.s32.totalorder %s24, 0
    %p140 = por %p138, %p139
    %s142 = sadd.s32 %s141, 1
    %p145 = scmp.eq.s32.totalorder %s18, 1
    %p146 = scmp.ne.s32.totalorder %s141, %s143
    %p147 = scmp.eq.s32.totalorder %s18, 0
    %p148 = por %p146, %p147
    %p149 = scmp.ne.s32.totalorder %s141, %s143
    %p150 = scmp.eq.s32.totalorder %s23, 1
    %p151 = por %p149, %p150
    %p152 = scmp.ne.s32.totalorder %s143, %s144
    %p153 = scmp.eq.s32.totalorder %s23, 0
    %p154 = por %p152, %p153
    %p155 = scmp.ne.s32.totalorder %s143, %s144
    %p156 = scmp.eq.s32.totalorder %s24, 1
    %p157 = por %p155, %p156
    %p159 = scmp.ne.s32.totalorder %s144, %s158
    %p160 = scmp.eq.s32.totalorder %s24, 0
    %p161 = por %p159, %p160
    %s163 = sadd.s32 %s162, 1
    %p166 = scmp.eq.s32.totalorder %s18, 1
    %p167 = scmp.ne.s32.totalorder %s162, %s164
    %p168 = scmp.eq.s32.totalorder %s18, 0
    %p169 = por %p167, %p168
    %p170 = scmp.ne.s32.totalorder %s162, %s164
    %p171 = scmp.eq.s32.totalorder %s23, 1
    %p172 = por %p170, %p171
    %p173 = scmp.ne.s32.totalorder %s164, %s165
    %p174 = scmp.eq.s32.totalorder %s23, 0
    %p175 = por %p173, %p174
    %p176 = scmp.ne.s32.totalorder %s164, %s165
    %p177 = scmp.eq.s32.totalorder %s24, 1
    %p178 = por %p176, %p177
    %p180 = scmp.ne.s32.totalorder %s165, %s179
    %p181 = scmp.eq.s32.totalorder %s24, 0
    %p182 = por %p180, %p181
    %s184 = sadd.s32 %s183, 1
    %p187 = scmp.eq.s32.totalorder %s18, 1
    %p188 = scmp.ne.s32.totalorder %s183, %s185
    %p189 = scmp.eq.s32.totalorder %s18, 0
    %p190 = por %p188, %p189
    %p191 = scmp.ne.s32.totalorder %s183, %s185
    %p192 = scmp.eq.s32.totalorder %s23, 1
    %p193 = por %p191, %p192
    %p194 = scmp.ne.s32.totalorder %s185, %s186
    %p195 = scmp.eq.s32.totalorder %s23, 0
    %p196 = por %p194, %p195
    %p197 = scmp.ne.s32.totalorder %s185, %s186
    %p198 = scmp.eq.s32.totalorder %s24, 1
    %p199 = por %p197, %p198
    %p201 = scmp.ne.s32.totalorder %s186, %s200
    %p202 = scmp.eq.s32.totalorder %s24, 0
    %p203 = por %p201, %p202
    %s205 = sadd.s32 %s204, 1
    %p208 = scmp.eq.s32.totalorder %s18, 1
    %p209 = scmp.ne.s32.totalorder %s204, %s206
    %p210 = scmp.eq.s32.totalorder %s18, 0
    %p211 = por %p209, %p210
    %p212 = scmp.ne.s32.totalorder %s204, %s206
    %p213 = scmp.eq.s32.totalorder %s23, 1
    %p214 = por %p212, %p213
    %p215 = scmp.ne.s32.totalorder %s206, %s207
    %p216 = scmp.eq.s32.totalorder %s23, 0
    %p217 = por %p215, %p216
    %p218 = scmp.ne.s32.totalorder %s206, %s207
    %p219 = scmp.eq.s32.totalorder %s24, 1
    %p220 = por %p218, %p219
    %p222 = scmp.ne.s32.totalorder %s207, %s221
    %p223 = scmp.eq.s32.totalorder %s24, 0
    %p224 = por %p222, %p223
    %s226 = sadd.s32 %s225, 1
    %p229 = scmp.eq.s32.totalorder %s18, 1
    %p230 = scmp.ne.s32.totalorder %s225, %s227
    %p231 = scmp.eq.s32.totalorder %s18, 0
    %p232 = por %p230, %p231
    %p233 = scmp.ne.s32.totalorder %s225, %s227
    %p234 = scmp.eq.s32.totalorder %s23, 1
    %p235 = por %p233, %p234
    %p236 = scmp.ne.s32.totalorder %s227, %s228
    %p237 = scmp.eq.s32.totalorder %s23, 0
    %p238 = por %p236, %p237
    %p239 = scmp.ne.s32.totalorder %s227, %s228
    %p240 = scmp.eq.s32.totalorder %s24, 1
    %p241 = por %p239, %p240
    %p243 = scmp.ne.s32.totalorder %s228, %s242
    %p244 = scmp.eq.s32.totalorder %s24, 0
    %p245 = por %p243, %p244
    %s247 = sadd.s32 %s246, 1
    %p250 = scmp.eq.s32.totalorder %s18, 1
    %p251 = scmp.ne.s32.totalorder %s246, %s248
    %p252 = scmp.eq.s32.totalorder %s18, 0
    %p253 = por %p251, %p252
    %p254 = scmp.ne.s32.totalorder %s246, %s248
    %p255 = scmp.eq.s32.totalorder %s23, 1
    %p256 = por %p254, %p255
    %p257 = scmp.ne.s32.totalorder %s248, %s249
    %p258 = scmp.eq.s32.totalorder %s23, 0
    %p259 = por %p257, %p258
    %p260 = scmp.ne.s32.totalorder %s248, %s249
    %p261 = scmp.eq.s32.totalorder %s24, 1
    %p262 = por %p260, %p261
    %p264 = scmp.ne.s32.totalorder %s249, %s263
    %p265 = scmp.eq.s32.totalorder %s24, 0
    %p266 = por %p264, %p265
    %s268 = sadd.s32 %s267, 1
    %p271 = scmp.eq.s32.totalorder %s18, 1
    %p272 = scmp.ne.s32.totalorder %s267, %s269
    %p273 = scmp.eq.s32.totalorder %s18, 0
    %p274 = por %p272, %p273
    %p275 = scmp.ne.s32.totalorder %s267, %s269
    %p276 = scmp.eq.s32.totalorder %s23, 1
    %p277 = por %p275, %p276
    %p278 = scmp.ne.s32.totalorder %s269, %s270
    %p279 = scmp.eq.s32.totalorder %s23, 0
    %p280 = por %p278, %p279
    %p281 = scmp.ne.s32.totalorder %s269, %s270
    %p282 = scmp.eq.s32.totalorder %s24, 1
    %p283 = por %p281, %p282
    %p285 = scmp.ne.s32.totalorder %s270, %s284
    %p286 = scmp.eq.s32.totalorder %s24, 0
    %p287 = por %p285, %p286
    %s288 = ssub.s32 %s18, %s25
    %p289 = scmp.eq.s32.totalorder %s288, 0
    %s291 = sadd.s32 %s290, 1
    %s292 = scalar_select %p289, %s290, %s291
    %p295 = pneg %p289
    %p296 = scmp.eq.s32.totalorder %s18, 1
    %p297 = por %p295, %p296
    %p298 = scmp.ne.s32.totalorder %s290, %s293
    %p299 = scmp.eq.s32.totalorder %s18, 0
    %p300 = por %p298, %p299
    %p301 = scmp.ne.s32.totalorder %s290, %s293
    %p302 = scmp.eq.s32.totalorder %s23, 1
    %p303 = por %p301, %p302
    %p304 = scmp.ne.s32.totalorder %s293, %s294
    %p305 = scmp.eq.s32.totalorder %s23, 0
    %p306 = por %p304, %p305
    %p307 = scmp.ne.s32.totalorder %s293, %s294
    %p308 = scmp.eq.s32.totalorder %s24, 1
    %p309 = por %p307, %p308
    %p311 = scmp.ne.s32.totalorder %s294, %s310
    %p312 = scmp.eq.s32.totalorder %s24, 0
    %p313 = por %p311, %p312
    %p314 = scmp.le.s32.totalorder 1, %s18
    %p315 = scmp.lt.s32.totalorder %s18, 3
    %p316 = pnand %p314, %p315
    %p317 = pneg %p316
    // Predicated region
    $region9: #{encoder_layer_forward.3} parent=5 // pred_check
      _
    $region10: #{encoder_layer_forward.3} parent=5 // pred_check_branch
      %319 = sbr.rel (%p316) target = $region12
    $region11: #{encoder_layer_forward.3} parent=5 // pred_region
      %s320 = ssub.s32 %s18, 1
      // Predicated region
      $region13: #{encoder_layer_forward.3} parent=11 // pred_check
        %p321 = pneg %p91
      $region14: #{encoder_layer_forward.3} parent=11 // pred_check_branch
        %323 = sbr.rel (%p321) target = $region16
      $region15: #{encoder_layer_forward.3} parent=11 // pred_region
        _
      $region16: #{encoder_layer_forward.3} parent=11 // pred_fallthru
        _
      // Predicated region
      $region17: #{encoder_layer_forward.3} parent=11 // pred_check
        %p324 = pneg %p112
      $region18: #{encoder_layer_forward.3} parent=11 // pred_check_branch
        %326 = sbr.rel (%p324) target = $region20
      $region19: #{encoder_layer_forward.3} parent=11 // pred_region
        _
      $region20: #{encoder_layer_forward.3} parent=11 // pred_fallthru
        _
      // Predicated region
      $region21: #{encoder_layer_forward.3} parent=11 // pred_check
        %p327 = pneg %p133
      $region22: #{encoder_layer_forward.3} parent=11 // pred_check_branch
        %329 = sbr.rel (%p327) target = $region24
      $region23: #{encoder_layer_forward.3} parent=11 // pred_region
        _
      $region24: #{encoder_layer_forward.3} parent=11 // pred_fallthru
        _
      // Predicated region
      $region25: #{encoder_layer_forward.3} parent=11 // pred_check
        %p330 = pneg %p154
      $region26: #{encoder_layer_forward.3} parent=11 // pred_check_branch
        %332 = sbr.rel (%p330) target = $region28
      $region27: #{encoder_layer_forward.3} parent=11 // pred_region
        _
      $region28: #{encoder_layer_forward.3} parent=11 // pred_fallthru
        _
      // Predicated region
      $region29: #{encoder_layer_forward.3} parent=11 // pred_check
        %p333 = pneg %p175
      $region30: #{encoder_layer_forward.3} parent=11 // pred_check_branch
        %335 = sbr.rel (%p333) target = $region32
      $region31: #{encoder_layer_forward.3} parent=11 // pred_region
        _
      $region32: #{encoder_layer_forward.3} parent=11 // pred_fallthru
        _
      // Predicated region
      $region33: #{encoder_layer_forward.3} parent=11 // pred_check
        %p336 = pneg %p196
      $region34: #{encoder_layer_forward.3} parent=11 // pred_check_branch
        %338 = sbr.rel (%p336) target = $region36
      $region35: #{encoder_layer_forward.3} parent=11 // pred_region
        _
      $region36: #{encoder_layer_forward.3} parent=11 // pred_fallthru
        _
      // Predicated region
      $region37: #{encoder_layer_forward.3} parent=11 // pred_check
        %p339 = pneg %p217
      $region38: #{encoder_layer_forward.3} parent=11 // pred_check_branch
        %341 = sbr.rel (%p339) target = $region40
      $region39: #{encoder_layer_forward.3} parent=11 // pred_region
        _
      $region40: #{encoder_layer_forward.3} parent=11 // pred_fallthru
        _
      // Predicated region
      $region41: #{encoder_layer_forward.3} parent=11 // pred_check
        %p342 = pneg %p238
      $region42: #{encoder_layer_forward.3} parent=11 // pred_check_branch
        %344 = sbr.rel (%p342) target = $region44
      $region43: #{encoder_layer_forward.3} parent=11 // pred_region
        _
      $region44: #{encoder_layer_forward.3} parent=11 // pred_fallthru
        _
      // Predicated region
      $region45: #{encoder_layer_forward.3} parent=11 // pred_check
        %p345 = pneg %p259
      $region46: #{encoder_layer_forward.3} parent=11 // pred_check_branch
        %347 = sbr.rel (%p345) target = $region48
      $region47: #{encoder_layer_forward.3} parent=11 // pred_region
        _
      $region48: #{encoder_layer_forward.3} parent=11 // pred_fallthru
        _
      // Predicated region
      $region49: #{encoder_layer_forward.3} parent=11 // pred_check
        %p348 = pneg %p280
      $region50: #{encoder_layer_forward.3} parent=11 // pred_check_branch
        %350 = sbr.rel (%p348) target = $region52
      $region51: #{encoder_layer_forward.3} parent=11 // pred_region
        _
      $region52: #{encoder_layer_forward.3} parent=11 // pred_fallthru
        _
    $region12: #{encoder_layer_forward.3} parent=5 // pred_fallthru
      _
    %p351 = scmp.lt.s32.totalorder %s18, 2
    // Predicated region
    $region53: #{encoder_layer_forward.3} parent=5 // pred_check
      %p352 = pneg %p351
    $region54: #{encoder_layer_forward.3} parent=5 // pred_check_branch
      %354 = sbr.rel (%p352) target = $region56
    $region55: #{encoder_layer_forward.3} parent=5 // pred_region
      // Predicated region
      $region57: #{encoder_layer_forward.3} parent=55 // pred_check
        %p355 = pneg %p38
      $region58: #{encoder_layer_forward.3} parent=55 // pred_check_branch
        %357 = sbr.rel (%p355) target = $region60
      $region59: #{encoder_layer_forward.3} parent=55 // pred_region
        %p358 = scmp.lt.s32.totalorder %s18, 1
        %s359 = scalar_select %p358, %s18, 1
        %s360 = smul.addr %s359, 16
        %s361 = smul.addr %s360, 8
        %s362 = scalar_lea.vmem %s0, %s361
      $region60: #{encoder_layer_forward.3} parent=55 // pred_fallthru
        _
      // Predicated region
      $region61: #{encoder_layer_forward.3} parent=55 // pred_check
        %p363 = pneg %p64
      $region62: #{encoder_layer_forward.3} parent=55 // pred_check_branch
        %365 = sbr.rel (%p363) target = $region64
      $region63: #{encoder_layer_forward.3} parent=55 // pred_region
        %p366 = scmp.lt.s32.totalorder %s18, 1
        %s367 = scalar_select %p366, %s18, 1
        %s368 = smul.addr %s367, 64
        %s369 = smul.addr %s368, 4
        %s370 = scalar_lea.vmem %s1, %s369
      $region64: #{encoder_layer_forward.3} parent=55 // pred_fallthru
        _
    $region56: #{encoder_layer_forward.3} parent=5 // pred_fallthru
      _
    %p371 = scmp.le.s32.totalorder 1, %s18
    %p372 = scmp.lt.s32.totalorder %s18, 3
    %p373 = pnand %p371, %p372
    %p374 = pneg %p373
    // Predicated region
    $region65: #{encoder_layer_forward.3} parent=5 // pred_check
      _
    $region66: #{encoder_layer_forward.3} parent=5 // pred_check_branch
      %376 = sbr.rel (%p373) target = $region68
    $region67: #{encoder_layer_forward.3} parent=5 // pred_region
      %s377 = ssub.s32 %s18, 1
      %p378 = scmp.lt.s32.totalorder %s23, 1
      %s379 = scalar_select %p378, %s23, 1
      %s380 = smul.addr %s379, 16
      %s381 = smul.addr %s380, 8
      %s382 = scalar_lea.vmem %s0, %s381
      %p383 = pneg %p44
      %p384 = pneg %p41
      %p385 = scmp.lt.s32.totalorder %s23, 1
      %s386 = scalar_select %p385, %s23, 1
      %s387 = smul.addr %s386, 64
      %s388 = smul.addr %s387, 4
      %s389 = scalar_lea.vmem %s1, %s388
      %p390 = pneg %p70
      %p391 = pneg %p67
      %p392 = pneg %p91
      %p393 = pneg %p88
      %p394 = pneg %p112
      %p395 = pneg %p109
      %p396 = pneg %p133
      %p397 = pneg %p130
      %p398 = pneg %p154
      %p399 = pneg %p151
      %p400 = pneg %p175
      %p401 = pneg %p172
      %p402 = pneg %p196
      %p403 = pneg %p193
      %p404 = pneg %p217
      %p405 = pneg %p214
      %p406 = pneg %p238
      %p407 = pneg %p235
      %p408 = pneg %p259
      %p409 = pneg %p256
      %p410 = pneg %p280
      %p411 = pneg %p277
      %p412 = pneg %p306
      %p413 = pneg %p303
      %p414 = scmp.lt.s32.totalorder %s23, 1
      %s415 = scalar_select %p414, %s23, 1
      %s416 = smul.addr %s415, 16
      %s417 = smul.addr %s416, 8
      %s418 = scalar_lea.vmem %s12, %s417
      %p419 = scmp.lt.s32.totalorder %s23, 1
      %s420 = scalar_select %p419, %s23, 1
      %s421 = smul.addr %s420, 16
      %s422 = smul.addr %s421, 8
      %s423 = scalar_lea.vmem %s0, %s422
      %p424 = scmp.lt.s32.totalorder %s23, 1
      %s425 = scalar_select %p424, %s23, 1
      %s426 = smul.addr %s425, 64
      %s427 = smul.addr %s426, 4
      %s428 = scalar_lea.vmem %s1, %s427
      %p429 = scmp.lt.s32.totalorder %s23, 1
      %s430 = scalar_select %p429, %s23, 1
      %s431 = smul.addr %s430, 16
      %s432 = smul.addr %s431, 8
      %s433 = scalar_lea.vmem %s12, %s432
      %v435 = vld [vmem:[%s423] sm:$0xff]
      %v436 = vld [vmem:[%s423 + $0x8] sm:$0xff]
      %v437 = vld [vmem:[%s423 + $0x10] sm:$0xff]
      %v438 = vld [vmem:[%s423 + $0x18] sm:$0xff]
      %v439 = vld [vmem:[%s423 + $0x20] sm:$0xff]
      %v440 = vld [vmem:[%s423 + $0x28] sm:$0xff]
      %v441 = vld [vmem:[%s423 + $0x30] sm:$0xff]
      %v442 = vld [vmem:[%s423 + $0x38] sm:$0xff]
      %v443 = vld [vmem:[%s423 + $0x40] sm:$0xff]
      %v444 = vld [vmem:[%s423 + $0x48] sm:$0xff]
      %v445 = vld [vmem:[%s423 + $0x50] sm:$0xff]
      %v446 = vld [vmem:[%s423 + $0x58] sm:$0xff]
      %v447 = vld [vmem:[%s423 + $0x60] sm:$0xff]
      %v448 = vld [vmem:[%s423 + $0x68] sm:$0xff]
      %v449 = vld [vmem:[%s423 + $0x70] sm:$0xff]
      %v450 = vld [vmem:[%s423 + $0x78] sm:$0xff]
      %v451 = vld [vmem:[%s428] sm:$0xf]
      %v452 = vld [vmem:[%s428 + $0x4] sm:$0xf]
      %v453 = vld [vmem:[%s428 + $0x8] sm:$0xf]
      %v454 = vld [vmem:[%s428 + $0xc] sm:$0xf]
      %v455 = vld [vmem:[%s428 + $0x10] sm:$0xf]
      %v456 = vld [vmem:[%s428 + $0x14] sm:$0xf]
      %v457 = vld [vmem:[%s428 + $0x18] sm:$0xf]
      %v458 = vld [vmem:[%s428 + $0x1c] sm:$0xf]
      %v459 = vld [vmem:[%s428 + $0x20] sm:$0xf]
      %v460 = vld [vmem:[%s428 + $0x24] sm:$0xf]
      %v461 = vld [vmem:[%s428 + $0x28] sm:$0xf]
      %v462 = vld [vmem:[%s428 + $0x2c] sm:$0xf]
      %v463 = vld [vmem:[%s428 + $0x30] sm:$0xf]
      %v464 = vld [vmem:[%s428 + $0x34] sm:$0xf]
      %v465 = vld [vmem:[%s428 + $0x38] sm:$0xf]
      %v466 = vld [vmem:[%s428 + $0x3c] sm:$0xf]
      %v467 = vld [vmem:[%s2] sm:$0xf]
      %s468 = scalar_lea.vmem %s428, 64
      %v469 = vld [vmem:[%s468] sm:$0xf]
      %v470 = vld [vmem:[%s468 + $0x4] sm:$0xf]
      %v471 = vld [vmem:[%s468 + $0x8] sm:$0xf]
      %v472 = vld [vmem:[%s468 + $0xc] sm:$0xf]
      %v473 = vld [vmem:[%s468 + $0x10] sm:$0xf]
      %v474 = vld [vmem:[%s468 + $0x14] sm:$0xf]
      %v475 = vld [vmem:[%s468 + $0x18] sm:$0xf]
      %v476 = vld [vmem:[%s468 + $0x1c] sm:$0xf]
      %v477 = vld [vmem:[%s468 + $0x20] sm:$0xf]
      %v478 = vld [vmem:[%s468 + $0x24] sm:$0xf]
      %v479 = vld [vmem:[%s468 + $0x28] sm:$0xf]
      %v480 = vld [vmem:[%s468 + $0x2c] sm:$0xf]
      %v481 = vld [vmem:[%s468 + $0x30] sm:$0xf]
      %v482 = vld [vmem:[%s468 + $0x34] sm:$0xf]
      %v483 = vld [vmem:[%s468 + $0x38] sm:$0xf]
      %v484 = vld [vmem:[%s468 + $0x3c] sm:$0xf]
      %s485 = scalar_lea.vmem %s2, 4
      %v486 = vld [vmem:[%s485] sm:$0xf]
      %v503 = vunpack.c.l.b16 %v469
      %v504 = vunpack.c.l.b16 %v470
      %v505 = vunpack.c.l.b16 %v471
      %v506 = vunpack.c.l.b16 %v472
      %v507 = vunpack.c.l.b16 %v473
      %v508 = vunpack.c.l.b16 %v474
      %v509 = vunpack.c.l.b16 %v475
      %v510 = vunpack.c.l.b16 %v476
      %v511 = vunpack.c.l.b16 %v477
      %v512 = vunpack.c.l.b16 %v478
      %v513 = vunpack.c.l.b16 %v479
      %v514 = vunpack.c.l.b16 %v480
      %v515 = vunpack.c.l.b16 %v481
      %v516 = vunpack.c.l.b16 %v482
      %v517 = vunpack.c.l.b16 %v483
      %v518 = vunpack.c.l.b16 %v484
      %v519 = vpack.c.b16 %v504, %v503
      %v520 = vpack.c.b16 %v506, %v505
      %v521 = vpack.c.b16 %v508, %v507
      %v522 = vpack.c.b16 %v510, %v509
      %v523 = vpack.c.b16 %v512, %v511
      %v524 = vpack.c.b16 %v514, %v513
      %v525 = vpack.c.b16 %v516, %v515
      %v526 = vpack.c.b16 %v518, %v517
      %vm527 = vcmask 64512
      %v529 = vsel %vm527, %v519, 0
      %v532 = vsel %vm527, %v520, 0
      %v535 = vsel %vm527, %v521, 0
      %v538 = vsel %vm527, %v522, 0
      %v541 = vsel %vm527, %v523, 0
      %v544 = vsel %vm527, %v524, 0
      %v547 = vsel %vm527, %v525, 0
      %v550 = vsel %vm527, %v526, 0
      %vm552 = vcmask 1043456
      %v554 = vsel %vm552, %v486, 0
      %556 = vmatpush.bf16.msra.mxu0 0
      %557 = vmatpush.bf16.msra.mxu0 0
      %558 = vmatpush.bf16.msra.mxu0 0
      %559 = vmatpush.bf16.msra.mxu0 0
      %560 = vmatpush.bf16.msra.mxu0 0
      %561 = vmatpush.bf16.msra.mxu0 0
      %562 = vmatpush.bf16.msra.mxu0 0
      %563 = vmatpush.bf16.msra.mxu0 %v554
      %564 = vmatmul.bf16.gmra.mxu0 %v529
      %v565 = vpop.f32.mrf.mxu0
      %v566 = vadd.f32 0.0, %v565
      %v567 = vpop.f32.mrf.mxu0
      %v568 = vadd.f32 0.0, %v567
      %569 = vmatmul.bf16.gmra.mxu0 %v532
      %v570 = vpop.f32.mrf.mxu0
      %v571 = vadd.f32 0.0, %v570
      %v572 = vpop.f32.mrf.mxu0
      %v573 = vadd.f32 0.0, %v572
      %574 = vmatmul.bf16.gmra.mxu0 %v535
      %v575 = vpop.f32.mrf.mxu0
      %v576 = vadd.f32 0.0, %v575
      %v577 = vpop.f32.mrf.mxu0
      %v578 = vadd.f32 0.0, %v577
      %579 = vmatmul.bf16.gmra.mxu0 %v538
      %v580 = vpop.f32.mrf.mxu0
      %v581 = vadd.f32 0.0, %v580
      %v582 = vpop.f32.mrf.mxu0
      %v583 = vadd.f32 0.0, %v582
      %584 = vmatmul.bf16.gmra.mxu0 %v541
      %v585 = vpop.f32.mrf.mxu0
      %v586 = vadd.f32 0.0, %v585
      %v587 = vpop.f32.mrf.mxu0
      %v588 = vadd.f32 0.0, %v587
      %589 = vmatmul.bf16.gmra.mxu0 %v544
      %v590 = vpop.f32.mrf.mxu0
      %v591 = vadd.f32 0.0, %v590
      %v592 = vpop.f32.mrf.mxu0
      %v593 = vadd.f32 0.0, %v592
      %594 = vmatmul.bf16.gmra.mxu0 %v547
      %v595 = vpop.f32.mrf.mxu0
      %v596 = vadd.f32 0.0, %v595
      %v597 = vpop.f32.mrf.mxu0
      %v598 = vadd.f32 0.0, %v597
      %599 = vmatmul.bf16.gmra.mxu0 %v550
      %v600 = vpop.f32.mrf.mxu0
      %v601 = vadd.f32 0.0, %v600
      %v602 = vpop.f32.mrf.mxu0
      %v603 = vadd.f32 0.0, %v602
      %604 = vdwg.mxu0
      %v621 = vunpack.c.l.b16 %v451
      %v622 = vunpack.c.l.b16 %v452
      %v623 = vunpack.c.l.b16 %v453
      %v624 = vunpack.c.l.b16 %v454
      %v625 = vunpack.c.l.b16 %v455
      %v626 = vunpack.c.l.b16 %v456
      %v627 = vunpack.c.l.b16 %v457
      %v628 = vunpack.c.l.b16 %v458
      %v629 = vunpack.c.l.b16 %v459
      %v630 = vunpack.c.l.b16 %v460
      %v631 = vunpack.c.l.b16 %v461
      %v632 = vunpack.c.l.b16 %v462
      %v633 = vunpack.c.l.b16 %v463
      %v634 = vunpack.c.l.b16 %v464
      %v635 = vunpack.c.l.b16 %v465
      %v636 = vunpack.c.l.b16 %v466
      %v637 = vpack.c.b16 %v622, %v621
      %v638 = vpack.c.b16 %v624, %v623
      %v639 = vpack.c.b16 %v626, %v625
      %v640 = vpack.c.b16 %v628, %v627
      %v641 = vpack.c.b16 %v630, %v629
      %v642 = vpack.c.b16 %v632, %v631
      %v643 = vpack.c.b16 %v634, %v633
      %v644 = vpack.c.b16 %v636, %v635
      %v646 = vsel %vm527, %v637, 0
      %v649 = vsel %vm527, %v638, 0
      %v652 = vsel %vm527, %v639, 0
      %v655 = vsel %vm527, %v640, 0
      %v658 = vsel %vm527, %v641, 0
      %v661 = vsel %vm527, %v642, 0
      %v664 = vsel %vm527, %v643, 0
      %v667 = vsel %vm527, %v644, 0
      %v670 = vsel %vm552, %v467, 0
      %672 = vmatpush.bf16.msra.mxu0 0
      %673 = vmatpush.bf16.msra.mxu0 0
      %674 = vmatpush.bf16.msra.mxu0 0
      %675 = vmatpush.bf16.msra.mxu0 0
      %676 = vmatpush.bf16.msra.mxu0 0
      %677 = vmatpush.bf16.msra.mxu0 0
      %678 = vmatpush.bf16.msra.mxu0 0
      %679 = vmatpush.bf16.msra.mxu0 %v670
      %680 = vmatmul.bf16.gmra.mxu0 %v646
      %v681 = vpop.f32.mrf.mxu0
      %v682 = vadd.f32 %v566, %v681
      %v683 = vpop.f32.mrf.mxu0
      %v684 = vadd.f32 %v568, %v683
      %685 = vmatmul.bf16.gmra.mxu0 %v649
      %v686 = vpop.f32.mrf.mxu0
      %v687 = vadd.f32 %v571, %v686
      %v688 = vpop.f32.mrf.mxu0
      %v689 = vadd.f32 %v573, %v688
      %690 = vmatmul.bf16.gmra.mxu0 %v652
      %v691 = vpop.f32.mrf.mxu0
      %v692 = vadd.f32 %v576, %v691
      %v693 = vpop.f32.mrf.mxu0
      %v694 = vadd.f32 %v578, %v693
      %695 = vmatmul.bf16.gmra.mxu0 %v655
      %v696 = vpop.f32.mrf.mxu0
      %v697 = vadd.f32 %v581, %v696
      %v698 = vpop.f32.mrf.mxu0
      %v699 = vadd.f32 %v583, %v698
      %700 = vmatmul.bf16.gmra.mxu0 %v658
      %v701 = vpop.f32.mrf.mxu0
      %v702 = vadd.f32 %v586, %v701
      %v703 = vpop.f32.mrf.mxu0
      %v704 = vadd.f32 %v588, %v703
      %705 = vmatmul.bf16.gmra.mxu0 %v661
      %v706 = vpop.f32.mrf.mxu0
      %v707 = vadd.f32 %v591, %v706
      %v708 = vpop.f32.mrf.mxu0
      %v709 = vadd.f32 %v593, %v708
      %710 = vmatmul.bf16.gmra.mxu0 %v664
      %v711 = vpop.f32.mrf.mxu0
      %v712 = vadd.f32 %v596, %v711
      %v713 = vpop.f32.mrf.mxu0
      %v714 = vadd.f32 %v598, %v713
      %715 = vmatmul.bf16.gmra.mxu0 %v667
      %v716 = vpop.f32.mrf.mxu0
      %v717 = vadd.f32 %v601, %v716
      %v718 = vpop.f32.mrf.mxu0
      %v719 = vadd.f32 %v603, %v718
      %720 = vdwg.mxu0
      %s721 = scalar_lea.vmem %s428, 128
      %v722 = vld [vmem:[%s721] sm:$0xf]
      %v723 = vld [vmem:[%s721 + $0x4] sm:$0xf]
      %v724 = vld [vmem:[%s721 + $0x8] sm:$0xf]
      %v725 = vld [vmem:[%s721 + $0xc] sm:$0xf]
      %v726 = vld [vmem:[%s721 + $0x10] sm:$0xf]
      %v727 = vld [vmem:[%s721 + $0x14] sm:$0xf]
      %v728 = vld [vmem:[%s721 + $0x18] sm:$0xf]
      %v729 = vld [vmem:[%s721 + $0x1c] sm:$0xf]
      %v730 = vld [vmem:[%s721 + $0x20] sm:$0xf]
      %v731 = vld [vmem:[%s721 + $0x24] sm:$0xf]
      %v732 = vld [vmem:[%s721 + $0x28] sm:$0xf]
      %v733 = vld [vmem:[%s721 + $0x2c] sm:$0xf]
      %v734 = vld [vmem:[%s721 + $0x30] sm:$0xf]
      %v735 = vld [vmem:[%s721 + $0x34] sm:$0xf]
      %v736 = vld [vmem:[%s721 + $0x38] sm:$0xf]
      %v737 = vld [vmem:[%s721 + $0x3c] sm:$0xf]
      %s738 = scalar_lea.vmem %s2, 8
      %v739 = vld [vmem:[%s738] sm:$0xf]
      %v756 = vunpack.c.l.b16 %v722
      %v757 = vunpack.c.l.b16 %v723
      %v758 = vunpack.c.l.b16 %v724
      %v759 = vunpack.c.l.b16 %v725
      %v760 = vunpack.c.l.b16 %v726
      %v761 = vunpack.c.l.b16 %v727
      %v762 = vunpack.c.l.b16 %v728
      %v763 = vunpack.c.l.b16 %v729
      %v764 = vunpack.c.l.b16 %v730
      %v765 = vunpack.c.l.b16 %v731
      %v766 = vunpack.c.l.b16 %v732
      %v767 = vunpack.c.l.b16 %v733
      %v768 = vunpack.c.l.b16 %v734
      %v769 = vunpack.c.l.b16 %v735
      %v770 = vunpack.c.l.b16 %v736
      %v771 = vunpack.c.l.b16 %v737
      %v772 = vpack.c.b16 %v757, %v756
      %v773 = vpack.c.b16 %v759, %v758
      %v774 = vpack.c.b16 %v761, %v760
      %v775 = vpack.c.b16 %v763, %v762
      %v776 = vpack.c.b16 %v765, %v764
      %v777 = vpack.c.b16 %v767, %v766
      %v778 = vpack.c.b16 %v769, %v768
      %v779 = vpack.c.b16 %v771, %v770
      %v781 = vsel %vm527, %v772, 0
      %v784 = vsel %vm527, %v773, 0
      %v787 = vsel %vm527, %v774, 0
      %v790 = vsel %vm527, %v775, 0
      %v793 = vsel %vm527, %v776, 0
      %v796 = vsel %vm527, %v777, 0
      %v799 = vsel %vm527, %v778, 0
      %v802 = vsel %vm527, %v779, 0
      %v805 = vsel %vm552, %v739, 0
      %807 = vmatpush.bf16.msra.mxu0 0
      %808 = vmatpush.bf16.msra.mxu0 0
      %809 = vmatpush.bf16.msra.mxu0 0
      %810 = vmatpush.bf16.msra.mxu0 0
      %811 = vmatpush.bf16.msra.mxu0 0
      %812 = vmatpush.bf16.msra.mxu0 0
      %813 = vmatpush.bf16.msra.mxu0 0
      %814 = vmatpush.bf16.msra.mxu0 %v805
      %815 = vmatmul.bf16.gmra.mxu0 %v781
      %v816 = vpop.f32.mrf.mxu0
      %v817 = vadd.f32 0.0, %v816
      %v818 = vpop.f32.mrf.mxu0
      %v819 = vadd.f32 0.0, %v818
      %820 = vmatmul.bf16.gmra.mxu0 %v784
      %v821 = vpop.f32.mrf.mxu0
      %v822 = vadd.f32 0.0, %v821
      %v823 = vpop.f32.mrf.mxu0
      %v824 = vadd.f32 0.0, %v823
      %825 = vmatmul.bf16.gmra.mxu0 %v787
      %v826 = vpop.f32.mrf.mxu0
      %v827 = vadd.f32 0.0, %v826
      %v828 = vpop.f32.mrf.mxu0
      %v829 = vadd.f32 0.0, %v828
      %830 = vmatmul.bf16.gmra.mxu0 %v790
      %v831 = vpop.f32.mrf.mxu0
      %v832 = vadd.f32 0.0, %v831
      %v833 = vpop.f32.mrf.mxu0
      %v834 = vadd.f32 0.0, %v833
      %835 = vmatmul.bf16.gmra.mxu0 %v793
      %v836 = vpop.f32.mrf.mxu0
      %v837 = vadd.f32 0.0, %v836
      %v838 = vpop.f32.mrf.mxu0
      %v839 = vadd.f32 0.0, %v838
      %840 = vmatmul.bf16.gmra.mxu0 %v796
      %v841 = vpop.f32.mrf.mxu0
      %v842 = vadd.f32 0.0, %v841
      %v843 = vpop.f32.mrf.mxu0
      %v844 = vadd.f32 0.0, %v843
      %845 = vmatmul.bf16.gmra.mxu0 %v799
      %v846 = vpop.f32.mrf.mxu0
      %v847 = vadd.f32 0.0, %v846
      %v848 = vpop.f32.mrf.mxu0
      %v849 = vadd.f32 0.0, %v848
      %850 = vmatmul.bf16.gmra.mxu0 %v802
      %v851 = vpop.f32.mrf.mxu0
      %v852 = vadd.f32 0.0, %v851
      %v853 = vpop.f32.mrf.mxu0
      %v854 = vadd.f32 0.0, %v853
      %855 = vdwg.mxu0
      %v856 = vadd.f32 %v682, %v817
      %v857 = vadd.f32 %v684, %v819
      %v858 = vadd.f32 %v687, %v822
      %v859 = vadd.f32 %v689, %v824
      %v860 = vadd.f32 %v692, %v827
      %v861 = vadd.f32 %v694, %v829
      %v862 = vadd.f32 %v697, %v832
      %v863 = vadd.f32 %v699, %v834
      %v864 = vadd.f32 %v702, %v837
      %v865 = vadd.f32 %v704, %v839
      %v866 = vadd.f32 %v707, %v842
      %v867 = vadd.f32 %v709, %v844
      %v868 = vadd.f32 %v712, %v847
      %v869 = vadd.f32 %v714, %v849
      %v870 = vadd.f32 %v717, %v852
      %v871 = vadd.f32 %v719, %v854
      %s872 = scalar_lea.vmem %s428, 192
      %v873 = vld [vmem:[%s872] sm:$0xf]
      %v874 = vld [vmem:[%s872 + $0x4] sm:$0xf]
      %v875 = vld [vmem:[%s872 + $0x8] sm:$0xf]
      %v876 = vld [vmem:[%s872 + $0xc] sm:$0xf]
      %v877 = vld [vmem:[%s872 + $0x10] sm:$0xf]
      %v878 = vld [vmem:[%s872 + $0x14] sm:$0xf]
      %v879 = vld [vmem:[%s872 + $0x18] sm:$0xf]
      %v880 = vld [vmem:[%s872 + $0x1c] sm:$0xf]
      %v881 = vld [vmem:[%s872 + $0x20] sm:$0xf]
      %v882 = vld [vmem:[%s872 + $0x24] sm:$0xf]
      %v883 = vld [vmem:[%s872 + $0x28] sm:$0xf]
      %v884 = vld [vmem:[%s872 + $0x2c] sm:$0xf]
      %v885 = vld [vmem:[%s872 + $0x30] sm:$0xf]
      %v886 = vld [vmem:[%s872 + $0x34] sm:$0xf]
      %v887 = vld [vmem:[%s872 + $0x38] sm:$0xf]
      %v888 = vld [vmem:[%s872 + $0x3c] sm:$0xf]
      %s889 = scalar_lea.vmem %s2, 12
      %v890 = vld [vmem:[%s889] sm:$0xf]
      %v907 = vunpack.c.l.b16 %v873
      %v908 = vunpack.c.l.b16 %v874
      %v909 = vunpack.c.l.b16 %v875
      %v910 = vunpack.c.l.b16 %v876
      %v911 = vunpack.c.l.b16 %v877
      %v912 = vunpack.c.l.b16 %v878
      %v913 = vunpack.c.l.b16 %v879
      %v914 = vunpack.c.l.b16 %v880
      %v915 = vunpack.c.l.b16 %v881
      %v916 = vunpack.c.l.b16 %v882
      %v917 = vunpack.c.l.b16 %v883
      %v918 = vunpack.c.l.b16 %v884
      %v919 = vunpack.c.l.b16 %v885
      %v920 = vunpack.c.l.b16 %v886
      %v921 = vunpack.c.l.b16 %v887
      %v922 = vunpack.c.l.b16 %v888
      %v923 = vpack.c.b16 %v908, %v907
      %v924 = vpack.c.b16 %v910, %v909
      %v925 = vpack.c.b16 %v912, %v911
      %v926 = vpack.c.b16 %v914, %v913
      %v927 = vpack.c.b16 %v916, %v915
      %v928 = vpack.c.b16 %v918, %v917
      %v929 = vpack.c.b16 %v920, %v919
      %v930 = vpack.c.b16 %v922, %v921
      %v932 = vsel %vm527, %v923, 0
      %v935 = vsel %vm527, %v924, 0
      %v938 = vsel %vm527, %v925, 0
      %v941 = vsel %vm527, %v926, 0
      %v944 = vsel %vm527, %v927, 0
      %v947 = vsel %vm527, %v928, 0
      %v950 = vsel %vm527, %v929, 0
      %v953 = vsel %vm527, %v930, 0
      %v956 = vsel %vm552, %v890, 0
      %958 = vmatpush.bf16.msra.mxu0 0
      %959 = vmatpush.bf16.msra.mxu0 0
      %960 = vmatpush.bf16.msra.mxu0 0
      %961 = vmatpush.bf16.msra.mxu0 0
      %962 = vmatpush.bf16.msra.mxu0 0
      %963 = vmatpush.bf16.msra.mxu0 0
      %964 = vmatpush.bf16.msra.mxu0 0
      %965 = vmatpush.bf16.msra.mxu0 %v956
      %966 = vmatmul.bf16.gmra.mxu0 %v932
      %v967 = vpop.f32.mrf.mxu0
      %v968 = vadd.f32 0.0, %v967
      %v969 = vpop.f32.mrf.mxu0
      %v970 = vadd.f32 0.0, %v969
      %971 = vmatmul.bf16.gmra.mxu0 %v935
      %v972 = vpop.f32.mrf.mxu0
      %v973 = vadd.f32 0.0, %v972
      %v974 = vpop.f32.mrf.mxu0
      %v975 = vadd.f32 0.0, %v974
      %976 = vmatmul.bf16.gmra.mxu0 %v938
      %v977 = vpop.f32.mrf.mxu0
      %v978 = vadd.f32 0.0, %v977
      %v979 = vpop.f32.mrf.mxu0
      %v980 = vadd.f32 0.0, %v979
      %981 = vmatmul.bf16.gmra.mxu0 %v941
      %v982 = vpop.f32.mrf.mxu0
      %v983 = vadd.f32 0.0, %v982
      %v984 = vpop.f32.mrf.mxu0
      %v985 = vadd.f32 0.0, %v984
      %986 = vmatmul.bf16.gmra.mxu0 %v944
      %v987 = vpop.f32.mrf.mxu0
      %v988 = vadd.f32 0.0, %v987
      %v989 = vpop.f32.mrf.mxu0
      %v990 = vadd.f32 0.0, %v989
      %991 = vmatmul.bf16.gmra.mxu0 %v947
      %v992 = vpop.f32.mrf.mxu0
      %v993 = vadd.f32 0.0, %v992
      %v994 = vpop.f32.mrf.mxu0
      %v995 = vadd.f32 0.0, %v994
      %996 = vmatmul.bf16.gmra.mxu0 %v950
      %v997 = vpop.f32.mrf.mxu0
      %v998 = vadd.f32 0.0, %v997
      %v999 = vpop.f32.mrf.mxu0
      %v1000 = vadd.f32 0.0, %v999
      %1001 = vmatmul.bf16.gmra.mxu0 %v953
      %v1002 = vpop.f32.mrf.mxu0
      %v1003 = vadd.f32 0.0, %v1002
      %v1004 = vpop.f32.mrf.mxu0
      %v1005 = vadd.f32 0.0, %v1004
      %1006 = vdwg.mxu0
      %v1007 = vadd.f32 %v856, %v968
      %v1008 = vadd.f32 %v857, %v970
      %v1009 = vadd.f32 %v858, %v973
      %v1010 = vadd.f32 %v859, %v975
      %v1011 = vadd.f32 %v860, %v978
      %v1012 = vadd.f32 %v861, %v980
      %v1013 = vadd.f32 %v862, %v983
      %v1014 = vadd.f32 %v863, %v985
      %v1015 = vadd.f32 %v864, %v988
      %v1016 = vadd.f32 %v865, %v990
      %v1017 = vadd.f32 %v866, %v993
      %v1018 = vadd.f32 %v867, %v995
      %v1019 = vadd.f32 %v868, %v998
      %v1020 = vadd.f32 %v869, %v1000
      %v1021 = vadd.f32 %v870, %v1003
      %v1022 = vadd.f32 %v871, %v1005
      %v1023 = vld [vmem:[%s3] sm:$0x1]
      %v1025 = vperm.slane %v1023, 0
      %v1027 = vadd.f32 %v1007, %v1025
      %v1028 = vadd.f32 %v1008, %v1025
      %v1029 = vadd.f32 %v1009, %v1025
      %v1030 = vadd.f32 %v1010, %v1025
      %v1031 = vadd.f32 %v1011, %v1025
      %v1032 = vadd.f32 %v1012, %v1025
      %v1033 = vadd.f32 %v1013, %v1025
      %v1034 = vadd.f32 %v1014, %v1025
      %v1035 = vadd.f32 %v1015, %v1025
      %v1036 = vadd.f32 %v1016, %v1025
      %v1037 = vadd.f32 %v1017, %v1025
      %v1038 = vadd.f32 %v1018, %v1025
      %v1039 = vadd.f32 %v1019, %v1025
      %v1040 = vadd.f32 %v1020, %v1025
      %v1041 = vadd.f32 %v1021, %v1025
      %v1042 = vadd.f32 %v1022, %v1025
      %v1043 = vadd.f32 %v435, %v1027
      %v1044 = vadd.f32 %v436, %v1028
      %v1045 = vadd.f32 %v437, %v1029
      %v1046 = vadd.f32 %v438, %v1030
      %v1047 = vadd.f32 %v439, %v1031
      %v1048 = vadd.f32 %v440, %v1032
      %v1049 = vadd.f32 %v441, %v1033
      %v1050 = vadd.f32 %v442, %v1034
      %v1051 = vadd.f32 %v443, %v1035
      %v1052 = vadd.f32 %v444, %v1036
      %v1053 = vadd.f32 %v445, %v1037
      %v1054 = vadd.f32 %v446, %v1038
      %v1055 = vadd.f32 %v447, %v1039
      %v1056 = vadd.f32 %v448, %v1040
      %v1057 = vadd.f32 %v449, %v1041
      %v1058 = vadd.f32 %v450, %v1042
      %v1059 = vld [vmem:[%s4] sm:$0x1]
      %v1060 = vld [vmem:[%s5] sm:$0x1]
      %vm1061 = vcmask 261120
      %v1062 = vsel %vm1061, %v1043, 0.0
      %1063 = vadd.xlane.f32.xlu0 %v1062
      %v1064 = vpop.xlane.xlu0 %1063
      %v1065 = vsel %vm1061, %v1044, 0.0
      %1066 = vadd.xlane.f32.xlu0 %v1065
      %v1067 = vpop.xlane.xlu0 %1066
      %v1068 = vsel %vm1061, %v1045, 0.0
      %1069 = vadd.xlane.f32.xlu0 %v1068
      %v1070 = vpop.xlane.xlu0 %1069
      %v1071 = vsel %vm1061, %v1046, 0.0
      %1072 = vadd.xlane.f32.xlu0 %v1071
      %v1073 = vpop.xlane.xlu0 %1072
      %v1074 = vsel %vm1061, %v1047, 0.0
      %1075 = vadd.xlane.f32.xlu0 %v1074
      %v1076 = vpop.xlane.xlu0 %1075
      %v1077 = vsel %vm1061, %v1048, 0.0
      %1078 = vadd.xlane.f32.xlu0 %v1077
      %v1079 = vpop.xlane.xlu0 %1078
      %v1080 = vsel %vm1061, %v1049, 0.0
      %1081 = vadd.xlane.f32.xlu0 %v1080
      %v1082 = vpop.xlane.xlu0 %1081
      %v1083 = vsel %vm1061, %v1050, 0.0
      %1084 = vadd.xlane.f32.xlu0 %v1083
      %v1085 = vpop.xlane.xlu0 %1084
      %v1086 = vsel %vm1061, %v1051, 0.0
      %1087 = vadd.xlane.f32.xlu0 %v1086
      %v1088 = vpop.xlane.xlu0 %1087
      %v1089 = vsel %vm1061, %v1052, 0.0
      %1090 = vadd.xlane.f32.xlu0 %v1089
      %v1091 = vpop.xlane.xlu0 %1090
      %v1092 = vsel %vm1061, %v1053, 0.0
      %1093 = vadd.xlane.f32.xlu0 %v1092
      %v1094 = vpop.xlane.xlu0 %1093
      %v1095 = vsel %vm1061, %v1054, 0.0
      %1096 = vadd.xlane.f32.xlu0 %v1095
      %v1097 = vpop.xlane.xlu0 %1096
      %v1098 = vsel %vm1061, %v1055, 0.0
      %1099 = vadd.xlane.f32.xlu0 %v1098
      %v1100 = vpop.xlane.xlu0 %1099
      %v1101 = vsel %vm1061, %v1056, 0.0
      %1102 = vadd.xlane.f32.xlu0 %v1101
      %v1103 = vpop.xlane.xlu0 %1102
      %v1104 = vsel %vm1061, %v1057, 0.0
      %1105 = vadd.xlane.f32.xlu0 %v1104
      %v1106 = vpop.xlane.xlu0 %1105
      %v1107 = vsel %vm1061, %v1058, 0.0
      %1108 = vadd.xlane.f32.xlu0 %v1107
      %v1109 = vpop.xlane.xlu0 %1108
      %v1110 = vrcp.pop 32.0
      %v1111 = vmul.f32 32.0, %v1110
      %v1112 = vsub.f32 1.0, %v1111
      %v1113 = vmul.f32 %v1110, %v1112
      %v1114 = vadd.f32 %v1110, %v1113
      %vm1115 = vweird.f32 %v1110
      %v1116 = vsel %vm1115, %v1110, %v1114
      %v1117 = vmul.f32 %v1064, %v1116
      %v1118 = vmul.f32 %v1067, %v1116
      %v1119 = vmul.f32 %v1070, %v1116
      %v1120 = vmul.f32 %v1073, %v1116
      %v1121 = vmul.f32 %v1076, %v1116
      %v1122 = vmul.f32 %v1079, %v1116
      %v1123 = vmul.f32 %v1082, %v1116
      %v1124 = vmul.f32 %v1085, %v1116
      %v1125 = vmul.f32 %v1088, %v1116
      %v1126 = vmul.f32 %v1091, %v1116
      %v1127 = vmul.f32 %v1094, %v1116
      %v1128 = vmul.f32 %v1097, %v1116
      %v1129 = vmul.f32 %v1100, %v1116
      %v1130 = vmul.f32 %v1103, %v1116
      %v1131 = vmul.f32 %v1106, %v1116
      %v1132 = vmul.f32 %v1109, %v1116
      %v1133 = vsub.f32 %v1043, %v1117
      %v1134 = vsub.f32 %v1044, %v1118
      %v1135 = vsub.f32 %v1045, %v1119
      %v1136 = vsub.f32 %v1046, %v1120
      %v1137 = vsub.f32 %v1047, %v1121
      %v1138 = vsub.f32 %v1048, %v1122
      %v1139 = vsub.f32 %v1049, %v1123
      %v1140 = vsub.f32 %v1050, %v1124
      %v1141 = vsub.f32 %v1051, %v1125
      %v1142 = vsub.f32 %v1052, %v1126
      %v1143 = vsub.f32 %v1053, %v1127
      %v1144 = vsub.f32 %v1054, %v1128
      %v1145 = vsub.f32 %v1055, %v1129
      %v1146 = vsub.f32 %v1056, %v1130
      %v1147 = vsub.f32 %v1057, %v1131
      %v1148 = vsub.f32 %v1058, %v1132
      %v1149 = vmul.f32 %v1133, %v1133
      %v1150 = vmul.f32 %v1134, %v1134
      %v1151 = vmul.f32 %v1135, %v1135
      %v1152 = vmul.f32 %v1136, %v1136
      %v1153 = vmul.f32 %v1137, %v1137
      %v1154 = vmul.f32 %v1138, %v1138
      %v1155 = vmul.f32 %v1139, %v1139
      %v1156 = vmul.f32 %v1140, %v1140
      %v1157 = vmul.f32 %v1141, %v1141
      %v1158 = vmul.f32 %v1142, %v1142
      %v1159 = vmul.f32 %v1143, %v1143
      %v1160 = vmul.f32 %v1144, %v1144
      %v1161 = vmul.f32 %v1145, %v1145
      %v1162 = vmul.f32 %v1146, %v1146
      %v1163 = vmul.f32 %v1147, %v1147
      %v1164 = vmul.f32 %v1148, %v1148
      %v1165 = vsel %vm1061, %v1149, 0.0
      %1166 = vadd.xlane.f32.xlu0 %v1165
      %v1167 = vpop.xlane.xlu0 %1166
      %v1168 = vsel %vm1061, %v1150, 0.0
      %1169 = vadd.xlane.f32.xlu0 %v1168
      %v1170 = vpop.xlane.xlu0 %1169
      %v1171 = vsel %vm1061, %v1151, 0.0
      %1172 = vadd.xlane.f32.xlu0 %v1171
      %v1173 = vpop.xlane.xlu0 %1172
      %v1174 = vsel %vm1061, %v1152, 0.0
      %1175 = vadd.xlane.f32.xlu0 %v1174
      %v1176 = vpop.xlane.xlu0 %1175
      %v1177 = vsel %vm1061, %v1153, 0.0
      %1178 = vadd.xlane.f32.xlu0 %v1177
      %v1179 = vpop.xlane.xlu0 %1178
      %v1180 = vsel %vm1061, %v1154, 0.0
      %1181 = vadd.xlane.f32.xlu0 %v1180
      %v1182 = vpop.xlane.xlu0 %1181
      %v1183 = vsel %vm1061, %v1155, 0.0
      %1184 = vadd.xlane.f32.xlu0 %v1183
      %v1185 = vpop.xlane.xlu0 %1184
      %v1186 = vsel %vm1061, %v1156, 0.0
      %1187 = vadd.xlane.f32.xlu0 %v1186
      %v1188 = vpop.xlane.xlu0 %1187
      %v1189 = vsel %vm1061, %v1157, 0.0
      %1190 = vadd.xlane.f32.xlu0 %v1189
      %v1191 = vpop.xlane.xlu0 %1190
      %v1192 = vsel %vm1061, %v1158, 0.0
      %1193 = vadd.xlane.f32.xlu0 %v1192
      %v1194 = vpop.xlane.xlu0 %1193
      %v1195 = vsel %vm1061, %v1159, 0.0
      %1196 = vadd.xlane.f32.xlu0 %v1195
      %v1197 = vpop.xlane.xlu0 %1196
      %v1198 = vsel %vm1061, %v1160, 0.0
      %1199 = vadd.xlane.f32.xlu0 %v1198
      %v1200 = vpop.xlane.xlu0 %1199
      %v1201 = vsel %vm1061, %v1161, 0.0
      %1202 = vadd.xlane.f32.xlu0 %v1201
      %v1203 = vpop.xlane.xlu0 %1202
      %v1204 = vsel %vm1061, %v1162, 0.0
      %1205 = vadd.xlane.f32.xlu0 %v1204
      %v1206 = vpop.xlane.xlu0 %1205
      %v1207 = vsel %vm1061, %v1163, 0.0
      %1208 = vadd.xlane.f32.xlu0 %v1207
      %v1209 = vpop.xlane.xlu0 %1208
      %v1210 = vsel %vm1061, %v1164, 0.0
      %1211 = vadd.xlane.f32.xlu0 %v1210
      %v1212 = vpop.xlane.xlu0 %1211
      %v1213 = vmul.f32 %v1167, %v1116
      %v1214 = vmul.f32 %v1170, %v1116
      %v1215 = vmul.f32 %v1173, %v1116
      %v1216 = vmul.f32 %v1176, %v1116
      %v1217 = vmul.f32 %v1179, %v1116
      %v1218 = vmul.f32 %v1182, %v1116
      %v1219 = vmul.f32 %v1185, %v1116
      %v1220 = vmul.f32 %v1188, %v1116
      %v1221 = vmul.f32 %v1191, %v1116
      %v1222 = vmul.f32 %v1194, %v1116
      %v1223 = vmul.f32 %v1197, %v1116
      %v1224 = vmul.f32 %v1200, %v1116
      %v1225 = vmul.f32 %v1203, %v1116
      %v1226 = vmul.f32 %v1206, %v1116
      %v1227 = vmul.f32 %v1209, %v1116
      %v1228 = vmul.f32 %v1212, %v1116
      %v1229 = vadd.f32 %v1213, 1e-05
      %v1230 = vadd.f32 %v1214, 1e-05
      %v1231 = vadd.f32 %v1215, 1e-05
      %v1232 = vadd.f32 %v1216, 1e-05
      %v1233 = vadd.f32 %v1217, 1e-05
      %v1234 = vadd.f32 %v1218, 1e-05
      %v1235 = vadd.f32 %v1219, 1e-05
      %v1236 = vadd.f32 %v1220, 1e-05
      %v1237 = vadd.f32 %v1221, 1e-05
      %v1238 = vadd.f32 %v1222, 1e-05
      %v1239 = vadd.f32 %v1223, 1e-05
      %v1240 = vadd.f32 %v1224, 1e-05
      %v1241 = vadd.f32 %v1225, 1e-05
      %v1242 = vadd.f32 %v1226, 1e-05
      %v1243 = vadd.f32 %v1227, 1e-05
      %v1244 = vadd.f32 %v1228, 1e-05
      %v1245 = vrsqrt.pop %v1229
      %v1246 = vmul.f32 %v1245, %v1229
      %v1247 = vmul.f32 %v1246, %v1245
      %v1248 = vmul.f32 0.5, %v1247
      %v1249 = vsub.f32 1.5, %v1248
      %v1250 = vmul.f32 %v1245, %v1249
      %vm1251 = vweird.f32 %v1229
      %vm1252 = vweird.f32 %v1245
      %vm1253 = vmor %vm1251, %vm1252
      %v1254 = vsel %vm1253, %v1245, %v1250
      %v1255 = vrsqrt.pop %v1230
      %v1256 = vmul.f32 %v1255, %v1230
      %v1257 = vmul.f32 %v1256, %v1255
      %v1258 = vmul.f32 0.5, %v1257
      %v1259 = vsub.f32 1.5, %v1258
      %v1260 = vmul.f32 %v1255, %v1259
      %vm1261 = vweird.f32 %v1230
      %vm1262 = vweird.f32 %v1255
      %vm1263 = vmor %vm1261, %vm1262
      %v1264 = vsel %vm1263, %v1255, %v1260
      %v1265 = vrsqrt.pop %v1231
      %v1266 = vmul.f32 %v1265, %v1231
      %v1267 = vmul.f32 %v1266, %v1265
      %v1268 = vmul.f32 0.5, %v1267
      %v1269 = vsub.f32 1.5, %v1268
      %v1270 = vmul.f32 %v1265, %v1269
      %vm1271 = vweird.f32 %v1231
      %vm1272 = vweird.f32 %v1265
      %vm1273 = vmor %vm1271, %vm1272
      %v1274 = vsel %vm1273, %v1265, %v1270
      %v1275 = vrsqrt.pop %v1232
      %v1276 = vmul.f32 %v1275, %v1232
      %v1277 = vmul.f32 %v1276, %v1275
      %v1278 = vmul.f32 0.5, %v1277
      %v1279 = vsub.f32 1.5, %v1278
      %v1280 = vmul.f32 %v1275, %v1279
      %vm1281 = vweird.f32 %v1232
      %vm1282 = vweird.f32 %v1275
      %vm1283 = vmor %vm1281, %vm1282
      %v1284 = vsel %vm1283, %v1275, %v1280
      %v1285 = vrsqrt.pop %v1233
      %v1286 = vmul.f32 %v1285, %v1233
      %v1287 = vmul.f32 %v1286, %v1285
      %v1288 = vmul.f32 0.5, %v1287
      %v1289 = vsub.f32 1.5, %v1288
      %v1290 = vmul.f32 %v1285, %v1289
      %vm1291 = vweird.f32 %v1233
      %vm1292 = vweird.f32 %v1285
      %vm1293 = vmor %vm1291, %vm1292
      %v1294 = vsel %vm1293, %v1285, %v1290
      %v1295 = vrsqrt.pop %v1234
      %v1296 = vmul.f32 %v1295, %v1234
      %v1297 = vmul.f32 %v1296, %v1295
      %v1298 = vmul.f32 0.5, %v1297
      %v1299 = vsub.f32 1.5, %v1298
      %v1300 = vmul.f32 %v1295, %v1299
      %vm1301 = vweird.f32 %v1234
      %vm1302 = vweird.f32 %v1295
      %vm1303 = vmor %vm1301, %vm1302
      %v1304 = vsel %vm1303, %v1295, %v1300
      %v1305 = vrsqrt.pop %v1235
      %v1306 = vmul.f32 %v1305, %v1235
      %v1307 = vmul.f32 %v1306, %v1305
      %v1308 = vmul.f32 0.5, %v1307
      %v1309 = vsub.f32 1.5, %v1308
      %v1310 = vmul.f32 %v1305, %v1309
      %vm1311 = vweird.f32 %v1235
      %vm1312 = vweird.f32 %v1305
      %vm1313 = vmor %vm1311, %vm1312
      %v1314 = vsel %vm1313, %v1305, %v1310
      %v1315 = vrsqrt.pop %v1236
      %v1316 = vmul.f32 %v1315, %v1236
      %v1317 = vmul.f32 %v1316, %v1315
      %v1318 = vmul.f32 0.5, %v1317
      %v1319 = vsub.f32 1.5, %v1318
      %v1320 = vmul.f32 %v1315, %v1319
      %vm1321 = vweird.f32 %v1236
      %vm1322 = vweird.f32 %v1315
      %vm1323 = vmor %vm1321, %vm1322
      %v1324 = vsel %vm1323, %v1315, %v1320
      %v1325 = vrsqrt.pop %v1237
      %v1326 = vmul.f32 %v1325, %v1237
      %v1327 = vmul.f32 %v1326, %v1325
      %v1328 = vmul.f32 0.5, %v1327
      %v1329 = vsub.f32 1.5, %v1328
      %v1330 = vmul.f32 %v1325, %v1329
      %vm1331 = vweird.f32 %v1237
      %vm1332 = vweird.f32 %v1325
      %vm1333 = vmor %vm1331, %vm1332
      %v1334 = vsel %vm1333, %v1325, %v1330
      %v1335 = vrsqrt.pop %v1238
      %v1336 = vmul.f32 %v1335, %v1238
      %v1337 = vmul.f32 %v1336, %v1335
      %v1338 = vmul.f32 0.5, %v1337
      %v1339 = vsub.f32 1.5, %v1338
      %v1340 = vmul.f32 %v1335, %v1339
      %vm1341 = vweird.f32 %v1238
      %vm1342 = vweird.f32 %v1335
      %vm1343 = vmor %vm1341, %vm1342
      %v1344 = vsel %vm1343, %v1335, %v1340
      %v1345 = vrsqrt.pop %v1239
      %v1346 = vmul.f32 %v1345, %v1239
      %v1347 = vmul.f32 %v1346, %v1345
      %v1348 = vmul.f32 0.5, %v1347
      %v1349 = vsub.f32 1.5, %v1348
      %v1350 = vmul.f32 %v1345, %v1349
      %vm1351 = vweird.f32 %v1239
      %vm1352 = vweird.f32 %v1345
      %vm1353 = vmor %vm1351, %vm1352
      %v1354 = vsel %vm1353, %v1345, %v1350
      %v1355 = vrsqrt.pop %v1240
      %v1356 = vmul.f32 %v1355, %v1240
      %v1357 = vmul.f32 %v1356, %v1355
      %v1358 = vmul.f32 0.5, %v1357
      %v1359 = vsub.f32 1.5, %v1358
      %v1360 = vmul.f32 %v1355, %v1359
      %vm1361 = vweird.f32 %v1240
      %vm1362 = vweird.f32 %v1355
      %vm1363 = vmor %vm1361, %vm1362
      %v1364 = vsel %vm1363, %v1355, %v1360
      %v1365 = vrsqrt.pop %v1241
      %v1366 = vmul.f32 %v1365, %v1241
      %v1367 = vmul.f32 %v1366, %v1365
      %v1368 = vmul.f32 0.5, %v1367
      %v1369 = vsub.f32 1.5, %v1368
      %v1370 = vmul.f32 %v1365, %v1369
      %vm1371 = vweird.f32 %v1241
      %vm1372 = vweird.f32 %v1365
      %vm1373 = vmor %vm1371, %vm1372
      %v1374 = vsel %vm1373, %v1365, %v1370
      %v1375 = vrsqrt.pop %v1242
      %v1376 = vmul.f32 %v1375, %v1242
      %v1377 = vmul.f32 %v1376, %v1375
      %v1378 = vmul.f32 0.5, %v1377
      %v1379 = vsub.f32 1.5, %v1378
      %v1380 = vmul.f32 %v1375, %v1379
      %vm1381 = vweird.f32 %v1242
      %vm1382 = vweird.f32 %v1375
      %vm1383 = vmor %vm1381, %vm1382
      %v1384 = vsel %vm1383, %v1375, %v1380
      %v1385 = vrsqrt.pop %v1243
      %v1386 = vmul.f32 %v1385, %v1243
      %v1387 = vmul.f32 %v1386, %v1385
      %v1388 = vmul.f32 0.5, %v1387
      %v1389 = vsub.f32 1.5, %v1388
      %v1390 = vmul.f32 %v1385, %v1389
      %vm1391 = vweird.f32 %v1243
      %vm1392 = vweird.f32 %v1385
      %vm1393 = vmor %vm1391, %vm1392
      %v1394 = vsel %vm1393, %v1385, %v1390
      %v1395 = vrsqrt.pop %v1244
      %v1396 = vmul.f32 %v1395, %v1244
      %v1397 = vmul.f32 %v1396, %v1395
      %v1398 = vmul.f32 0.5, %v1397
      %v1399 = vsub.f32 1.5, %v1398
      %v1400 = vmul.f32 %v1395, %v1399
      %vm1401 = vweird.f32 %v1244
      %vm1402 = vweird.f32 %v1395
      %vm1403 = vmor %vm1401, %vm1402
      %v1404 = vsel %vm1403, %v1395, %v1400
      %v1405 = vmul.f32 %v1133, %v1254
      %v1406 = vmul.f32 %v1134, %v1264
      %v1407 = vmul.f32 %v1135, %v1274
      %v1408 = vmul.f32 %v1136, %v1284
      %v1409 = vmul.f32 %v1137, %v1294
      %v1410 = vmul.f32 %v1138, %v1304
      %v1411 = vmul.f32 %v1139, %v1314
      %v1412 = vmul.f32 %v1140, %v1324
      %v1413 = vmul.f32 %v1141, %v1334
      %v1414 = vmul.f32 %v1142, %v1344
      %v1415 = vmul.f32 %v1143, %v1354
      %v1416 = vmul.f32 %v1144, %v1364
      %v1417 = vmul.f32 %v1145, %v1374
      %v1418 = vmul.f32 %v1146, %v1384
      %v1419 = vmul.f32 %v1147, %v1394
      %v1420 = vmul.f32 %v1148, %v1404
      %v1422 = vperm.slane %v1059, 0
      %v1424 = vmul.f32 %v1405, %v1422
      %v1425 = vmul.f32 %v1406, %v1422
      %v1426 = vmul.f32 %v1407, %v1422
      %v1427 = vmul.f32 %v1408, %v1422
      %v1428 = vmul.f32 %v1409, %v1422
      %v1429 = vmul.f32 %v1410, %v1422
      %v1430 = vmul.f32 %v1411, %v1422
      %v1431 = vmul.f32 %v1412, %v1422
      %v1432 = vmul.f32 %v1413, %v1422
      %v1433 = vmul.f32 %v1414, %v1422
      %v1434 = vmul.f32 %v1415, %v1422
      %v1435 = vmul.f32 %v1416, %v1422
      %v1436 = vmul.f32 %v1417, %v1422
      %v1437 = vmul.f32 %v1418, %v1422
      %v1438 = vmul.f32 %v1419, %v1422
      %v1439 = vmul.f32 %v1420, %v1422
      %v1441 = vperm.slane %v1060, 0
      %v1443 = vadd.f32 %v1424, %v1441
      %v1444 = vadd.f32 %v1425, %v1441
      %v1445 = vadd.f32 %v1426, %v1441
      %v1446 = vadd.f32 %v1427, %v1441
      %v1447 = vadd.f32 %v1428, %v1441
      %v1448 = vadd.f32 %v1429, %v1441
      %v1449 = vadd.f32 %v1430, %v1441
      %v1450 = vadd.f32 %v1431, %v1441
      %v1451 = vadd.f32 %v1432, %v1441
      %v1452 = vadd.f32 %v1433, %v1441
      %v1453 = vadd.f32 %v1434, %v1441
      %v1454 = vadd.f32 %v1435, %v1441
      %v1455 = vadd.f32 %v1436, %v1441
      %v1456 = vadd.f32 %v1437, %v1441
      %v1457 = vadd.f32 %v1438, %v1441
      %v1458 = vadd.f32 %v1439, %v1441
      %v1459 = vpack.c.bf16 %v1444, %v1443
      %v1460 = vpack.c.bf16 %v1446, %v1445
      %v1461 = vpack.c.bf16 %v1448, %v1447
      %v1462 = vpack.c.bf16 %v1450, %v1449
      %v1463 = vpack.c.bf16 %v1452, %v1451
      %v1464 = vpack.c.bf16 %v1454, %v1453
      %v1465 = vpack.c.bf16 %v1456, %v1455
      %v1466 = vpack.c.bf16 %v1458, %v1457
      %v1467 = vld [vmem:[%s8] sm:$0xf]
      %v1468 = vld [vmem:[%s8 + $0x4] sm:$0xf]
      %v1469 = vld [vmem:[%s8 + $0x8] sm:$0xf]
      %v1470 = vld [vmem:[%s8 + $0xc] sm:$0xf]
      %v1471 = vld [vmem:[%s9] sm:$0x1]
      %v1473 = vperm.slane %v1471, 0
      %v1479 = vunpack.c.l.b16 %v1467
      %v1480 = vunpack.c.l.b16 %v1468
      %v1481 = vunpack.c.l.b16 %v1469
      %v1482 = vunpack.c.l.b16 %v1470
      %v1483 = vpack.c.b16 %v1480, %v1479
      %v1484 = vpack.c.b16 %v1482, %v1481
      %v1488 = vsel %vm1061, %v1459, 0
      %v1491 = vsel %vm1061, %v1460, 0
      %v1494 = vsel %vm1061, %v1461, 0
      %v1497 = vsel %vm1061, %v1462, 0
      %v1500 = vsel %vm1061, %v1463, 0
      %v1503 = vsel %vm1061, %v1464, 0
      %v1506 = vsel %vm1061, %v1465, 0
      %v1509 = vsel %vm1061, %v1466, 0
      %1511 = vmatpush.bf16.msra.mxu0 0
      %1512 = vmatpush.bf16.msra.mxu0 0
      %1513 = vmatpush.bf16.msra.mxu0 0
      %1514 = vmatpush.bf16.msra.mxu0 0
      %1515 = vmatpush.bf16.msra.mxu0 0
      %1516 = vmatpush.bf16.msra.mxu0 0
      %1517 = vmatpush.bf16.msra.mxu0 %v1484
      %1518 = vmatpush.bf16.msra.mxu0 %v1483
      %1519 = vmatmul.bf16.gmra.mxu0 %v1488
      %v1520 = vpop.f32.mrf.mxu0
      %v1521 = vadd.f32 %v1473, %v1520
      %v1522 = vpop.f32.mrf.mxu0
      %v1523 = vadd.f32 %v1473, %v1522
      %1524 = vmatmul.bf16.gmra.mxu0 %v1491
      %v1525 = vpop.f32.mrf.mxu0
      %v1526 = vadd.f32 %v1473, %v1525
      %v1527 = vpop.f32.mrf.mxu0
      %v1528 = vadd.f32 %v1473, %v1527
      %1529 = vmatmul.bf16.gmra.mxu0 %v1494
      %v1530 = vpop.f32.mrf.mxu0
      %v1531 = vadd.f32 %v1473, %v1530
      %v1532 = vpop.f32.mrf.mxu0
      %v1533 = vadd.f32 %v1473, %v1532
      %1534 = vmatmul.bf16.gmra.mxu0 %v1497
      %v1535 = vpop.f32.mrf.mxu0
      %v1536 = vadd.f32 %v1473, %v1535
      %v1537 = vpop.f32.mrf.mxu0
      %v1538 = vadd.f32 %v1473, %v1537
      %1539 = vmatmul.bf16.gmra.mxu0 %v1500
      %v1540 = vpop.f32.mrf.mxu0
      %v1541 = vadd.f32 %v1473, %v1540
      %v1542 = vpop.f32.mrf.mxu0
      %v1543 = vadd.f32 %v1473, %v1542
      %1544 = vmatmul.bf16.gmra.mxu0 %v1503
      %v1545 = vpop.f32.mrf.mxu0
      %v1546 = vadd.f32 %v1473, %v1545
      %v1547 = vpop.f32.mrf.mxu0
      %v1548 = vadd.f32 %v1473, %v1547
      %1549 = vmatmul.bf16.gmra.mxu0 %v1506
      %v1550 = vpop.f32.mrf.mxu0
      %v1551 = vadd.f32 %v1473, %v1550
      %v1552 = vpop.f32.mrf.mxu0
      %v1553 = vadd.f32 %v1473, %v1552
      %1554 = vmatmul.bf16.gmra.mxu0 %v1509
      %v1555 = vpop.f32.mrf.mxu0
      %v1556 = vadd.f32 %v1473, %v1555
      %v1557 = vpop.f32.mrf.mxu0
      %v1558 = vadd.f32 %v1473, %v1557
      %1559 = vdwg.mxu0
      %v1560 = vmax.f32 %v1521, 0.0
      %v1561 = vmax.f32 %v1523, 0.0
      %v1562 = vmax.f32 %v1526, 0.0
      %v1563 = vmax.f32 %v1528, 0.0
      %v1564 = vmax.f32 %v1531, 0.0
      %v1565 = vmax.f32 %v1533, 0.0
      %v1566 = vmax.f32 %v1536, 0.0
      %v1567 = vmax.f32 %v1538, 0.0
      %v1568 = vmax.f32 %v1541, 0.0
      %v1569 = vmax.f32 %v1543, 0.0
      %v1570 = vmax.f32 %v1546, 0.0
      %v1571 = vmax.f32 %v1548, 0.0
      %v1572 = vmax.f32 %v1551, 0.0
      %v1573 = vmax.f32 %v1553, 0.0
      %v1574 = vmax.f32 %v1556, 0.0
      %v1575 = vmax.f32 %v1558, 0.0
      %v1576 = vpack.c.bf16 %v1561, %v1560
      %v1577 = vpack.c.bf16 %v1563, %v1562
      %v1578 = vpack.c.bf16 %v1565, %v1564
      %v1579 = vpack.c.bf16 %v1567, %v1566
      %v1580 = vpack.c.bf16 %v1569, %v1568
      %v1581 = vpack.c.bf16 %v1571, %v1570
      %v1582 = vpack.c.bf16 %v1573, %v1572
      %v1583 = vpack.c.bf16 %v1575, %v1574
      %v1584 = vld [vmem:[%s10] sm:$0xf]
      %v1585 = vld [vmem:[%s10 + $0x4] sm:$0xf]
      %v1586 = vld [vmem:[%s10 + $0x8] sm:$0xf]
      %v1587 = vld [vmem:[%s10 + $0xc] sm:$0xf]
      %v1588 = vld [vmem:[%s10 + $0x10] sm:$0xf]
      %v1589 = vld [vmem:[%s10 + $0x14] sm:$0xf]
      %v1590 = vld [vmem:[%s10 + $0x18] sm:$0xf]
      %v1591 = vld [vmem:[%s10 + $0x1c] sm:$0xf]
      %v1592 = vld [vmem:[%s10 + $0x20] sm:$0xf]
      %v1593 = vld [vmem:[%s10 + $0x24] sm:$0xf]
      %v1594 = vld [vmem:[%s10 + $0x28] sm:$0xf]
      %v1595 = vld [vmem:[%s10 + $0x2c] sm:$0xf]
      %v1596 = vld [vmem:[%s10 + $0x30] sm:$0xf]
      %v1597 = vld [vmem:[%s10 + $0x34] sm:$0xf]
      %v1598 = vld [vmem:[%s10 + $0x38] sm:$0xf]
      %v1599 = vld [vmem:[%s10 + $0x3c] sm:$0xf]
      %v1600 = vld [vmem:[%s11] sm:$0x1]
      %v1602 = vperm.slane %v1600, 0
      %v1620 = vunpack.c.l.b16 %v1584
      %v1621 = vunpack.c.l.b16 %v1585
      %v1622 = vunpack.c.l.b16 %v1586
      %v1623 = vunpack.c.l.b16 %v1587
      %v1624 = vunpack.c.l.b16 %v1588
      %v1625 = vunpack.c.l.b16 %v1589
      %v1626 = vunpack.c.l.b16 %v1590
      %v1627 = vunpack.c.l.b16 %v1591
      %v1628 = vunpack.c.l.b16 %v1592
      %v1629 = vunpack.c.l.b16 %v1593
      %v1630 = vunpack.c.l.b16 %v1594
      %v1631 = vunpack.c.l.b16 %v1595
      %v1632 = vunpack.c.l.b16 %v1596
      %v1633 = vunpack.c.l.b16 %v1597
      %v1634 = vunpack.c.l.b16 %v1598
      %v1635 = vunpack.c.l.b16 %v1599
      %v1636 = vpack.c.b16 %v1621, %v1620
      %v1637 = vpack.c.b16 %v1623, %v1622
      %v1638 = vpack.c.b16 %v1625, %v1624
      %v1639 = vpack.c.b16 %v1627, %v1626
      %v1640 = vpack.c.b16 %v1629, %v1628
      %v1641 = vpack.c.b16 %v1631, %v1630
      %v1642 = vpack.c.b16 %v1633, %v1632
      %v1643 = vpack.c.b16 %v1635, %v1634
      %1652 = vmatpush.bf16.msra.mxu0 %v1643
      %1653 = vmatpush.bf16.msra.mxu0 %v1642
      %1654 = vmatpush.bf16.msra.mxu0 %v1641
      %1655 = vmatpush.bf16.msra.mxu0 %v1640
      %1656 = vmatpush.bf16.msra.mxu0 %v1639
      %1657 = vmatpush.bf16.msra.mxu0 %v1638
      %1658 = vmatpush.bf16.msra.mxu0 %v1637
      %1659 = vmatpush.bf16.msra.mxu0 %v1636
      %1660 = vmatmul.bf16.gmra.mxu0 %v1576
      %v1661 = vpop.f32.mrf.mxu0
      %v1662 = vadd.f32 %v1602, %v1661
      %v1663 = vpop.f32.mrf.mxu0
      %v1664 = vadd.f32 %v1602, %v1663
      %1665 = vmatmul.bf16.gmra.mxu0 %v1577
      %v1666 = vpop.f32.mrf.mxu0
      %v1667 = vadd.f32 %v1602, %v1666
      %v1668 = vpop.f32.mrf.mxu0
      %v1669 = vadd.f32 %v1602, %v1668
      %1670 = vmatmul.bf16.gmra.mxu0 %v1578
      %v1671 = vpop.f32.mrf.mxu0
      %v1672 = vadd.f32 %v1602, %v1671
      %v1673 = vpop.f32.mrf.mxu0
      %v1674 = vadd.f32 %v1602, %v1673
      %1675 = vmatmul.bf16.gmra.mxu0 %v1579
      %v1676 = vpop.f32.mrf.mxu0
      %v1677 = vadd.f32 %v1602, %v1676
      %v1678 = vpop.f32.mrf.mxu0
      %v1679 = vadd.f32 %v1602, %v1678
      %1680 = vmatmul.bf16.gmra.mxu0 %v1580
      %v1681 = vpop.f32.mrf.mxu0
      %v1682 = vadd.f32 %v1602, %v1681
      %v1683 = vpop.f32.mrf.mxu0
      %v1684 = vadd.f32 %v1602, %v1683
      %1685 = vmatmul.bf16.gmra.mxu0 %v1581
      %v1686 = vpop.f32.mrf.mxu0
      %v1687 = vadd.f32 %v1602, %v1686
      %v1688 = vpop.f32.mrf.mxu0
      %v1689 = vadd.f32 %v1602, %v1688
      %1690 = vmatmul.bf16.gmra.mxu0 %v1582
      %v1691 = vpop.f32.mrf.mxu0
      %v1692 = vadd.f32 %v1602, %v1691
      %v1693 = vpop.f32.mrf.mxu0
      %v1694 = vadd.f32 %v1602, %v1693
      %1695 = vmatmul.bf16.gmra.mxu0 %v1583
      %v1696 = vpop.f32.mrf.mxu0
      %v1697 = vadd.f32 %v1602, %v1696
      %v1698 = vpop.f32.mrf.mxu0
      %v1699 = vadd.f32 %v1602, %v1698
      %1700 = vdwg.mxu0
      %v1701 = vadd.f32 %v1443, %v1662
      %v1702 = vadd.f32 %v1444, %v1664
      %v1703 = vadd.f32 %v1445, %v1667
      %v1704 = vadd.f32 %v1446, %v1669
      %v1705 = vadd.f32 %v1447, %v1672
      %v1706 = vadd.f32 %v1448, %v1674
      %v1707 = vadd.f32 %v1449, %v1677
      %v1708 = vadd.f32 %v1450, %v1679
      %v1709 = vadd.f32 %v1451, %v1682
      %v1710 = vadd.f32 %v1452, %v1684
      %v1711 = vadd.f32 %v1453, %v1687
      %v1712 = vadd.f32 %v1454, %v1689
      %v1713 = vadd.f32 %v1455, %v1692
      %v1714 = vadd.f32 %v1456, %v1694
      %v1715 = vadd.f32 %v1457, %v1697
      %v1716 = vadd.f32 %v1458, %v1699
      %v1717 = vld [vmem:[%s6] sm:$0x1]
      %v1718 = vld [vmem:[%s7] sm:$0x1]
      %v1719 = vsel %vm1061, %v1701, 0.0
      %1720 = vadd.xlane.f32.xlu0 %v1719
      %v1721 = vpop.xlane.xlu0 %1720
      %v1722 = vsel %vm1061, %v1702, 0.0
      %1723 = vadd.xlane.f32.xlu0 %v1722
      %v1724 = vpop.xlane.xlu0 %1723
      %v1725 = vsel %vm1061, %v1703, 0.0
      %1726 = vadd.xlane.f32.xlu0 %v1725
      %v1727 = vpop.xlane.xlu0 %1726
      %v1728 = vsel %vm1061, %v1704, 0.0
      %1729 = vadd.xlane.f32.xlu0 %v1728
      %v1730 = vpop.xlane.xlu0 %1729
      %v1731 = vsel %vm1061, %v1705, 0.0
      %1732 = vadd.xlane.f32.xlu0 %v1731
      %v1733 = vpop.xlane.xlu0 %1732
      %v1734 = vsel %vm1061, %v1706, 0.0
      %1735 = vadd.xlane.f32.xlu0 %v1734
      %v1736 = vpop.xlane.xlu0 %1735
      %v1737 = vsel %vm1061, %v1707, 0.0
      %1738 = vadd.xlane.f32.xlu0 %v1737
      %v1739 = vpop.xlane.xlu0 %1738
      %v1740 = vsel %vm1061, %v1708, 0.0
      %1741 = vadd.xlane.f32.xlu0 %v1740
      %v1742 = vpop.xlane.xlu0 %1741
      %v1743 = vsel %vm1061, %v1709, 0.0
      %1744 = vadd.xlane.f32.xlu0 %v1743
      %v1745 = vpop.xlane.xlu0 %1744
      %v1746 = vsel %vm1061, %v1710, 0.0
      %1747 = vadd.xlane.f32.xlu0 %v1746
      %v1748 = vpop.xlane.xlu0 %1747
      %v1749 = vsel %vm1061, %v1711, 0.0
      %1750 = vadd.xlane.f32.xlu0 %v1749
      %v1751 = vpop.xlane.xlu0 %1750
      %v1752 = vsel %vm1061, %v1712, 0.0
      %1753 = vadd.xlane.f32.xlu0 %v1752
      %v1754 = vpop.xlane.xlu0 %1753
      %v1755 = vsel %vm1061, %v1713, 0.0
      %1756 = vadd.xlane.f32.xlu0 %v1755
      %v1757 = vpop.xlane.xlu0 %1756
      %v1758 = vsel %vm1061, %v1714, 0.0
      %1759 = vadd.xlane.f32.xlu0 %v1758
      %v1760 = vpop.xlane.xlu0 %1759
      %v1761 = vsel %vm1061, %v1715, 0.0
      %1762 = vadd.xlane.f32.xlu0 %v1761
      %v1763 = vpop.xlane.xlu0 %1762
      %v1764 = vsel %vm1061, %v1716, 0.0
      %1765 = vadd.xlane.f32.xlu0 %v1764
      %v1766 = vpop.xlane.xlu0 %1765
      %v1767 = vmul.f32 %v1721, %v1116
      %v1768 = vmul.f32 %v1724, %v1116
      %v1769 = vmul.f32 %v1727, %v1116
      %v1770 = vmul.f32 %v1730, %v1116
      %v1771 = vmul.f32 %v1733, %v1116
      %v1772 = vmul.f32 %v1736, %v1116
      %v1773 = vmul.f32 %v1739, %v1116
      %v1774 = vmul.f32 %v1742, %v1116
      %v1775 = vmul.f32 %v1745, %v1116
      %v1776 = vmul.f32 %v1748, %v1116
      %v1777 = vmul.f32 %v1751, %v1116
      %v1778 = vmul.f32 %v1754, %v1116
      %v1779 = vmul.f32 %v1757, %v1116
      %v1780 = vmul.f32 %v1760, %v1116
      %v1781 = vmul.f32 %v1763, %v1116
      %v1782 = vmul.f32 %v1766, %v1116
      %v1783 = vsub.f32 %v1701, %v1767
      %v1784 = vsub.f32 %v1702, %v1768
      %v1785 = vsub.f32 %v1703, %v1769
      %v1786 = vsub.f32 %v1704, %v1770
      %v1787 = vsub.f32 %v1705, %v1771
      %v1788 = vsub.f32 %v1706, %v1772
      %v1789 = vsub.f32 %v1707, %v1773
      %v1790 = vsub.f32 %v1708, %v1774
      %v1791 = vsub.f32 %v1709, %v1775
      %v1792 = vsub.f32 %v1710, %v1776
      %v1793 = vsub.f32 %v1711, %v1777
      %v1794 = vsub.f32 %v1712, %v1778
      %v1795 = vsub.f32 %v1713, %v1779
      %v1796 = vsub.f32 %v1714, %v1780
      %v1797 = vsub.f32 %v1715, %v1781
      %v1798 = vsub.f32 %v1716, %v1782
      %v1799 = vmul.f32 %v1783, %v1783
      %v1800 = vmul.f32 %v1784, %v1784
      %v1801 = vmul.f32 %v1785, %v1785
      %v1802 = vmul.f32 %v1786, %v1786
      %v1803 = vmul.f32 %v1787, %v1787
      %v1804 = vmul.f32 %v1788, %v1788
      %v1805 = vmul.f32 %v1789, %v1789
      %v1806 = vmul.f32 %v1790, %v1790
      %v1807 = vmul.f32 %v1791, %v1791
      %v1808 = vmul.f32 %v1792, %v1792
      %v1809 = vmul.f32 %v1793, %v1793
      %v1810 = vmul.f32 %v1794, %v1794
      %v1811 = vmul.f32 %v1795, %v1795
      %v1812 = vmul.f32 %v1796, %v1796
      %v1813 = vmul.f32 %v1797, %v1797
      %v1814 = vmul.f32 %v1798, %v1798
      %v1815 = vsel %vm1061, %v1799, 0.0
      %1816 = vadd.xlane.f32.xlu0 %v1815
      %v1817 = vpop.xlane.xlu0 %1816
      %v1818 = vsel %vm1061, %v1800, 0.0
      %1819 = vadd.xlane.f32.xlu0 %v1818
      %v1820 = vpop.xlane.xlu0 %1819
      %v1821 = vsel %vm1061, %v1801, 0.0
      %1822 = vadd.xlane.f32.xlu0 %v1821
      %v1823 = vpop.xlane.xlu0 %1822
      %v1824 = vsel %vm1061, %v1802, 0.0
      %1825 = vadd.xlane.f32.xlu0 %v1824
      %v1826 = vpop.xlane.xlu0 %1825
      %v1827 = vsel %vm1061, %v1803, 0.0
      %1828 = vadd.xlane.f32.xlu0 %v1827
      %v1829 = vpop.xlane.xlu0 %1828
      %v1830 = vsel %vm1061, %v1804, 0.0
      %1831 = vadd.xlane.f32.xlu0 %v1830
      %v1832 = vpop.xlane.xlu0 %1831
      %v1833 = vsel %vm1061, %v1805, 0.0
      %1834 = vadd.xlane.f32.xlu0 %v1833
      %v1835 = vpop.xlane.xlu0 %1834
      %v1836 = vsel %vm1061, %v1806, 0.0
      %1837 = vadd.xlane.f32.xlu0 %v1836
      %v1838 = vpop.xlane.xlu0 %1837
      %v1839 = vsel %vm1061, %v1807, 0.0
      %1840 = vadd.xlane.f32.xlu0 %v1839
      %v1841 = vpop.xlane.xlu0 %1840
      %v1842 = vsel %vm1061, %v1808, 0.0
      %1843 = vadd.xlane.f32.xlu0 %v1842
      %v1844 = vpop.xlane.xlu0 %1843
      %v1845 = vsel %vm1061, %v1809, 0.0
      %1846 = vadd.xlane.f32.xlu0 %v1845
      %v1847 = vpop.xlane.xlu0 %1846
      %v1848 = vsel %vm1061, %v1810, 0.0
      %1849 = vadd.xlane.f32.xlu0 %v1848
      %v1850 = vpop.xlane.xlu0 %1849
      %v1851 = vsel %vm1061, %v1811, 0.0
      %1852 = vadd.xlane.f32.xlu0 %v1851
      %v1853 = vpop.xlane.xlu0 %1852
      %v1854 = vsel %vm1061, %v1812, 0.0
      %1855 = vadd.xlane.f32.xlu0 %v1854
      %v1856 = vpop.xlane.xlu0 %1855
      %v1857 = vsel %vm1061, %v1813, 0.0
      %1858 = vadd.xlane.f32.xlu0 %v1857
      %v1859 = vpop.xlane.xlu0 %1858
      %v1860 = vsel %vm1061, %v1814, 0.0
      %1861 = vadd.xlane.f32.xlu0 %v1860
      %v1862 = vpop.xlane.xlu0 %1861
      %v1863 = vmul.f32 %v1817, %v1116
      %v1864 = vmul.f32 %v1820, %v1116
      %v1865 = vmul.f32 %v1823, %v1116
      %v1866 = vmul.f32 %v1826, %v1116
      %v1867 = vmul.f32 %v1829, %v1116
      %v1868 = vmul.f32 %v1832, %v1116
      %v1869 = vmul.f32 %v1835, %v1116
      %v1870 = vmul.f32 %v1838, %v1116
      %v1871 = vmul.f32 %v1841, %v1116
      %v1872 = vmul.f32 %v1844, %v1116
      %v1873 = vmul.f32 %v1847, %v1116
      %v1874 = vmul.f32 %v1850, %v1116
      %v1875 = vmul.f32 %v1853, %v1116
      %v1876 = vmul.f32 %v1856, %v1116
      %v1877 = vmul.f32 %v1859, %v1116
      %v1878 = vmul.f32 %v1862, %v1116
      %v1879 = vadd.f32 %v1863, 1e-05
      %v1880 = vadd.f32 %v1864, 1e-05
      %v1881 = vadd.f32 %v1865, 1e-05
      %v1882 = vadd.f32 %v1866, 1e-05
      %v1883 = vadd.f32 %v1867, 1e-05
      %v1884 = vadd.f32 %v1868, 1e-05
      %v1885 = vadd.f32 %v1869, 1e-05
      %v1886 = vadd.f32 %v1870, 1e-05
      %v1887 = vadd.f32 %v1871, 1e-05
      %v1888 = vadd.f32 %v1872, 1e-05
      %v1889 = vadd.f32 %v1873, 1e-05
      %v1890 = vadd.f32 %v1874, 1e-05
      %v1891 = vadd.f32 %v1875, 1e-05
      %v1892 = vadd.f32 %v1876, 1e-05
      %v1893 = vadd.f32 %v1877, 1e-05
      %v1894 = vadd.f32 %v1878, 1e-05
      %v1895 = vrsqrt.pop %v1879
      %v1896 = vmul.f32 %v1895, %v1879
      %v1897 = vmul.f32 %v1896, %v1895
      %v1898 = vmul.f32 0.5, %v1897
      %v1899 = vsub.f32 1.5, %v1898
      %v1900 = vmul.f32 %v1895, %v1899
      %vm1901 = vweird.f32 %v1879
      %vm1902 = vweird.f32 %v1895
      %vm1903 = vmor %vm1901, %vm1902
      %v1904 = vsel %vm1903, %v1895, %v1900
      %v1905 = vrsqrt.pop %v1880
      %v1906 = vmul.f32 %v1905, %v1880
      %v1907 = vmul.f32 %v1906, %v1905
      %v1908 = vmul.f32 0.5, %v1907
      %v1909 = vsub.f32 1.5, %v1908
      %v1910 = vmul.f32 %v1905, %v1909
      %vm1911 = vweird.f32 %v1880
      %vm1912 = vweird.f32 %v1905
      %vm1913 = vmor %vm1911, %vm1912
      %v1914 = vsel %vm1913, %v1905, %v1910
      %v1915 = vrsqrt.pop %v1881
      %v1916 = vmul.f32 %v1915, %v1881
      %v1917 = vmul.f32 %v1916, %v1915
      %v1918 = vmul.f32 0.5, %v1917
      %v1919 = vsub.f32 1.5, %v1918
      %v1920 = vmul.f32 %v1915, %v1919
      %vm1921 = vweird.f32 %v1881
      %vm1922 = vweird.f32 %v1915
      %vm1923 = vmor %vm1921, %vm1922
      %v1924 = vsel %vm1923, %v1915, %v1920
      %v1925 = vrsqrt.pop %v1882
      %v1926 = vmul.f32 %v1925, %v1882
      %v1927 = vmul.f32 %v1926, %v1925
      %v1928 = vmul.f32 0.5, %v1927
      %v1929 = vsub.f32 1.5, %v1928
      %v1930 = vmul.f32 %v1925, %v1929
      %vm1931 = vweird.f32 %v1882
      %vm1932 = vweird.f32 %v1925
      %vm1933 = vmor %vm1931, %vm1932
      %v1934 = vsel %vm1933, %v1925, %v1930
      %v1935 = vrsqrt.pop %v1883
      %v1936 = vmul.f32 %v1935, %v1883
      %v1937 = vmul.f32 %v1936, %v1935
      %v1938 = vmul.f32 0.5, %v1937
      %v1939 = vsub.f32 1.5, %v1938
      %v1940 = vmul.f32 %v1935, %v1939
      %vm1941 = vweird.f32 %v1883
      %vm1942 = vweird.f32 %v1935
      %vm1943 = vmor %vm1941, %vm1942
      %v1944 = vsel %vm1943, %v1935, %v1940
      %v1945 = vrsqrt.pop %v1884
      %v1946 = vmul.f32 %v1945, %v1884
      %v1947 = vmul.f32 %v1946, %v1945
      %v1948 = vmul.f32 0.5, %v1947
      %v1949 = vsub.f32 1.5, %v1948
      %v1950 = vmul.f32 %v1945, %v1949
      %vm1951 = vweird.f32 %v1884
      %vm1952 = vweird.f32 %v1945
      %vm1953 = vmor %vm1951, %vm1952
      %v1954 = vsel %vm1953, %v1945, %v1950
      %v1955 = vrsqrt.pop %v1885
      %v1956 = vmul.f32 %v1955, %v1885
      %v1957 = vmul.f32 %v1956, %v1955
      %v1958 = vmul.f32 0.5, %v1957
      %v1959 = vsub.f32 1.5, %v1958
      %v1960 = vmul.f32 %v1955, %v1959
      %vm1961 = vweird.f32 %v1885
      %vm1962 = vweird.f32 %v1955
      %vm1963 = vmor %vm1961, %vm1962
      %v1964 = vsel %vm1963, %v1955, %v1960
      %v1965 = vrsqrt.pop %v1886
      %v1966 = vmul.f32 %v1965, %v1886
      %v1967 = vmul.f32 %v1966, %v1965
      %v1968 = vmul.f32 0.5, %v1967
      %v1969 = vsub.f32 1.5, %v1968
      %v1970 = vmul.f32 %v1965, %v1969
      %vm1971 = vweird.f32 %v1886
      %vm1972 = vweird.f32 %v1965
      %vm1973 = vmor %vm1971, %vm1972
      %v1974 = vsel %vm1973, %v1965, %v1970
      %v1975 = vrsqrt.pop %v1887
      %v1976 = vmul.f32 %v1975, %v1887
      %v1977 = vmul.f32 %v1976, %v1975
      %v1978 = vmul.f32 0.5, %v1977
      %v1979 = vsub.f32 1.5, %v1978
      %v1980 = vmul.f32 %v1975, %v1979
      %vm1981 = vweird.f32 %v1887
      %vm1982 = vweird.f32 %v1975
      %vm1983 = vmor %vm1981, %vm1982
      %v1984 = vsel %vm1983, %v1975, %v1980
      %v1985 = vrsqrt.pop %v1888
      %v1986 = vmul.f32 %v1985, %v1888
      %v1987 = vmul.f32 %v1986, %v1985
      %v1988 = vmul.f32 0.5, %v1987
      %v1989 = vsub.f32 1.5, %v1988
      %v1990 = vmul.f32 %v1985, %v1989
      %vm1991 = vweird.f32 %v1888
      %vm1992 = vweird.f32 %v1985
      %vm1993 = vmor %vm1991, %vm1992
      %v1994 = vsel %vm1993, %v1985, %v1990
      %v1995 = vrsqrt.pop %v1889
      %v1996 = vmul.f32 %v1995, %v1889
      %v1997 = vmul.f32 %v1996, %v1995
      %v1998 = vmul.f32 0.5, %v1997
      %v1999 = vsub.f32 1.5, %v1998
      %v2000 = vmul.f32 %v1995, %v1999
      %vm2001 = vweird.f32 %v1889
      %vm2002 = vweird.f32 %v1995
      %vm2003 = vmor %vm2001, %vm2002
      %v2004 = vsel %vm2003, %v1995, %v2000
      %v2005 = vrsqrt.pop %v1890
      %v2006 = vmul.f32 %v2005, %v1890
      %v2007 = vmul.f32 %v2006, %v2005
      %v2008 = vmul.f32 0.5, %v2007
      %v2009 = vsub.f32 1.5, %v2008
      %v2010 = vmul.f32 %v2005, %v2009
      %vm2011 = vweird.f32 %v1890
      %vm2012 = vweird.f32 %v2005
      %vm2013 = vmor %vm2011, %vm2012
      %v2014 = vsel %vm2013, %v2005, %v2010
      %v2015 = vrsqrt.pop %v1891
      %v2016 = vmul.f32 %v2015, %v1891
      %v2017 = vmul.f32 %v2016, %v2015
      %v2018 = vmul.f32 0.5, %v2017
      %v2019 = vsub.f32 1.5, %v2018
      %v2020 = vmul.f32 %v2015, %v2019
      %vm2021 = vweird.f32 %v1891
      %vm2022 = vweird.f32 %v2015
      %vm2023 = vmor %vm2021, %vm2022
      %v2024 = vsel %vm2023, %v2015, %v2020
      %v2025 = vrsqrt.pop %v1892
      %v2026 = vmul.f32 %v2025, %v1892
      %v2027 = vmul.f32 %v2026, %v2025
      %v2028 = vmul.f32 0.5, %v2027
      %v2029 = vsub.f32 1.5, %v2028
      %v2030 = vmul.f32 %v2025, %v2029
      %vm2031 = vweird.f32 %v1892
      %vm2032 = vweird.f32 %v2025
      %vm2033 = vmor %vm2031, %vm2032
      %v2034 = vsel %vm2033, %v2025, %v2030
      %v2035 = vrsqrt.pop %v1893
      %v2036 = vmul.f32 %v2035, %v1893
      %v2037 = vmul.f32 %v2036, %v2035
      %v2038 = vmul.f32 0.5, %v2037
      %v2039 = vsub.f32 1.5, %v2038
      %v2040 = vmul.f32 %v2035, %v2039
      %vm2041 = vweird.f32 %v1893
      %vm2042 = vweird.f32 %v2035
      %vm2043 = vmor %vm2041, %vm2042
      %v2044 = vsel %vm2043, %v2035, %v2040
      %v2045 = vrsqrt.pop %v1894
      %v2046 = vmul.f32 %v2045, %v1894
      %v2047 = vmul.f32 %v2046, %v2045
      %v2048 = vmul.f32 0.5, %v2047
      %v2049 = vsub.f32 1.5, %v2048
      %v2050 = vmul.f32 %v2045, %v2049
      %vm2051 = vweird.f32 %v1894
      %vm2052 = vweird.f32 %v2045
      %vm2053 = vmor %vm2051, %vm2052
      %v2054 = vsel %vm2053, %v2045, %v2050
      %v2055 = vmul.f32 %v1783, %v1904
      %v2056 = vmul.f32 %v1784, %v1914
      %v2057 = vmul.f32 %v1785, %v1924
      %v2058 = vmul.f32 %v1786, %v1934
      %v2059 = vmul.f32 %v1787, %v1944
      %v2060 = vmul.f32 %v1788, %v1954
      %v2061 = vmul.f32 %v1789, %v1964
      %v2062 = vmul.f32 %v1790, %v1974
      %v2063 = vmul.f32 %v1791, %v1984
      %v2064 = vmul.f32 %v1792, %v1994
      %v2065 = vmul.f32 %v1793, %v2004
      %v2066 = vmul.f32 %v1794, %v2014
      %v2067 = vmul.f32 %v1795, %v2024
      %v2068 = vmul.f32 %v1796, %v2034
      %v2069 = vmul.f32 %v1797, %v2044
      %v2070 = vmul.f32 %v1798, %v2054
      %v2072 = vperm.slane %v1717, 0
      %v2074 = vmul.f32 %v2055, %v2072
      %v2075 = vmul.f32 %v2056, %v2072
      %v2076 = vmul.f32 %v2057, %v2072
      %v2077 = vmul.f32 %v2058, %v2072
      %v2078 = vmul.f32 %v2059, %v2072
      %v2079 = vmul.f32 %v2060, %v2072
      %v2080 = vmul.f32 %v2061, %v2072
      %v2081 = vmul.f32 %v2062, %v2072
      %v2082 = vmul.f32 %v2063, %v2072
      %v2083 = vmul.f32 %v2064, %v2072
      %v2084 = vmul.f32 %v2065, %v2072
      %v2085 = vmul.f32 %v2066, %v2072
      %v2086 = vmul.f32 %v2067, %v2072
      %v2087 = vmul.f32 %v2068, %v2072
      %v2088 = vmul.f32 %v2069, %v2072
      %v2089 = vmul.f32 %v2070, %v2072
      %v2091 = vperm.slane %v1718, 0
      %v2093 = vadd.f32 %v2074, %v2091
      %v2094 = vadd.f32 %v2075, %v2091
      %v2095 = vadd.f32 %v2076, %v2091
      %v2096 = vadd.f32 %v2077, %v2091
      %v2097 = vadd.f32 %v2078, %v2091
      %v2098 = vadd.f32 %v2079, %v2091
      %v2099 = vadd.f32 %v2080, %v2091
      %v2100 = vadd.f32 %v2081, %v2091
      %v2101 = vadd.f32 %v2082, %v2091
      %v2102 = vadd.f32 %v2083, %v2091
      %v2103 = vadd.f32 %v2084, %v2091
      %v2104 = vadd.f32 %v2085, %v2091
      %v2105 = vadd.f32 %v2086, %v2091
      %v2106 = vadd.f32 %v2087, %v2091
      %v2107 = vadd.f32 %v2088, %v2091
      %v2108 = vadd.f32 %v2089, %v2091
      %2109 = vst.msk [vmem:[%s433] sm:$0xff] %vm1061, %v2093
      %2110 = vst.msk [vmem:[%s433 + $0x8] sm:$0xff] %vm1061, %v2094
      %2111 = vst.msk [vmem:[%s433 + $0x10] sm:$0xff] %vm1061, %v2095
      %2112 = vst.msk [vmem:[%s433 + $0x18] sm:$0xff] %vm1061, %v2096
      %2113 = vst.msk [vmem:[%s433 + $0x20] sm:$0xff] %vm1061, %v2097
      %2114 = vst.msk [vmem:[%s433 + $0x28] sm:$0xff] %vm1061, %v2098
      %2115 = vst.msk [vmem:[%s433 + $0x30] sm:$0xff] %vm1061, %v2099
      %2116 = vst.msk [vmem:[%s433 + $0x38] sm:$0xff] %vm1061, %v2100
      %2117 = vst.msk [vmem:[%s433 + $0x40] sm:$0xff] %vm1061, %v2101
      %2118 = vst.msk [vmem:[%s433 + $0x48] sm:$0xff] %vm1061, %v2102
      %2119 = vst.msk [vmem:[%s433 + $0x50] sm:$0xff] %vm1061, %v2103
      %2120 = vst.msk [vmem:[%s433 + $0x58] sm:$0xff] %vm1061, %v2104
      %2121 = vst.msk [vmem:[%s433 + $0x60] sm:$0xff] %vm1061, %v2105
      %2122 = vst.msk [vmem:[%s433 + $0x68] sm:$0xff] %vm1061, %v2106
      %2123 = vst.msk [vmem:[%s433 + $0x70] sm:$0xff] %vm1061, %v2107
      %2124 = vst.msk [vmem:[%s433 + $0x78] sm:$0xff] %vm1061, %v2108
      %p2125 = scmp.lt.s32.totalorder %s23, 1
      %s2126 = scalar_select %p2125, %s23, 1
      %s2127 = smul.addr %s2126, 16
      %s2128 = smul.addr %s2127, 8
      %s2129 = scalar_lea.vmem %s12, %s2128
      // Predicated region
      $region69: #{encoder_layer_forward.3} parent=67 // pred_check
        %p2130 = pneg %p303
      $region70: #{encoder_layer_forward.3} parent=67 // pred_check_branch
        %2132 = sbr.rel (%p2130) target = $region72
      $region71: #{encoder_layer_forward.3} parent=67 // pred_region
        _
      $region72: #{encoder_layer_forward.3} parent=67 // pred_fallthru
        _
    $region68: #{encoder_layer_forward.3} parent=5 // pred_fallthru
      _
    %p2133 = scmp.le.s32.totalorder 2, %s18
    // Predicated region
    $region73: #{encoder_layer_forward.3} parent=5 // pred_check
      %p2134 = pneg %p2133
    $region74: #{encoder_layer_forward.3} parent=5 // pred_check_branch
      %2136 = sbr.rel (%p2134) target = $region76
    $region75: #{encoder_layer_forward.3} parent=5 // pred_region
      %s2137 = ssub.s32 %s18, 2
      // Predicated region
      $region77: #{encoder_layer_forward.3} parent=75 // pred_check
        %p2138 = pneg %p309
      $region78: #{encoder_layer_forward.3} parent=75 // pred_check_branch
        %2140 = sbr.rel (%p2138) target = $region80
      $region79: #{encoder_layer_forward.3} parent=75 // pred_region
        %p2141 = scmp.lt.s32.totalorder %s24, 1
        %s2142 = scalar_select %p2141, %s24, 1
        %s2143 = smul.addr %s2142, 16
        %s2144 = smul.addr %s2143, 8
        %s2145 = scalar_lea.vmem %s12, %s2144
      $region80: #{encoder_layer_forward.3} parent=75 // pred_fallthru
        _
    $region76: #{encoder_layer_forward.3} parent=5 // pred_fallthru
      _
  $region6: #{encoder_layer_forward.3} parent=0 // loop_footer
    %s22 = sadd.s32 1, %s18
  $region7: #{encoder_layer_forward.3} parent=0 // loop_footer_branch
    %17 = sbr.rel target = $region3
  $region8: #{encoder_layer_forward.3} parent=0 // loop_exit
    _

</llo_original>
